<compile_context>
chip_gen: v6e
topology: v6e:2x2x1
jax: 0.10.0
libtpu: 0.0.40
codegen_flags: <defaults>
</compile_context>

<pallas_src>
import math

import jax
import jax.numpy as jnp
import numpy as np
from jax.experimental import pallas as pl
from jax.experimental.pallas import tpu as pltpu


# ----------------------------------------------------------------------------
# Pallas kernel: single program (grid = ()), everything resident in VMEM.
# All MXU operands are bf16, accumulation is f32.
# ----------------------------------------------------------------------------
def gated_gnn_kernel(e_ref, adj_ref, lmat_ref, smat_ref, bsel_ref,
                     w_gate_t_ref, w_hh_n_t_ref,
                     lin1_t_ref, lin2_t_ref, lin2_b_ref,
                     q_t_ref, q_b_ref,
                     lt_l_t_ref, lt_g_t_ref, comp_t_ref, emb_wt_ref,
                     logits_ref):
    f32, bf16 = jnp.float32, jnp.bfloat16
    dot = lambda a, b: jnp.dot(a, b, preferred_element_type=f32)

    e_bf = e_ref[...]                       # [N, C] bf16 (emb | desc), built in wrapper
    e = e_bf.astype(f32)
    C = e.shape[1]

    # ---- GatedGraphConv message passing: sum aggregation == A @ e ----------
    msg = dot(adj_ref[...], e_bf)           # [N, C] f32 (adj is exact 0/1 bf16)

    # ---- GRUCell(message, e), bias=False: fused gate matmul ----------------
    # s = [msg | e] @ [W_ih^T ; W_hh^T] = gi + gh   (one MXU launch)
    x2 = jnp.concatenate([msg.astype(bf16), e_bf], axis=1)      # [N, 2C]
    s = dot(x2, w_gate_t_ref[...])                              # [N, 3C]
    gh_n = dot(e_bf, w_hh_n_t_ref[...])                         # [N, C]
    r = jax.nn.sigmoid(s[:, :C])
    z = jax.nn.sigmoid(s[:, C:2 * C])
    # gi_n + r*gh_n == (gi_n + gh_n) + (r - 1)*gh_n
    n = jnp.tanh(s[:, 2 * C:] + (r - 1.0) * gh_n)
    h = (1.0 - z) * n + z * e                                   # [N, C] f32
    # dropout_one / emb_dropout: identity in eval mode
    h_bf = h.astype(bf16)

    # ---- get_workflow_reps (no N x N gmat: rank-B selector matmuls) --------
    w_l = dot(lmat_ref[...], h_bf)                              # [B, C] last node / graph
    w_l_bf = w_l.astype(bf16)
    w_g_r = dot(bsel_ref[...], w_l_bf)                          # [N, C] broadcast to own graph
    q1 = dot(w_g_r.astype(bf16), lin1_t_ref[...])               # linear_one (no bias)
    q2 = dot(h_bf, lin2_t_ref[...]) + lin2_b_ref[...]           # linear_two (+bias)
    alpha = dot(jax.nn.sigmoid(q1 + q2).astype(bf16), q_t_ref[...]) + q_b_ref[...]
    a = alpha * h                                               # [N, C] f32
    w_g = dot(smat_ref[...], a.astype(bf16))                    # [B, C] per-graph sum

    # ---- head: split linear_transform (no [B, 2C] concat) ------------------
    w = dot(w_l_bf, lt_l_t_ref[...]) + dot(w_g.astype(bf16), lt_g_t_ref[...])  # [B, C]
    w = dot(w.astype(bf16), comp_t_ref[...])                    # compress -> [B, H]
    # logits against (lane-padded) embedding table -> lane-dense [B, 128] store
    logits_ref[...] = dot(w.astype(bf16), emb_wt_ref[...])


def gated_gnn_forward(inputs, num_graphs, t_pad):
    n_in = len(inputs)
    return pl.pallas_call(
        gated_gnn_kernel,
        out_shape=jax.ShapeDtypeStruct((num_graphs, t_pad), jnp.float32),
        in_specs=[pl.BlockSpec(memory_space=pltpu.MemorySpace.VMEM)] * n_in,
        out_specs=pl.BlockSpec(memory_space=pltpu.MemorySpace.VMEM),
        compiler_params=pltpu.CompilerParams(vmem_limit_bytes=48 * 1024 * 1024),
    )(*inputs)


# ----------------------------------------------------------------------------
# Pure-JAX reference mirroring the PyTorch forward (gather/scatter form),
# emulating the kernel's numerics: bf16 matmul operands, f32 accumulation.
# ----------------------------------------------------------------------------
def _bdot(a, b):
    return jnp.dot(a.astype(jnp.bfloat16), b.astype(jnp.bfloat16),
                   preferred_element_type=jnp.float32)


def reference_forward(x, edge_index, batch, params, num_graphs):
    emb_w, w_ih, w_hh, lin1_w, lin2_w, lin2_b, q_w, q_b, lt_w, comp_w = params
    tool_ids = x[:, 0].astype(jnp.int32)
    emb = emb_w[tool_ids]
    e = jnp.concatenate([emb, x[:, 1:]], axis=1)
    e = e.astype(jnp.bfloat16).astype(jnp.float32)   # kernel receives bf16 features

    src, dst = edge_index[0], edge_index[1]
    msg = jnp.zeros_like(e).at[dst].add(e[src])

    C = e.shape[1]
    gi = _bdot(msg, w_ih.T)
    gh = _bdot(e, w_hh.T)
    r = jax.nn.sigmoid(gi[:, :C] + gh[:, :C])
    z = jax.nn.sigmoid(gi[:, C:2 * C] + gh[:, C:2 * C])
    n = jnp.tanh(gi[:, 2 * C:] + r * gh[:, 2 * C:])
    h = (1.0 - z) * n + z * e

    counts = np.bincount(np.asarray(batch), minlength=num_graphs)
    last = np.cumsum(counts) - 1
    w_l = h[last]
    w_g_r = w_l[np.asarray(batch)]
    q1 = _bdot(w_g_r, lin1_w.T)
    q2 = _bdot(h, lin2_w.T) + lin2_b
    alpha = _bdot(jax.nn.sigmoid(q1 + q2), q_w.T) + q_b
    a = alpha * h
    a_q = a.astype(jnp.bfloat16).astype(jnp.float32)   # kernel pools bf16 'a' on the MXU
    w_g = jnp.zeros((num_graphs, C), jnp.float32).at[jnp.asarray(batch)].add(a_q)

    w = jnp.concatenate([w_l, w_g], axis=1)
    w = _bdot(w, lt_w.T)
    w = _bdot(w, comp_w.T)
    logits = _bdot(w, emb_w.T)
    return logits


# ----------------------------------------------------------------------------
# Main
# ----------------------------------------------------------------------------
if __name__ == "__main__":
    # config (lane-aligned feature sizes)
    hidden_channels = 128
    description_size = 128
    num_tools_cfg = 9
    model_type = "graph"
    num_tools = num_tools_cfg + (1 if model_type == "graph" else 0)   # T = 10
    C = hidden_channels + description_size                            # combined = 256
    T = num_tools
    T_pad = ((T + 127) // 128) * 128                                  # lane-dense logits

    # graph data: 2 graphs with 5 and 3 nodes
    counts = [5, 3]
    N = sum(counts)
    B = len(counts)
    batch = np.concatenate([np.full(c, i) for i, c in enumerate(counts)]).astype(np.int32)
    edge_index = np.array(
        [[0, 1, 2, 3, 0, 5, 6],
         [1, 2, 3, 4, 4, 6, 7]], dtype=np.int32)  # row 0 = src, row 1 = dst

    key = jax.random.PRNGKey(0)
    ks = jax.random.split(key, 16)
    tool_ids = jax.random.randint(ks[0], (N,), 0, num_tools)
    desc = jax.random.normal(ks[1], (N, description_size), jnp.float32)
    x = jnp.concatenate([tool_ids[:, None].astype(jnp.float32), desc], axis=1)

    # deterministic parameter init (reset_parameters-style uniform)
    stdv = 1.0 / math.sqrt(hidden_channels)
    u = lambda k, shape: jax.random.uniform(k, shape, jnp.float32, -stdv, stdv)
    emb_w = u(ks[2], (num_tools, hidden_channels))
    w_ih = u(ks[3], (3 * C, C))
    w_hh = u(ks[4], (3 * C, C))
    lin1_w = u(ks[5], (C, C))
    lin2_w = u(ks[6], (C, C))
    lin2_b = u(ks[7], (C,))
    q_w = u(ks[8], (C, C))
    q_b = u(ks[9], (C,))
    lt_w = u(ks[10], (C, 2 * C))
    comp_w = u(ks[11], (hidden_channels, C))

    # ---- glue: dense 0/1 operators + bf16 weight stack ----------------------
    bf16 = jnp.bfloat16
    # embedding lookup as an XLA gather in the wrapper (no one-hot matmul)
    emb = emb_w[tool_ids]                                                    # [N, H]
    e_in = jnp.concatenate([emb, desc], axis=1).astype(bf16)                 # [N, C]
    adj = jnp.zeros((N, N), jnp.float32).at[edge_index[1], edge_index[0]].add(1.0).astype(bf16)
    last = np.cumsum(counts) - 1
    lmat = jnp.zeros((B, N), jnp.float32).at[jnp.arange(B), jnp.asarray(last)].set(1.0).astype(bf16)
    bsel = jax.nn.one_hot(jnp.asarray(batch), B, dtype=jnp.float32)          # [N, B]
    smat = bsel.T.astype(bf16)                                               # [B, N] segment-sum
    bsel = bsel.astype(bf16)

    w_gate_t = jnp.concatenate([w_ih.T, w_hh.T], axis=0).astype(bf16)        # [2C, 3C]
    w_hh_n_t = w_hh[2 * C:, :].T.astype(bf16)                                # [C, C]
    lt_l_t = lt_w[:, :C].T.astype(bf16)                                      # [C, C]
    lt_g_t = lt_w[:, C:].T.astype(bf16)                                      # [C, C]
    emb_wt_pad = jnp.zeros((hidden_channels, T_pad), bf16).at[:, :T].set(emb_w.T.astype(bf16))

    kernel_inputs = (
        e_in, adj, lmat, smat, bsel,
        w_gate_t, w_hh_n_t,
        lin1_w.T.astype(bf16), lin2_w.T.astype(bf16), lin2_b.reshape(1, C),
        q_w.T.astype(bf16), q_b.reshape(1, C),
        lt_l_t, lt_g_t, comp_w.T.astype(bf16), emb_wt_pad,
    )

    logits_pad = jax.block_until_ready(gated_gnn_forward(kernel_inputs, B, T_pad))
    logits = logits_pad[:, :T]

    params = (emb_w, w_ih, w_hh, lin1_w, lin2_w, lin2_b, q_w, q_b, lt_w, comp_w)
    ref = jax.block_until_ready(reference_forward(x, edge_index, batch, params, B))

    np.testing.assert_allclose(np.asarray(logits), np.asarray(ref), rtol=2e-3, atol=2e-3)
    print("KERNEL_OK")
</pallas_src>

<mosaic_0001>
module attributes {stable_mosaic.version = 11 : i64} {
  func.func @gated_gnn_kernel(%arg0: memref<8x256xbf16, #tpu.memory_space<vmem>>, %arg1: memref<8x8xbf16, #tpu.memory_space<vmem>>, %arg2: memref<2x8xbf16, #tpu.memory_space<vmem>>, %arg3: memref<2x8xbf16, #tpu.memory_space<vmem>>, %arg4: memref<8x2xbf16, #tpu.memory_space<vmem>>, %arg5: memref<512x768xbf16, #tpu.memory_space<vmem>>, %arg6: memref<256x256xbf16, #tpu.memory_space<vmem>>, %arg7: memref<256x256xbf16, #tpu.memory_space<vmem>>, %arg8: memref<256x256xbf16, #tpu.memory_space<vmem>>, %arg9: memref<1x256xf32, #tpu.memory_space<vmem>>, %arg10: memref<256x256xbf16, #tpu.memory_space<vmem>>, %arg11: memref<1x256xf32, #tpu.memory_space<vmem>>, %arg12: memref<256x256xbf16, #tpu.memory_space<vmem>>, %arg13: memref<256x256xbf16, #tpu.memory_space<vmem>>, %arg14: memref<256x128xbf16, #tpu.memory_space<vmem>>, %arg15: memref<128x128xbf16, #tpu.memory_space<vmem>>, %arg16: memref<2x128xf32, #tpu.memory_space<vmem>>) attributes {dimension_semantics = [], scalar_prefetch = 0 : i64, scratch_operands = 0 : i64, tpu.core_type = #tpu.core_type<tc>} {
    %c0 = arith.constant 0 : index
    %c0_0 = arith.constant 0 : index
    %0 = vector.load %arg0[%c0, %c0_0] : memref<8x256xbf16, #tpu.memory_space<vmem>>, vector<8x256xbf16>
    %1 = arith.extf %0 : vector<8x256xbf16> to vector<8x256xf32>
    %c0_1 = arith.constant 0 : index
    %c0_2 = arith.constant 0 : index
    %2 = vector.load %arg1[%c0_1, %c0_2] : memref<8x8xbf16, #tpu.memory_space<vmem>>, vector<8x8xbf16>
    %cst = arith.constant dense<0.000000e+00> : vector<8x256xf32>
    %3 = tpu.matmul %2, %0, %cst {dimension_numbers = #tpu.dot_dimension_numbers<[1], [0], [0], [1], [0, 0, 1, 1], [], []>} : vector<8x8xbf16>, vector<8x256xbf16>, vector<8x256xf32> -> vector<8x256xf32>
    %4 = arith.truncf %3 : vector<8x256xf32> to vector<8x256xbf16>
    %5 = tpu.concatenate %4, %0 in 1 : vector<8x256xbf16>, vector<8x256xbf16> -> vector<8x512xbf16>
    %c0_3 = arith.constant 0 : index
    %c0_4 = arith.constant 0 : index
    %6 = vector.load %arg5[%c0_3, %c0_4] : memref<512x768xbf16, #tpu.memory_space<vmem>>, vector<512x768xbf16>
    %cst_5 = arith.constant dense<0.000000e+00> : vector<8x768xf32>
    %7 = tpu.matmul %5, %6, %cst_5 {dimension_numbers = #tpu.dot_dimension_numbers<[1], [0], [0], [1], [0, 0, 1, 1], [], []>} : vector<8x512xbf16>, vector<512x768xbf16>, vector<8x768xf32> -> vector<8x768xf32>
    %c0_6 = arith.constant 0 : index
    %c0_7 = arith.constant 0 : index
    %8 = vector.load %arg6[%c0_6, %c0_7] : memref<256x256xbf16, #tpu.memory_space<vmem>>, vector<256x256xbf16>
    %cst_8 = arith.constant dense<0.000000e+00> : vector<8x256xf32>
    %9 = tpu.matmul %0, %8, %cst_8 {dimension_numbers = #tpu.dot_dimension_numbers<[1], [0], [0], [1], [0, 0, 1, 1], [], []>} : vector<8x256xbf16>, vector<256x256xbf16>, vector<8x256xf32> -> vector<8x256xf32>
    %10 = vector.extract_strided_slice %7 {offsets = [0, 0], sizes = [8, 256], strides = [1, 1]} : vector<8x768xf32> to vector<8x256xf32>
    %11 = arith.negf %10 : vector<8x256xf32>
    %12 = math.exp %11 : vector<8x256xf32>
    %cst_9 = arith.constant 1.000000e+00 : f32
    %13 = vector.broadcast %cst_9 : f32 to vector<8x256xf32>
    %14 = arith.addf %13, %12 : vector<8x256xf32>
    %15 = arith.divf %13, %14 : vector<8x256xf32>
    %16 = vector.extract_strided_slice %7 {offsets = [0, 256], sizes = [8, 256], strides = [1, 1]} : vector<8x768xf32> to vector<8x256xf32>
    %17 = arith.negf %16 : vector<8x256xf32>
    %18 = math.exp %17 : vector<8x256xf32>
    %cst_10 = arith.constant 1.000000e+00 : f32
    %19 = vector.broadcast %cst_10 : f32 to vector<8x256xf32>
    %20 = arith.addf %19, %18 : vector<8x256xf32>
    %21 = arith.divf %19, %20 : vector<8x256xf32>
    %22 = vector.extract_strided_slice %7 {offsets = [0, 512], sizes = [8, 256], strides = [1, 1]} : vector<8x768xf32> to vector<8x256xf32>
    %cst_11 = arith.constant 1.000000e+00 : f32
    %23 = vector.broadcast %cst_11 : f32 to vector<8x256xf32>
    %24 = arith.subf %15, %23 : vector<8x256xf32>
    %25 = arith.mulf %24, %9 : vector<8x256xf32>
    %26 = arith.addf %22, %25 : vector<8x256xf32>
    %27 = math.tanh %26 : vector<8x256xf32>
    %cst_12 = arith.constant 1.000000e+00 : f32
    %28 = vector.broadcast %cst_12 : f32 to vector<8x256xf32>
    %29 = arith.subf %28, %21 : vector<8x256xf32>
    %30 = arith.mulf %29, %27 : vector<8x256xf32>
    %31 = arith.mulf %21, %1 : vector<8x256xf32>
    %32 = arith.addf %30, %31 : vector<8x256xf32>
    %33 = arith.truncf %32 : vector<8x256xf32> to vector<8x256xbf16>
    %c0_13 = arith.constant 0 : index
    %c0_14 = arith.constant 0 : index
    %34 = vector.load %arg2[%c0_13, %c0_14] : memref<2x8xbf16, #tpu.memory_space<vmem>>, vector<2x8xbf16>
    %cst_15 = arith.constant dense<0.000000e+00> : vector<2x256xf32>
    %35 = tpu.matmul %34, %33, %cst_15 {dimension_numbers = #tpu.dot_dimension_numbers<[1], [0], [0], [1], [0, 0, 1, 1], [], []>} : vector<2x8xbf16>, vector<8x256xbf16>, vector<2x256xf32> -> vector<2x256xf32>
    %36 = arith.truncf %35 : vector<2x256xf32> to vector<2x256xbf16>
    %c0_16 = arith.constant 0 : index
    %c0_17 = arith.constant 0 : index
    %37 = vector.load %arg4[%c0_16, %c0_17] : memref<8x2xbf16, #tpu.memory_space<vmem>>, vector<8x2xbf16>
    %cst_18 = arith.constant dense<0.000000e+00> : vector<8x256xf32>
    %38 = tpu.matmul %37, %36, %cst_18 {dimension_numbers = #tpu.dot_dimension_numbers<[1], [0], [0], [1], [0, 0, 1, 1], [], []>} : vector<8x2xbf16>, vector<2x256xbf16>, vector<8x256xf32> -> vector<8x256xf32>
    %39 = arith.truncf %38 : vector<8x256xf32> to vector<8x256xbf16>
    %c0_19 = arith.constant 0 : index
    %c0_20 = arith.constant 0 : index
    %40 = vector.load %arg7[%c0_19, %c0_20] : memref<256x256xbf16, #tpu.memory_space<vmem>>, vector<256x256xbf16>
    %cst_21 = arith.constant dense<0.000000e+00> : vector<8x256xf32>
    %41 = tpu.matmul %39, %40, %cst_21 {dimension_numbers = #tpu.dot_dimension_numbers<[1], [0], [0], [1], [0, 0, 1, 1], [], []>} : vector<8x256xbf16>, vector<256x256xbf16>, vector<8x256xf32> -> vector<8x256xf32>
    %c0_22 = arith.constant 0 : index
    %c0_23 = arith.constant 0 : index
    %42 = vector.load %arg8[%c0_22, %c0_23] : memref<256x256xbf16, #tpu.memory_space<vmem>>, vector<256x256xbf16>
    %cst_24 = arith.constant dense<0.000000e+00> : vector<8x256xf32>
    %43 = tpu.matmul %33, %42, %cst_24 {dimension_numbers = #tpu.dot_dimension_numbers<[1], [0], [0], [1], [0, 0, 1, 1], [], []>} : vector<8x256xbf16>, vector<256x256xbf16>, vector<8x256xf32> -> vector<8x256xf32>
    %c0_25 = arith.constant 0 : index
    %c0_26 = arith.constant 0 : index
    %44 = vector.load %arg9[%c0_25, %c0_26] : memref<1x256xf32, #tpu.memory_space<vmem>>, vector<1x256xf32>
    %45 = vector.broadcast %44 : vector<1x256xf32> to vector<8x256xf32>
    %46 = arith.addf %43, %45 : vector<8x256xf32>
    %47 = arith.addf %41, %46 : vector<8x256xf32>
    %48 = arith.negf %47 : vector<8x256xf32>
    %49 = math.exp %48 : vector<8x256xf32>
    %cst_27 = arith.constant 1.000000e+00 : f32
    %50 = vector.broadcast %cst_27 : f32 to vector<8x256xf32>
    %51 = arith.addf %50, %49 : vector<8x256xf32>
    %52 = arith.divf %50, %51 : vector<8x256xf32>
    %53 = arith.truncf %52 : vector<8x256xf32> to vector<8x256xbf16>
    %c0_28 = arith.constant 0 : index
    %c0_29 = arith.constant 0 : index
    %54 = vector.load %arg10[%c0_28, %c0_29] : memref<256x256xbf16, #tpu.memory_space<vmem>>, vector<256x256xbf16>
    %cst_30 = arith.constant dense<0.000000e+00> : vector<8x256xf32>
    %55 = tpu.matmul %53, %54, %cst_30 {dimension_numbers = #tpu.dot_dimension_numbers<[1], [0], [0], [1], [0, 0, 1, 1], [], []>} : vector<8x256xbf16>, vector<256x256xbf16>, vector<8x256xf32> -> vector<8x256xf32>
    %c0_31 = arith.constant 0 : index
    %c0_32 = arith.constant 0 : index
    %56 = vector.load %arg11[%c0_31, %c0_32] : memref<1x256xf32, #tpu.memory_space<vmem>>, vector<1x256xf32>
    %57 = vector.broadcast %56 : vector<1x256xf32> to vector<8x256xf32>
    %58 = arith.addf %55, %57 : vector<8x256xf32>
    %59 = arith.mulf %58, %32 : vector<8x256xf32>
    %c0_33 = arith.constant 0 : index
    %c0_34 = arith.constant 0 : index
    %60 = vector.load %arg3[%c0_33, %c0_34] : memref<2x8xbf16, #tpu.memory_space<vmem>>, vector<2x8xbf16>
    %61 = arith.truncf %59 : vector<8x256xf32> to vector<8x256xbf16>
    %cst_35 = arith.constant dense<0.000000e+00> : vector<2x256xf32>
    %62 = tpu.matmul %60, %61, %cst_35 {dimension_numbers = #tpu.dot_dimension_numbers<[1], [0], [0], [1], [0, 0, 1, 1], [], []>} : vector<2x8xbf16>, vector<8x256xbf16>, vector<2x256xf32> -> vector<2x256xf32>
    %c0_36 = arith.constant 0 : index
    %c0_37 = arith.constant 0 : index
    %63 = vector.load %arg12[%c0_36, %c0_37] : memref<256x256xbf16, #tpu.memory_space<vmem>>, vector<256x256xbf16>
    %cst_38 = arith.constant dense<0.000000e+00> : vector<2x256xf32>
    %64 = tpu.matmul %36, %63, %cst_38 {dimension_numbers = #tpu.dot_dimension_numbers<[1], [0], [0], [1], [0, 0, 1, 1], [], []>} : vector<2x256xbf16>, vector<256x256xbf16>, vector<2x256xf32> -> vector<2x256xf32>
    %65 = arith.truncf %62 : vector<2x256xf32> to vector<2x256xbf16>
    %c0_39 = arith.constant 0 : index
    %c0_40 = arith.constant 0 : index
    %66 = vector.load %arg13[%c0_39, %c0_40] : memref<256x256xbf16, #tpu.memory_space<vmem>>, vector<256x256xbf16>
    %cst_41 = arith.constant dense<0.000000e+00> : vector<2x256xf32>
    %67 = tpu.matmul %65, %66, %cst_41 {dimension_numbers = #tpu.dot_dimension_numbers<[1], [0], [0], [1], [0, 0, 1, 1], [], []>} : vector<2x256xbf16>, vector<256x256xbf16>, vector<2x256xf32> -> vector<2x256xf32>
    %68 = arith.addf %64, %67 : vector<2x256xf32>
    %69 = arith.truncf %68 : vector<2x256xf32> to vector<2x256xbf16>
    %c0_42 = arith.constant 0 : index
    %c0_43 = arith.constant 0 : index
    %70 = vector.load %arg14[%c0_42, %c0_43] : memref<256x128xbf16, #tpu.memory_space<vmem>>, vector<256x128xbf16>
    %cst_44 = arith.constant dense<0.000000e+00> : vector<2x128xf32>
    %71 = tpu.matmul %69, %70, %cst_44 {dimension_numbers = #tpu.dot_dimension_numbers<[1], [0], [0], [1], [0, 0, 1, 1], [], []>} : vector<2x256xbf16>, vector<256x128xbf16>, vector<2x128xf32> -> vector<2x128xf32>
    %72 = arith.truncf %71 : vector<2x128xf32> to vector<2x128xbf16>
    %c0_45 = arith.constant 0 : index
    %c0_46 = arith.constant 0 : index
    %73 = vector.load %arg15[%c0_45, %c0_46] : memref<128x128xbf16, #tpu.memory_space<vmem>>, vector<128x128xbf16>
    %cst_47 = arith.constant dense<0.000000e+00> : vector<2x128xf32>
    %74 = tpu.matmul %72, %73, %cst_47 {dimension_numbers = #tpu.dot_dimension_numbers<[1], [0], [0], [1], [0, 0, 1, 1], [], []>} : vector<2x128xbf16>, vector<128x128xbf16>, vector<2x128xf32> -> vector<2x128xf32>
    %c0_48 = arith.constant 0 : index
    %c0_49 = arith.constant 0 : index
    %75 = vector.load %arg16[%c0_48, %c0_49] : memref<2x128xf32, #tpu.memory_space<vmem>>, vector<2x128xf32>
    tpu.vector_store %arg16[%c0_48, %c0_49], %74 {strides = array<i32>} : memref<2x128xf32, #tpu.memory_space<vmem>>, vector<2x128xf32>,
    return
  }
}

</mosaic_0001>

<llo_original>
// kernel: tpu_custom_call.1
$region0: #{tpu_custom_call.1}
  #allocation0 [shape = 'u32[]', space=smem, size = 0x4, offset = 0x4, fixed_abs, tag = 'smem constant byte address 0x4 - core index']
  #allocation1 [shape = 'u32[144,128]{1,0:T(1,128)}', space=vmem, size = 0x12000, scoped, tag = 'internal scratch']
  %s0 = inlined_call_operand.hbm [shape: bf16[8,256], index: 0, kind: input, shape index: {}]
  %s1 = inlined_call_operand.vmem [shape: bf16[8,8], index: 1, kind: input, shape index: {}]
  %s2 = inlined_call_operand.hbm [shape: bf16[2,8], index: 2, kind: input, shape index: {}]
  %s3 = inlined_call_operand.vmem [shape: bf16[2,8], index: 3, kind: input, shape index: {}]
  %s4 = inlined_call_operand.vmem [shape: bf16[8,2], index: 4, kind: input, shape index: {}]
  %s5 = inlined_call_operand.hbm [shape: bf16[512,768], index: 5, kind: input, shape index: {}]
  %s6 = inlined_call_operand.hbm [shape: bf16[256,256], index: 6, kind: input, shape index: {}]
  %s7 = inlined_call_operand.hbm [shape: bf16[256,256], index: 7, kind: input, shape index: {}]
  %s8 = inlined_call_operand.hbm [shape: bf16[256,256], index: 8, kind: input, shape index: {}]
  %s9 = inlined_call_operand.vmem [shape: f32[1,256], index: 9, kind: input, shape index: {}]
  %s10 = inlined_call_operand.hbm [shape: bf16[256,256], index: 10, kind: input, shape index: {}]
  %s11 = inlined_call_operand.vmem [shape: f32[1,256], index: 11, kind: input, shape index: {}]
  %s12 = inlined_call_operand.hbm [shape: bf16[256,256], index: 12, kind: input, shape index: {}]
  %s13 = inlined_call_operand.hbm [shape: bf16[256,256], index: 13, kind: input, shape index: {}]
  %s14 = inlined_call_operand.hbm [shape: bf16[256,128], index: 14, kind: input, shape index: {}]
  %s15 = inlined_call_operand.hbm [shape: bf16[128,128], index: 15, kind: input, shape index: {}]
  %s16 = inlined_call_operand.hbm [shape: f32[2,128], index: 16, kind: output, shape index: {}]
  %s17 = sld [smem:[#allocation0]]
  $region118: #{tpu_custom_call.1} parent=0
    _
  %s19 = ssub.s32 1, %s17
  %s20 = scalar_select 0, %s19, %s17
  $region1: #{tpu_custom_call.1} parent=0
    #allocation2 [shape = 'u8[4096]{0}', space=vmem, size = 0x1000, scoped, tag = 'input window, operand 0, single buffered']
    #allocation3 [shape = 's32[1]{0}', space=sflag, size = 0x4, scoped, tag = 'scoped memory for tpu_custom_call.1']
    #allocation4 [shape = 's32[1]{0}', space=sflag, size = 0x4, scoped, tag = 'scoped memory for tpu_custom_call.1']
    #allocation5 [shape = 'u8[512]{0}', space=vmem, size = 0x400, scoped, tag = 'input window, operand 2, single buffered']
    #allocation6 [shape = 's32[1]{0}', space=sflag, size = 0x4, scoped, tag = 'scoped memory for tpu_custom_call.1']
    #allocation7 [shape = 'u8[786432]{0}', space=vmem, size = 0xc0000, scoped, tag = 'input window, operand 5, single buffered']
    #allocation8 [shape = 'u8[131072]{0}', space=vmem, size = 0x20000, scoped, tag = 'input window, operand 6, single buffered']
    #allocation9 [shape = 's32[1]{0}', space=sflag, size = 0x4, scoped, tag = 'scoped memory for tpu_custom_call.1']
    #allocation10 [shape = 'u8[131072]{0}', space=vmem, size = 0x20000, scoped, tag = 'input window, operand 7, single buffered']
    #allocation11 [shape = 'u8[131072]{0}', space=vmem, size = 0x20000, scoped, tag = 'input window, operand 8, single buffered']
    #allocation12 [shape = 's32[1]{0}', space=sflag, size = 0x4, scoped, tag = 'scoped memory for tpu_custom_call.1']
    #allocation13 [shape = 'u8[131072]{0}', space=vmem, size = 0x20000, scoped, tag = 'input window, operand 10, single buffered']
    #allocation14 [shape = 'u8[131072]{0}', space=vmem, size = 0x20000, scoped, tag = 'input window, operand 12, single buffered']
    #allocation15 [shape = 's32[1]{0}', space=sflag, size = 0x4, scoped, tag = 'scoped memory for tpu_custom_call.1']
    #allocation16 [shape = 'u8[131072]{0}', space=vmem, size = 0x20000, scoped, tag = 'input window, operand 13, single buffered']
    #allocation17 [shape = 'u8[65536]{0}', space=vmem, size = 0x10000, scoped, tag = 'input window, operand 14, single buffered']
    #allocation18 [shape = 's32[1]{0}', space=sflag, size = 0x4, scoped, tag = 'scoped memory for tpu_custom_call.1']
    #allocation19 [shape = 'u8[32768]{0}', space=vmem, size = 0x8000, scoped, tag = 'input window, operand 15, single buffered']
    #allocation20 [shape = 'u8[1024]{0}', space=vmem, size = 0x400, scoped, tag = 'output window, operand 0, single buffered']
    %21 = vsyncpa [#allocation3], 0
    %22 = vsyncpa [#allocation6], 0
    %23 = vsyncpa [#allocation9], 0
    %24 = vsyncpa [#allocation12], 0
    %25 = vsyncpa [#allocation15], 0
    %26 = vsyncpa [#allocation18], 0
    %27 = vsyncpa [#allocation4], 0
    // Predicated region
    $region2: #{tpu_custom_call.1} parent=1 // pred_check
      _
    $region3: #{tpu_custom_call.1} parent=1 // pred_check_branch
      %29 = sbr.rel (0) target = $region5
    $region4: #{tpu_custom_call.1} parent=1 // pred_region
      %s31 = ssub.s32 128, 128
      %32 = vsyncadd [#allocation3], %s31
      %s34 = sshll.u32 [#allocation2], 4
      %s35 = int_to_ptr.vmem [resolvable:$true] %s34
      %37 = dma.hbm_to_vmem [thread:$0]  %s0, 128, %s35, [#allocation3]
    $region5: #{tpu_custom_call.1} parent=1 // pred_fallthru
      _
    // Predicated region
    $region6: #{tpu_custom_call.1} parent=1 // pred_check
      _
    $region7: #{tpu_custom_call.1} parent=1 // pred_check_branch
      %39 = sbr.rel (0) target = $region9
    $region8: #{tpu_custom_call.1} parent=1 // pred_region
      _
    $region9: #{tpu_custom_call.1} parent=1 // pred_fallthru
      _
    // Predicated region
    $region10: #{tpu_custom_call.1} parent=1 // pred_check
      _
    $region11: #{tpu_custom_call.1} parent=1 // pred_check_branch
      %41 = sbr.rel (0) target = $region13
    $region12: #{tpu_custom_call.1} parent=1 // pred_region
      %s43 = ssub.s32 16, 16
      %44 = vsyncadd [#allocation6], %s43
      %s46 = sshll.u32 [#allocation5], 4
      %s47 = int_to_ptr.vmem [resolvable:$true] %s46
      %49 = dma.hbm_to_vmem [thread:$0]  %s2, 16, %s47, [#allocation6]
    $region13: #{tpu_custom_call.1} parent=1 // pred_fallthru
      _
    // Predicated region
    $region14: #{tpu_custom_call.1} parent=1 // pred_check
      _
    $region15: #{tpu_custom_call.1} parent=1 // pred_check_branch
      %51 = sbr.rel (0) target = $region17
    $region16: #{tpu_custom_call.1} parent=1 // pred_region
      _
    $region17: #{tpu_custom_call.1} parent=1 // pred_fallthru
      _
    // Predicated region
    $region18: #{tpu_custom_call.1} parent=1 // pred_check
      _
    $region19: #{tpu_custom_call.1} parent=1 // pred_check_branch
      %53 = sbr.rel (0) target = $region21
    $region20: #{tpu_custom_call.1} parent=1 // pred_region
      _
    $region21: #{tpu_custom_call.1} parent=1 // pred_fallthru
      _
    // Predicated region
    $region22: #{tpu_custom_call.1} parent=1 // pred_check
      _
    $region23: #{tpu_custom_call.1} parent=1 // pred_check_branch
      %55 = sbr.rel (0) target = $region25
    $region24: #{tpu_custom_call.1} parent=1 // pred_region
      %s57 = ssub.s32 24576, 24576
      %58 = vsyncadd [#allocation6], %s57
      %s59 = sshll.u32 [#allocation7], 4
      %s60 = int_to_ptr.vmem [resolvable:$true] %s59
      %65 = dma.hbm_to_vmem [thread:$0]  %s5, 24576, %s60, [#allocation6], 384, 384, 24
    $region25: #{tpu_custom_call.1} parent=1 // pred_fallthru
      _
    // Predicated region
    $region26: #{tpu_custom_call.1} parent=1 // pred_check
      _
    $region27: #{tpu_custom_call.1} parent=1 // pred_check_branch
      %67 = sbr.rel (0) target = $region29
    $region28: #{tpu_custom_call.1} parent=1 // pred_region
      %s69 = ssub.s32 4096, 4096
      %70 = vsyncadd [#allocation9], %s69
      %s71 = sshll.u32 [#allocation8], 4
      %s72 = int_to_ptr.vmem [resolvable:$true] %s71
      %77 = dma.hbm_to_vmem [thread:$0]  %s6, 4096, %s72, [#allocation9], 128, 128, 8
    $region29: #{tpu_custom_call.1} parent=1 // pred_fallthru
      _
    // Predicated region
    $region30: #{tpu_custom_call.1} parent=1 // pred_check
      _
    $region31: #{tpu_custom_call.1} parent=1 // pred_check_branch
      %79 = sbr.rel (0) target = $region33
    $region32: #{tpu_custom_call.1} parent=1 // pred_region
      %s81 = ssub.s32 4096, 4096
      %82 = vsyncadd [#allocation9], %s81
      %s83 = sshll.u32 [#allocation10], 4
      %s84 = int_to_ptr.vmem [resolvable:$true] %s83
      %89 = dma.hbm_to_vmem [thread:$0]  %s7, 4096, %s84, [#allocation9], 128, 128, 8
    $region33: #{tpu_custom_call.1} parent=1 // pred_fallthru
      _
    // Predicated region
    $region34: #{tpu_custom_call.1} parent=1 // pred_check
      _
    $region35: #{tpu_custom_call.1} parent=1 // pred_check_branch
      %91 = sbr.rel (0) target = $region37
    $region36: #{tpu_custom_call.1} parent=1 // pred_region
      %s93 = ssub.s32 4096, 4096
      %94 = vsyncadd [#allocation12], %s93
      %s95 = sshll.u32 [#allocation11], 4
      %s96 = int_to_ptr.vmem [resolvable:$true] %s95
      %101 = dma.hbm_to_vmem [thread:$0]  %s8, 4096, %s96, [#allocation12], 128, 128, 8
    $region37: #{tpu_custom_call.1} parent=1 // pred_fallthru
      _
    // Predicated region
    $region38: #{tpu_custom_call.1} parent=1 // pred_check
      _
    $region39: #{tpu_custom_call.1} parent=1 // pred_check_branch
      %103 = sbr.rel (0) target = $region41
    $region40: #{tpu_custom_call.1} parent=1 // pred_region
      _
    $region41: #{tpu_custom_call.1} parent=1 // pred_fallthru
      _
    // Predicated region
    $region42: #{tpu_custom_call.1} parent=1 // pred_check
      _
    $region43: #{tpu_custom_call.1} parent=1 // pred_check_branch
      %105 = sbr.rel (0) target = $region45
    $region44: #{tpu_custom_call.1} parent=1 // pred_region
      %s107 = ssub.s32 4096, 4096
      %108 = vsyncadd [#allocation12], %s107
      %s109 = sshll.u32 [#allocation13], 4
      %s110 = int_to_ptr.vmem [resolvable:$true] %s109
      %115 = dma.hbm_to_vmem [thread:$0]  %s10, 4096, %s110, [#allocation12], 128, 128, 8
    $region45: #{tpu_custom_call.1} parent=1 // pred_fallthru
      _
    // Predicated region
    $region46: #{tpu_custom_call.1} parent=1 // pred_check
      _
    $region47: #{tpu_custom_call.1} parent=1 // pred_check_branch
      %117 = sbr.rel (0) target = $region49
    $region48: #{tpu_custom_call.1} parent=1 // pred_region
      _
    $region49: #{tpu_custom_call.1} parent=1 // pred_fallthru
      _
    // Predicated region
    $region50: #{tpu_custom_call.1} parent=1 // pred_check
      _
    $region51: #{tpu_custom_call.1} parent=1 // pred_check_branch
      %119 = sbr.rel (0) target = $region53
    $region52: #{tpu_custom_call.1} parent=1 // pred_region
      %s121 = ssub.s32 4096, 4096
      %122 = vsyncadd [#allocation15], %s121
      %s123 = sshll.u32 [#allocation14], 4
      %s124 = int_to_ptr.vmem [resolvable:$true] %s123
      %129 = dma.hbm_to_vmem [thread:$0]  %s12, 4096, %s124, [#allocation15], 128, 128, 8
    $region53: #{tpu_custom_call.1} parent=1 // pred_fallthru
      _
    // Predicated region
    $region54: #{tpu_custom_call.1} parent=1 // pred_check
      _
    $region55: #{tpu_custom_call.1} parent=1 // pred_check_branch
      %131 = sbr.rel (0) target = $region57
    $region56: #{tpu_custom_call.1} parent=1 // pred_region
      %s133 = ssub.s32 4096, 4096
      %134 = vsyncadd [#allocation15], %s133
      %s135 = sshll.u32 [#allocation16], 4
      %s136 = int_to_ptr.vmem [resolvable:$true] %s135
      %141 = dma.hbm_to_vmem [thread:$0]  %s13, 4096, %s136, [#allocation15], 128, 128, 8
    $region57: #{tpu_custom_call.1} parent=1 // pred_fallthru
      _
    // Predicated region
    $region58: #{tpu_custom_call.1} parent=1 // pred_check
      _
    $region59: #{tpu_custom_call.1} parent=1 // pred_check_branch
      %143 = sbr.rel (0) target = $region61
    $region60: #{tpu_custom_call.1} parent=1 // pred_region
      %s145 = ssub.s32 2048, 2048
      %146 = vsyncadd [#allocation18], %s145
      %s147 = sshll.u32 [#allocation17], 4
      %s148 = int_to_ptr.vmem [resolvable:$true] %s147
      %153 = dma.hbm_to_vmem [thread:$0]  %s14, 2048, %s148, [#allocation18], 64, 64, 4
    $region61: #{tpu_custom_call.1} parent=1 // pred_fallthru
      _
    // Predicated region
    $region62: #{tpu_custom_call.1} parent=1 // pred_check
      _
    $region63: #{tpu_custom_call.1} parent=1 // pred_check_branch
      %155 = sbr.rel (0) target = $region65
    $region64: #{tpu_custom_call.1} parent=1 // pred_region
      %s157 = ssub.s32 1024, 1024
      %158 = vsyncadd [#allocation18], %s157
      %s159 = sshll.u32 [#allocation19], 4
      %s160 = int_to_ptr.vmem [resolvable:$true] %s159
      %165 = dma.hbm_to_vmem [thread:$0]  %s15, 1024, %s160, [#allocation18], 64, 64, 4
    $region65: #{tpu_custom_call.1} parent=1 // pred_fallthru
      _
    // Predicated region
    $region66: #{tpu_custom_call.1} parent=1 // pred_check
      _
    $region67: #{tpu_custom_call.1} parent=1 // pred_check_branch
      %167 = sbr.rel (0) target = $region69
    $region68: #{tpu_custom_call.1} parent=1 // pred_region
      %168 = dma.done [#allocation3], 128
    $region69: #{tpu_custom_call.1} parent=1 // pred_fallthru
      _
    // Predicated region
    $region70: #{tpu_custom_call.1} parent=1 // pred_check
      _
    $region71: #{tpu_custom_call.1} parent=1 // pred_check_branch
      %170 = sbr.rel (0) target = $region73
    $region72: #{tpu_custom_call.1} parent=1 // pred_region
      %171 = dma.done [#allocation6], 16
    $region73: #{tpu_custom_call.1} parent=1 // pred_fallthru
      _
    // Predicated region
    $region74: #{tpu_custom_call.1} parent=1 // pred_check
      _
    $region75: #{tpu_custom_call.1} parent=1 // pred_check_branch
      %173 = sbr.rel (0) target = $region77
    $region76: #{tpu_custom_call.1} parent=1 // pred_region
      %174 = dma.done [#allocation6], 24576
    $region77: #{tpu_custom_call.1} parent=1 // pred_fallthru
      _
    // Predicated region
    $region78: #{tpu_custom_call.1} parent=1 // pred_check
      _
    $region79: #{tpu_custom_call.1} parent=1 // pred_check_branch
      %176 = sbr.rel (0) target = $region81
    $region80: #{tpu_custom_call.1} parent=1 // pred_region
      %177 = dma.done [#allocation9], 4096
    $region81: #{tpu_custom_call.1} parent=1 // pred_fallthru
      _
    // Predicated region
    $region82: #{tpu_custom_call.1} parent=1 // pred_check
      _
    $region83: #{tpu_custom_call.1} parent=1 // pred_check_branch
      %179 = sbr.rel (0) target = $region85
    $region84: #{tpu_custom_call.1} parent=1 // pred_region
      %180 = dma.done [#allocation9], 4096
    $region85: #{tpu_custom_call.1} parent=1 // pred_fallthru
      _
    // Predicated region
    $region86: #{tpu_custom_call.1} parent=1 // pred_check
      _
    $region87: #{tpu_custom_call.1} parent=1 // pred_check_branch
      %182 = sbr.rel (0) target = $region89
    $region88: #{tpu_custom_call.1} parent=1 // pred_region
      %183 = dma.done [#allocation12], 4096
    $region89: #{tpu_custom_call.1} parent=1 // pred_fallthru
      _
    // Predicated region
    $region90: #{tpu_custom_call.1} parent=1 // pred_check
      _
    $region91: #{tpu_custom_call.1} parent=1 // pred_check_branch
      %185 = sbr.rel (0) target = $region93
    $region92: #{tpu_custom_call.1} parent=1 // pred_region
      %186 = dma.done [#allocation12], 4096
    $region93: #{tpu_custom_call.1} parent=1 // pred_fallthru
      _
    // Predicated region
    $region94: #{tpu_custom_call.1} parent=1 // pred_check
      _
    $region95: #{tpu_custom_call.1} parent=1 // pred_check_branch
      %188 = sbr.rel (0) target = $region97
    $region96: #{tpu_custom_call.1} parent=1 // pred_region
      %189 = dma.done [#allocation15], 4096
    $region97: #{tpu_custom_call.1} parent=1 // pred_fallthru
      _
    // Predicated region
    $region98: #{tpu_custom_call.1} parent=1 // pred_check
      _
    $region99: #{tpu_custom_call.1} parent=1 // pred_check_branch
      %191 = sbr.rel (0) target = $region101
    $region100: #{tpu_custom_call.1} parent=1 // pred_region
      %192 = dma.done [#allocation15], 4096
    $region101: #{tpu_custom_call.1} parent=1 // pred_fallthru
      _
    // Predicated region
    $region102: #{tpu_custom_call.1} parent=1 // pred_check
      _
    $region103: #{tpu_custom_call.1} parent=1 // pred_check_branch
      %194 = sbr.rel (0) target = $region105
    $region104: #{tpu_custom_call.1} parent=1 // pred_region
      %195 = dma.done [#allocation18], 2048
    $region105: #{tpu_custom_call.1} parent=1 // pred_fallthru
      _
    // Predicated region
    $region106: #{tpu_custom_call.1} parent=1 // pred_check
      _
    $region107: #{tpu_custom_call.1} parent=1 // pred_check_branch
      %197 = sbr.rel (0) target = $region109
    $region108: #{tpu_custom_call.1} parent=1 // pred_region
      %198 = dma.done [#allocation18], 1024
    $region109: #{tpu_custom_call.1} parent=1 // pred_fallthru
      _
    %v200 = vld [vmem:[#allocation2] sm:$0xff]
    %v201 = vunpack.c.l.bf16 %v200
    %v202 = vunpack.c.h.bf16 %v200
    %v203 = vld [vmem:[%s1] sm:$0xf]
    %v205 = vunpack.c.l.b16 %v200
    %v206 = vunpack.c.h.b16 %v200
    %v207 = vpack.c.b16 %v205, %v205
    %v208 = vpack.c.b16 %v206, %v206
    %vm209 = vcmask 64512
    %v211 = vsel %vm209, %v203, 0
    %vm213 = vcmask 1043456
    %v215 = vsel %vm213, %v207, 0
    %v218 = vsel %vm213, %v208, 0
    %220 = vmatprep.subr.bf16.mxu0 0
    %221 = vmatpush1.bf16.msra.mxu0 0
    %222 = vmatprep.subr.bf16.mxu0 0
    %223 = vmatpush1.bf16.msra.mxu0 0
    %224 = vmatprep.subr.bf16.mxu0 0
    %225 = vmatpush1.bf16.msra.mxu0 0
    %226 = vmatprep.subr.bf16.mxu0 0
    %227 = vmatpush1.bf16.msra.mxu0 0
    %228 = vmatprep.subr.bf16.mxu0 0
    %229 = vmatpush1.bf16.msra.mxu0 0
    %230 = vmatprep.subr.bf16.mxu0 0
    %231 = vmatpush1.bf16.msra.mxu0 0
    %232 = vmatprep.subr.bf16.mxu0 0
    %233 = vmatpush1.bf16.msra.mxu0 0
    %234 = vmatprep.subr.bf16.mxu0 %v218
    %235 = vmatpush1.bf16.msra.mxu0 %v215
    %236 = vmatprep.subr.bf16.mxu0 0
    %237 = vmatpush2.bf16.msra.mxu0 0
    %238 = vmatprep.subr.bf16.mxu0 0
    %239 = vmatpush2.bf16.msra.mxu0 0
    %240 = vmatprep.subr.bf16.mxu0 0
    %241 = vmatpush2.bf16.msra.mxu0 0
    %242 = vmatprep.subr.bf16.mxu0 0
    %243 = vmatpush2.bf16.msra.mxu0 0
    %244 = vmatprep.subr.bf16.mxu0 0
    %245 = vmatpush2.bf16.msra.mxu0 0
    %246 = vmatprep.subr.bf16.mxu0 0
    %247 = vmatpush2.bf16.msra.mxu0 0
    %248 = vmatprep.subr.bf16.mxu0 0
    %249 = vmatpush2.bf16.msra.mxu0 0
    %250 = vmatprep.subr.bf16.mxu0 0
    %251 = vmatpush2.bf16.msra.mxu0 0
    %252 = vmatprep.mubr.bf16.mxu0 0
    %253 = vmatmul.mubr.bf16.gmra.mxu0 %v211
    %v254 = vpop.f32.mrf.mxu0
    %v255 = vadd.f32 0.0, %v254
    %v256 = vpop.f32.mrf.mxu0
    %v257 = vadd.f32 0.0, %v256
    %v258 = vpop.f32.mrf.mxu0
    %v259 = vpop.f32.mrf.mxu0
    %260 = vdwg.mxu0
    %v261 = vpack.c.bf16 %v255, %v255
    %v262 = vpack.c.bf16 %v257, %v257
    %v265 = vld [vmem:[#allocation7] sm:$0xff]
    %v266 = vld [vmem:[#allocation7 + $0x8] sm:$0xff]
    %v267 = vld [vmem:[#allocation7 + $0x10] sm:$0xff]
    %v268 = vld [vmem:[#allocation7 + $0x18] sm:$0xff]
    %v269 = vld [vmem:[#allocation7 + $0x20] sm:$0xff]
    %v270 = vld [vmem:[#allocation7 + $0x28] sm:$0xff]
    %v271 = vld [vmem:[#allocation7 + $0x30] sm:$0xff]
    %v272 = vld [vmem:[#allocation7 + $0x38] sm:$0xff]
    %v273 = vld [vmem:[#allocation7 + $0x40] sm:$0xff]
    %v274 = vld [vmem:[#allocation7 + $0x48] sm:$0xff]
    %v275 = vld [vmem:[#allocation7 + $0x50] sm:$0xff]
    %v276 = vld [vmem:[#allocation7 + $0x58] sm:$0xff]
    %v277 = vld [vmem:[#allocation7 + $0x60] sm:$0xff]
    %v278 = vld [vmem:[#allocation7 + $0x68] sm:$0xff]
    %v279 = vld [vmem:[#allocation7 + $0x70] sm:$0xff]
    %v280 = vld [vmem:[#allocation7 + $0x78] sm:$0xff]
    %v281 = vld [vmem:[#allocation7 + $0x80] sm:$0xff]
    %v282 = vld [vmem:[#allocation7 + $0x88] sm:$0xff]
    %v283 = vld [vmem:[#allocation7 + $0x90] sm:$0xff]
    %v284 = vld [vmem:[#allocation7 + $0x98] sm:$0xff]
    %v285 = vld [vmem:[#allocation7 + $0xa0] sm:$0xff]
    %v286 = vld [vmem:[#allocation7 + $0xa8] sm:$0xff]
    %v287 = vld [vmem:[#allocation7 + $0xb0] sm:$0xff]
    %v288 = vld [vmem:[#allocation7 + $0xb8] sm:$0xff]
    %v289 = vld [vmem:[#allocation7 + $0xc0] sm:$0xff]
    %v290 = vld [vmem:[#allocation7 + $0xc8] sm:$0xff]
    %v291 = vld [vmem:[#allocation7 + $0xd0] sm:$0xff]
    %v292 = vld [vmem:[#allocation7 + $0xd8] sm:$0xff]
    %v293 = vld [vmem:[#allocation7 + $0xe0] sm:$0xff]
    %v294 = vld [vmem:[#allocation7 + $0xe8] sm:$0xff]
    %v295 = vld [vmem:[#allocation7 + $0xf0] sm:$0xff]
    %v296 = vld [vmem:[#allocation7 + $0xf8] sm:$0xff]
    %v297 = vld [vmem:[#allocation7 + $0x100] sm:$0xff]
    %v298 = vld [vmem:[#allocation7 + $0x108] sm:$0xff]
    %v299 = vld [vmem:[#allocation7 + $0x110] sm:$0xff]
    %v300 = vld [vmem:[#allocation7 + $0x118] sm:$0xff]
    %v301 = vld [vmem:[#allocation7 + $0x120] sm:$0xff]
    %v302 = vld [vmem:[#allocation7 + $0x128] sm:$0xff]
    %v303 = vld [vmem:[#allocation7 + $0x130] sm:$0xff]
    %v304 = vld [vmem:[#allocation7 + $0x138] sm:$0xff]
    %v305 = vld [vmem:[#allocation7 + $0x140] sm:$0xff]
    %v306 = vld [vmem:[#allocation7 + $0x148] sm:$0xff]
    %v307 = vld [vmem:[#allocation7 + $0x150] sm:$0xff]
    %v308 = vld [vmem:[#allocation7 + $0x158] sm:$0xff]
    %v309 = vld [vmem:[#allocation7 + $0x160] sm:$0xff]
    %v310 = vld [vmem:[#allocation7 + $0x168] sm:$0xff]
    %v311 = vld [vmem:[#allocation7 + $0x170] sm:$0xff]
    %v312 = vld [vmem:[#allocation7 + $0x178] sm:$0xff]
    %v313 = vld [vmem:[#allocation7 + $0x180] sm:$0xff]
    %v314 = vld [vmem:[#allocation7 + $0x188] sm:$0xff]
    %v315 = vld [vmem:[#allocation7 + $0x190] sm:$0xff]
    %v316 = vld [vmem:[#allocation7 + $0x198] sm:$0xff]
    %v317 = vld [vmem:[#allocation7 + $0x1a0] sm:$0xff]
    %v318 = vld [vmem:[#allocation7 + $0x1a8] sm:$0xff]
    %v319 = vld [vmem:[#allocation7 + $0x1b0] sm:$0xff]
    %v320 = vld [vmem:[#allocation7 + $0x1b8] sm:$0xff]
    %v321 = vld [vmem:[#allocation7 + $0x1c0] sm:$0xff]
    %v322 = vld [vmem:[#allocation7 + $0x1c8] sm:$0xff]
    %v323 = vld [vmem:[#allocation7 + $0x1d0] sm:$0xff]
    %v324 = vld [vmem:[#allocation7 + $0x1d8] sm:$0xff]
    %v325 = vld [vmem:[#allocation7 + $0x1e0] sm:$0xff]
    %v326 = vld [vmem:[#allocation7 + $0x1e8] sm:$0xff]
    %v327 = vld [vmem:[#allocation7 + $0x1f0] sm:$0xff]
    %v328 = vld [vmem:[#allocation7 + $0x1f8] sm:$0xff]
    %v329 = vld [vmem:[#allocation7 + $0x200] sm:$0xff]
    %v330 = vld [vmem:[#allocation7 + $0x208] sm:$0xff]
    %v331 = vld [vmem:[#allocation7 + $0x210] sm:$0xff]
    %v332 = vld [vmem:[#allocation7 + $0x218] sm:$0xff]
    %v333 = vld [vmem:[#allocation7 + $0x220] sm:$0xff]
    %v334 = vld [vmem:[#allocation7 + $0x228] sm:$0xff]
    %v335 = vld [vmem:[#allocation7 + $0x230] sm:$0xff]
    %v336 = vld [vmem:[#allocation7 + $0x238] sm:$0xff]
    %v337 = vld [vmem:[#allocation7 + $0x240] sm:$0xff]
    %v338 = vld [vmem:[#allocation7 + $0x248] sm:$0xff]
    %v339 = vld [vmem:[#allocation7 + $0x250] sm:$0xff]
    %v340 = vld [vmem:[#allocation7 + $0x258] sm:$0xff]
    %v341 = vld [vmem:[#allocation7 + $0x260] sm:$0xff]
    %v342 = vld [vmem:[#allocation7 + $0x268] sm:$0xff]
    %v343 = vld [vmem:[#allocation7 + $0x270] sm:$0xff]
    %v344 = vld [vmem:[#allocation7 + $0x278] sm:$0xff]
    %v345 = vld [vmem:[#allocation7 + $0x280] sm:$0xff]
    %v346 = vld [vmem:[#allocation7 + $0x288] sm:$0xff]
    %v347 = vld [vmem:[#allocation7 + $0x290] sm:$0xff]
    %v348 = vld [vmem:[#allocation7 + $0x298] sm:$0xff]
    %v349 = vld [vmem:[#allocation7 + $0x2a0] sm:$0xff]
    %v350 = vld [vmem:[#allocation7 + $0x2a8] sm:$0xff]
    %v351 = vld [vmem:[#allocation7 + $0x2b0] sm:$0xff]
    %v352 = vld [vmem:[#allocation7 + $0x2b8] sm:$0xff]
    %v353 = vld [vmem:[#allocation7 + $0x2c0] sm:$0xff]
    %v354 = vld [vmem:[#allocation7 + $0x2c8] sm:$0xff]
    %v355 = vld [vmem:[#allocation7 + $0x2d0] sm:$0xff]
    %v356 = vld [vmem:[#allocation7 + $0x2d8] sm:$0xff]
    %v357 = vld [vmem:[#allocation7 + $0x2e0] sm:$0xff]
    %v358 = vld [vmem:[#allocation7 + $0x2e8] sm:$0xff]
    %v359 = vld [vmem:[#allocation7 + $0x2f0] sm:$0xff]
    %v360 = vld [vmem:[#allocation7 + $0x2f8] sm:$0xff]
    %v361 = vld [vmem:[#allocation7 + $0x300] sm:$0xff]
    %v362 = vld [vmem:[#allocation7 + $0x308] sm:$0xff]
    %v363 = vld [vmem:[#allocation7 + $0x310] sm:$0xff]
    %v364 = vld [vmem:[#allocation7 + $0x318] sm:$0xff]
    %v365 = vld [vmem:[#allocation7 + $0x320] sm:$0xff]
    %v366 = vld [vmem:[#allocation7 + $0x328] sm:$0xff]
    %v367 = vld [vmem:[#allocation7 + $0x330] sm:$0xff]
    %v368 = vld [vmem:[#allocation7 + $0x338] sm:$0xff]
    %v369 = vld [vmem:[#allocation7 + $0x340] sm:$0xff]
    %v370 = vld [vmem:[#allocation7 + $0x348] sm:$0xff]
    %v371 = vld [vmem:[#allocation7 + $0x350] sm:$0xff]
    %v372 = vld [vmem:[#allocation7 + $0x358] sm:$0xff]
    %v373 = vld [vmem:[#allocation7 + $0x360] sm:$0xff]
    %v374 = vld [vmem:[#allocation7 + $0x368] sm:$0xff]
    %v375 = vld [vmem:[#allocation7 + $0x370] sm:$0xff]
    %v376 = vld [vmem:[#allocation7 + $0x378] sm:$0xff]
    %v377 = vld [vmem:[#allocation7 + $0x380] sm:$0xff]
    %v378 = vld [vmem:[#allocation7 + $0x388] sm:$0xff]
    %v379 = vld [vmem:[#allocation7 + $0x390] sm:$0xff]
    %v380 = vld [vmem:[#allocation7 + $0x398] sm:$0xff]
    %v381 = vld [vmem:[#allocation7 + $0x3a0] sm:$0xff]
    %v382 = vld [vmem:[#allocation7 + $0x3a8] sm:$0xff]
    %v383 = vld [vmem:[#allocation7 + $0x3b0] sm:$0xff]
    %v384 = vld [vmem:[#allocation7 + $0x3b8] sm:$0xff]
    %v385 = vld [vmem:[#allocation7 + $0x3c0] sm:$0xff]
    %v386 = vld [vmem:[#allocation7 + $0x3c8] sm:$0xff]
    %v387 = vld [vmem:[#allocation7 + $0x3d0] sm:$0xff]
    %v388 = vld [vmem:[#allocation7 + $0x3d8] sm:$0xff]
    %v389 = vld [vmem:[#allocation7 + $0x3e0] sm:$0xff]
    %v390 = vld [vmem:[#allocation7 + $0x3e8] sm:$0xff]
    %v391 = vld [vmem:[#allocation7 + $0x3f0] sm:$0xff]
    %v392 = vld [vmem:[#allocation7 + $0x3f8] sm:$0xff]
    %v393 = vld [vmem:[#allocation7 + $0x400] sm:$0xff]
    %v394 = vld [vmem:[#allocation7 + $0x408] sm:$0xff]
    %v395 = vld [vmem:[#allocation7 + $0x410] sm:$0xff]
    %v396 = vld [vmem:[#allocation7 + $0x418] sm:$0xff]
    %v397 = vld [vmem:[#allocation7 + $0x420] sm:$0xff]
    %v398 = vld [vmem:[#allocation7 + $0x428] sm:$0xff]
    %v399 = vld [vmem:[#allocation7 + $0x430] sm:$0xff]
    %v400 = vld [vmem:[#allocation7 + $0x438] sm:$0xff]
    %v401 = vld [vmem:[#allocation7 + $0x440] sm:$0xff]
    %v402 = vld [vmem:[#allocation7 + $0x448] sm:$0xff]
    %v403 = vld [vmem:[#allocation7 + $0x450] sm:$0xff]
    %v404 = vld [vmem:[#allocation7 + $0x458] sm:$0xff]
    %v405 = vld [vmem:[#allocation7 + $0x460] sm:$0xff]
    %v406 = vld [vmem:[#allocation7 + $0x468] sm:$0xff]
    %v407 = vld [vmem:[#allocation7 + $0x470] sm:$0xff]
    %v408 = vld [vmem:[#allocation7 + $0x478] sm:$0xff]
    %v409 = vld [vmem:[#allocation7 + $0x480] sm:$0xff]
    %v410 = vld [vmem:[#allocation7 + $0x488] sm:$0xff]
    %v411 = vld [vmem:[#allocation7 + $0x490] sm:$0xff]
    %v412 = vld [vmem:[#allocation7 + $0x498] sm:$0xff]
    %v413 = vld [vmem:[#allocation7 + $0x4a0] sm:$0xff]
    %v414 = vld [vmem:[#allocation7 + $0x4a8] sm:$0xff]
    %v415 = vld [vmem:[#allocation7 + $0x4b0] sm:$0xff]
    %v416 = vld [vmem:[#allocation7 + $0x4b8] sm:$0xff]
    %v417 = vld [vmem:[#allocation7 + $0x4c0] sm:$0xff]
    %v418 = vld [vmem:[#allocation7 + $0x4c8] sm:$0xff]
    %v419 = vld [vmem:[#allocation7 + $0x4d0] sm:$0xff]
    %v420 = vld [vmem:[#allocation7 + $0x4d8] sm:$0xff]
    %v421 = vld [vmem:[#allocation7 + $0x4e0] sm:$0xff]
    %v422 = vld [vmem:[#allocation7 + $0x4e8] sm:$0xff]
    %v423 = vld [vmem:[#allocation7 + $0x4f0] sm:$0xff]
    %v424 = vld [vmem:[#allocation7 + $0x4f8] sm:$0xff]
    %v425 = vld [vmem:[#allocation7 + $0x500] sm:$0xff]
    %v426 = vld [vmem:[#allocation7 + $0x508] sm:$0xff]
    %v427 = vld [vmem:[#allocation7 + $0x510] sm:$0xff]
    %v428 = vld [vmem:[#allocation7 + $0x518] sm:$0xff]
    %v429 = vld [vmem:[#allocation7 + $0x520] sm:$0xff]
    %v430 = vld [vmem:[#allocation7 + $0x528] sm:$0xff]
    %v431 = vld [vmem:[#allocation7 + $0x530] sm:$0xff]
    %v432 = vld [vmem:[#allocation7 + $0x538] sm:$0xff]
    %v433 = vld [vmem:[#allocation7 + $0x540] sm:$0xff]
    %v434 = vld [vmem:[#allocation7 + $0x548] sm:$0xff]
    %v435 = vld [vmem:[#allocation7 + $0x550] sm:$0xff]
    %v436 = vld [vmem:[#allocation7 + $0x558] sm:$0xff]
    %v437 = vld [vmem:[#allocation7 + $0x560] sm:$0xff]
    %v438 = vld [vmem:[#allocation7 + $0x568] sm:$0xff]
    %v439 = vld [vmem:[#allocation7 + $0x570] sm:$0xff]
    %v440 = vld [vmem:[#allocation7 + $0x578] sm:$0xff]
    %v441 = vld [vmem:[#allocation7 + $0x580] sm:$0xff]
    %v442 = vld [vmem:[#allocation7 + $0x588] sm:$0xff]
    %v443 = vld [vmem:[#allocation7 + $0x590] sm:$0xff]
    %v444 = vld [vmem:[#allocation7 + $0x598] sm:$0xff]
    %v445 = vld [vmem:[#allocation7 + $0x5a0] sm:$0xff]
    %v446 = vld [vmem:[#allocation7 + $0x5a8] sm:$0xff]
    %v447 = vld [vmem:[#allocation7 + $0x5b0] sm:$0xff]
    %v448 = vld [vmem:[#allocation7 + $0x5b8] sm:$0xff]
    %v449 = vld [vmem:[#allocation7 + $0x5c0] sm:$0xff]
    %v450 = vld [vmem:[#allocation7 + $0x5c8] sm:$0xff]
    %v451 = vld [vmem:[#allocation7 + $0x5d0] sm:$0xff]
    %v452 = vld [vmem:[#allocation7 + $0x5d8] sm:$0xff]
    %v453 = vld [vmem:[#allocation7 + $0x5e0] sm:$0xff]
    %v454 = vld [vmem:[#allocation7 + $0x5e8] sm:$0xff]
    %v455 = vld [vmem:[#allocation7 + $0x5f0] sm:$0xff]
    %v456 = vld [vmem:[#allocation7 + $0x5f8] sm:$0xff]
    %v649 = vunpack.c.l.b16 %v265
    %v650 = vunpack.c.h.b16 %v265
    %v651 = vunpack.c.l.b16 %v266
    %v652 = vunpack.c.h.b16 %v266
    %v653 = vunpack.c.l.b16 %v267
    %v654 = vunpack.c.h.b16 %v267
    %v655 = vunpack.c.l.b16 %v268
    %v656 = vunpack.c.h.b16 %v268
    %v657 = vunpack.c.l.b16 %v269
    %v658 = vunpack.c.h.b16 %v269
    %v659 = vunpack.c.l.b16 %v270
    %v660 = vunpack.c.h.b16 %v270
    %v661 = vunpack.c.l.b16 %v271
    %v662 = vunpack.c.h.b16 %v271
    %v663 = vunpack.c.l.b16 %v272
    %v664 = vunpack.c.h.b16 %v272
    %v665 = vunpack.c.l.b16 %v273
    %v666 = vunpack.c.h.b16 %v273
    %v667 = vunpack.c.l.b16 %v274
    %v668 = vunpack.c.h.b16 %v274
    %v669 = vunpack.c.l.b16 %v275
    %v670 = vunpack.c.h.b16 %v275
    %v671 = vunpack.c.l.b16 %v276
    %v672 = vunpack.c.h.b16 %v276
    %v673 = vunpack.c.l.b16 %v277
    %v674 = vunpack.c.h.b16 %v277
    %v675 = vunpack.c.l.b16 %v278
    %v676 = vunpack.c.h.b16 %v278
    %v677 = vunpack.c.l.b16 %v279
    %v678 = vunpack.c.h.b16 %v279
    %v679 = vunpack.c.l.b16 %v280
    %v680 = vunpack.c.h.b16 %v280
    %v681 = vunpack.c.l.b16 %v281
    %v682 = vunpack.c.h.b16 %v281
    %v683 = vunpack.c.l.b16 %v282
    %v684 = vunpack.c.h.b16 %v282
    %v685 = vunpack.c.l.b16 %v283
    %v686 = vunpack.c.h.b16 %v283
    %v687 = vunpack.c.l.b16 %v284
    %v688 = vunpack.c.h.b16 %v284
    %v689 = vunpack.c.l.b16 %v285
    %v690 = vunpack.c.h.b16 %v285
    %v691 = vunpack.c.l.b16 %v286
    %v692 = vunpack.c.h.b16 %v286
    %v693 = vunpack.c.l.b16 %v287
    %v694 = vunpack.c.h.b16 %v287
    %v695 = vunpack.c.l.b16 %v288
    %v696 = vunpack.c.h.b16 %v288
    %v697 = vunpack.c.l.b16 %v289
    %v698 = vunpack.c.h.b16 %v289
    %v699 = vunpack.c.l.b16 %v290
    %v700 = vunpack.c.h.b16 %v290
    %v701 = vunpack.c.l.b16 %v291
    %v702 = vunpack.c.h.b16 %v291
    %v703 = vunpack.c.l.b16 %v292
    %v704 = vunpack.c.h.b16 %v292
    %v705 = vunpack.c.l.b16 %v293
    %v706 = vunpack.c.h.b16 %v293
    %v707 = vunpack.c.l.b16 %v294
    %v708 = vunpack.c.h.b16 %v294
    %v709 = vunpack.c.l.b16 %v295
    %v710 = vunpack.c.h.b16 %v295
    %v711 = vunpack.c.l.b16 %v296
    %v712 = vunpack.c.h.b16 %v296
    %v713 = vunpack.c.l.b16 %v297
    %v714 = vunpack.c.h.b16 %v297
    %v715 = vunpack.c.l.b16 %v298
    %v716 = vunpack.c.h.b16 %v298
    %v717 = vunpack.c.l.b16 %v299
    %v718 = vunpack.c.h.b16 %v299
    %v719 = vunpack.c.l.b16 %v300
    %v720 = vunpack.c.h.b16 %v300
    %v721 = vunpack.c.l.b16 %v301
    %v722 = vunpack.c.h.b16 %v301
    %v723 = vunpack.c.l.b16 %v302
    %v724 = vunpack.c.h.b16 %v302
    %v725 = vunpack.c.l.b16 %v303
    %v726 = vunpack.c.h.b16 %v303
    %v727 = vunpack.c.l.b16 %v304
    %v728 = vunpack.c.h.b16 %v304
    %v729 = vunpack.c.l.b16 %v305
    %v730 = vunpack.c.h.b16 %v305
    %v731 = vunpack.c.l.b16 %v306
    %v732 = vunpack.c.h.b16 %v306
    %v733 = vunpack.c.l.b16 %v307
    %v734 = vunpack.c.h.b16 %v307
    %v735 = vunpack.c.l.b16 %v308
    %v736 = vunpack.c.h.b16 %v308
    %v737 = vunpack.c.l.b16 %v309
    %v738 = vunpack.c.h.b16 %v309
    %v739 = vunpack.c.l.b16 %v310
    %v740 = vunpack.c.h.b16 %v310
    %v741 = vunpack.c.l.b16 %v311
    %v742 = vunpack.c.h.b16 %v311
    %v743 = vunpack.c.l.b16 %v312
    %v744 = vunpack.c.h.b16 %v312
    %v745 = vunpack.c.l.b16 %v313
    %v746 = vunpack.c.h.b16 %v313
    %v747 = vunpack.c.l.b16 %v314
    %v748 = vunpack.c.h.b16 %v314
    %v749 = vunpack.c.l.b16 %v315
    %v750 = vunpack.c.h.b16 %v315
    %v751 = vunpack.c.l.b16 %v316
    %v752 = vunpack.c.h.b16 %v316
    %v753 = vunpack.c.l.b16 %v317
    %v754 = vunpack.c.h.b16 %v317
    %v755 = vunpack.c.l.b16 %v318
    %v756 = vunpack.c.h.b16 %v318
    %v757 = vunpack.c.l.b16 %v319
    %v758 = vunpack.c.h.b16 %v319
    %v759 = vunpack.c.l.b16 %v320
    %v760 = vunpack.c.h.b16 %v320
    %v761 = vunpack.c.l.b16 %v321
    %v762 = vunpack.c.h.b16 %v321
    %v763 = vunpack.c.l.b16 %v322
    %v764 = vunpack.c.h.b16 %v322
    %v765 = vunpack.c.l.b16 %v323
    %v766 = vunpack.c.h.b16 %v323
    %v767 = vunpack.c.l.b16 %v324
    %v768 = vunpack.c.h.b16 %v324
    %v769 = vunpack.c.l.b16 %v325
    %v770 = vunpack.c.h.b16 %v325
    %v771 = vunpack.c.l.b16 %v326
    %v772 = vunpack.c.h.b16 %v326
    %v773 = vunpack.c.l.b16 %v327
    %v774 = vunpack.c.h.b16 %v327
    %v775 = vunpack.c.l.b16 %v328
    %v776 = vunpack.c.h.b16 %v328
    %v777 = vunpack.c.l.b16 %v329
    %v778 = vunpack.c.h.b16 %v329
    %v779 = vunpack.c.l.b16 %v330
    %v780 = vunpack.c.h.b16 %v330
    %v781 = vunpack.c.l.b16 %v331
    %v782 = vunpack.c.h.b16 %v331
    %v783 = vunpack.c.l.b16 %v332
    %v784 = vunpack.c.h.b16 %v332
    %v785 = vunpack.c.l.b16 %v333
    %v786 = vunpack.c.h.b16 %v333
    %v787 = vunpack.c.l.b16 %v334
    %v788 = vunpack.c.h.b16 %v334
    %v789 = vunpack.c.l.b16 %v335
    %v790 = vunpack.c.h.b16 %v335
    %v791 = vunpack.c.l.b16 %v336
    %v792 = vunpack.c.h.b16 %v336
    %v793 = vunpack.c.l.b16 %v337
    %v794 = vunpack.c.h.b16 %v337
    %v795 = vunpack.c.l.b16 %v338
    %v796 = vunpack.c.h.b16 %v338
    %v797 = vunpack.c.l.b16 %v339
    %v798 = vunpack.c.h.b16 %v339
    %v799 = vunpack.c.l.b16 %v340
    %v800 = vunpack.c.h.b16 %v340
    %v801 = vunpack.c.l.b16 %v341
    %v802 = vunpack.c.h.b16 %v341
    %v803 = vunpack.c.l.b16 %v342
    %v804 = vunpack.c.h.b16 %v342
    %v805 = vunpack.c.l.b16 %v343
    %v806 = vunpack.c.h.b16 %v343
    %v807 = vunpack.c.l.b16 %v344
    %v808 = vunpack.c.h.b16 %v344
    %v809 = vunpack.c.l.b16 %v345
    %v810 = vunpack.c.h.b16 %v345
    %v811 = vunpack.c.l.b16 %v346
    %v812 = vunpack.c.h.b16 %v346
    %v813 = vunpack.c.l.b16 %v347
    %v814 = vunpack.c.h.b16 %v347
    %v815 = vunpack.c.l.b16 %v348
    %v816 = vunpack.c.h.b16 %v348
    %v817 = vunpack.c.l.b16 %v349
    %v818 = vunpack.c.h.b16 %v349
    %v819 = vunpack.c.l.b16 %v350
    %v820 = vunpack.c.h.b16 %v350
    %v821 = vunpack.c.l.b16 %v351
    %v822 = vunpack.c.h.b16 %v351
    %v823 = vunpack.c.l.b16 %v352
    %v824 = vunpack.c.h.b16 %v352
    %v825 = vunpack.c.l.b16 %v353
    %v826 = vunpack.c.h.b16 %v353
    %v827 = vunpack.c.l.b16 %v354
    %v828 = vunpack.c.h.b16 %v354
    %v829 = vunpack.c.l.b16 %v355
    %v830 = vunpack.c.h.b16 %v355
    %v831 = vunpack.c.l.b16 %v356
    %v832 = vunpack.c.h.b16 %v356
    %v833 = vunpack.c.l.b16 %v357
    %v834 = vunpack.c.h.b16 %v357
    %v835 = vunpack.c.l.b16 %v358
    %v836 = vunpack.c.h.b16 %v358
    %v837 = vunpack.c.l.b16 %v359
    %v838 = vunpack.c.h.b16 %v359
    %v839 = vunpack.c.l.b16 %v360
    %v840 = vunpack.c.h.b16 %v360
    %v841 = vunpack.c.l.b16 %v361
    %v842 = vunpack.c.h.b16 %v361
    %v843 = vunpack.c.l.b16 %v362
    %v844 = vunpack.c.h.b16 %v362
    %v845 = vunpack.c.l.b16 %v363
    %v846 = vunpack.c.h.b16 %v363
    %v847 = vunpack.c.l.b16 %v364
    %v848 = vunpack.c.h.b16 %v364
    %v849 = vunpack.c.l.b16 %v365
    %v850 = vunpack.c.h.b16 %v365
    %v851 = vunpack.c.l.b16 %v366
    %v852 = vunpack.c.h.b16 %v366
    %v853 = vunpack.c.l.b16 %v367
    %v854 = vunpack.c.h.b16 %v367
    %v855 = vunpack.c.l.b16 %v368
    %v856 = vunpack.c.h.b16 %v368
    %v857 = vunpack.c.l.b16 %v369
    %v858 = vunpack.c.h.b16 %v369
    %v859 = vunpack.c.l.b16 %v370
    %v860 = vunpack.c.h.b16 %v370
    %v861 = vunpack.c.l.b16 %v371
    %v862 = vunpack.c.h.b16 %v371
    %v863 = vunpack.c.l.b16 %v372
    %v864 = vunpack.c.h.b16 %v372
    %v865 = vunpack.c.l.b16 %v373
    %v866 = vunpack.c.h.b16 %v373
    %v867 = vunpack.c.l.b16 %v374
    %v868 = vunpack.c.h.b16 %v374
    %v869 = vunpack.c.l.b16 %v375
    %v870 = vunpack.c.h.b16 %v375
    %v871 = vunpack.c.l.b16 %v376
    %v872 = vunpack.c.h.b16 %v376
    %v873 = vunpack.c.l.b16 %v377
    %v874 = vunpack.c.h.b16 %v377
    %v875 = vunpack.c.l.b16 %v378
    %v876 = vunpack.c.h.b16 %v378
    %v877 = vunpack.c.l.b16 %v379
    %v878 = vunpack.c.h.b16 %v379
    %v879 = vunpack.c.l.b16 %v380
    %v880 = vunpack.c.h.b16 %v380
    %v881 = vunpack.c.l.b16 %v381
    %v882 = vunpack.c.h.b16 %v381
    %v883 = vunpack.c.l.b16 %v382
    %v884 = vunpack.c.h.b16 %v382
    %v885 = vunpack.c.l.b16 %v383
    %v886 = vunpack.c.h.b16 %v383
    %v887 = vunpack.c.l.b16 %v384
    %v888 = vunpack.c.h.b16 %v384
    %v889 = vunpack.c.l.b16 %v385
    %v890 = vunpack.c.h.b16 %v385
    %v891 = vunpack.c.l.b16 %v386
    %v892 = vunpack.c.h.b16 %v386
    %v893 = vunpack.c.l.b16 %v387
    %v894 = vunpack.c.h.b16 %v387
    %v895 = vunpack.c.l.b16 %v388
    %v896 = vunpack.c.h.b16 %v388
    %v897 = vunpack.c.l.b16 %v389
    %v898 = vunpack.c.h.b16 %v389
    %v899 = vunpack.c.l.b16 %v390
    %v900 = vunpack.c.h.b16 %v390
    %v901 = vunpack.c.l.b16 %v391
    %v902 = vunpack.c.h.b16 %v391
    %v903 = vunpack.c.l.b16 %v392
    %v904 = vunpack.c.h.b16 %v392
    %v905 = vunpack.c.l.b16 %v393
    %v906 = vunpack.c.h.b16 %v393
    %v907 = vunpack.c.l.b16 %v394
    %v908 = vunpack.c.h.b16 %v394
    %v909 = vunpack.c.l.b16 %v395
    %v910 = vunpack.c.h.b16 %v395
    %v911 = vunpack.c.l.b16 %v396
    %v912 = vunpack.c.h.b16 %v396
    %v913 = vunpack.c.l.b16 %v397
    %v914 = vunpack.c.h.b16 %v397
    %v915 = vunpack.c.l.b16 %v398
    %v916 = vunpack.c.h.b16 %v398
    %v917 = vunpack.c.l.b16 %v399
    %v918 = vunpack.c.h.b16 %v399
    %v919 = vunpack.c.l.b16 %v400
    %v920 = vunpack.c.h.b16 %v400
    %v921 = vunpack.c.l.b16 %v401
    %v922 = vunpack.c.h.b16 %v401
    %v923 = vunpack.c.l.b16 %v402
    %v924 = vunpack.c.h.b16 %v402
    %v925 = vunpack.c.l.b16 %v403
    %v926 = vunpack.c.h.b16 %v403
    %v927 = vunpack.c.l.b16 %v404
    %v928 = vunpack.c.h.b16 %v404
    %v929 = vunpack.c.l.b16 %v405
    %v930 = vunpack.c.h.b16 %v405
    %v931 = vunpack.c.l.b16 %v406
    %v932 = vunpack.c.h.b16 %v406
    %v933 = vunpack.c.l.b16 %v407
    %v934 = vunpack.c.h.b16 %v407
    %v935 = vunpack.c.l.b16 %v408
    %v936 = vunpack.c.h.b16 %v408
    %v937 = vunpack.c.l.b16 %v409
    %v938 = vunpack.c.h.b16 %v409
    %v939 = vunpack.c.l.b16 %v410
    %v940 = vunpack.c.h.b16 %v410
    %v941 = vunpack.c.l.b16 %v411
    %v942 = vunpack.c.h.b16 %v411
    %v943 = vunpack.c.l.b16 %v412
    %v944 = vunpack.c.h.b16 %v412
    %v945 = vunpack.c.l.b16 %v413
    %v946 = vunpack.c.h.b16 %v413
    %v947 = vunpack.c.l.b16 %v414
    %v948 = vunpack.c.h.b16 %v414
    %v949 = vunpack.c.l.b16 %v415
    %v950 = vunpack.c.h.b16 %v415
    %v951 = vunpack.c.l.b16 %v416
    %v952 = vunpack.c.h.b16 %v416
    %v953 = vunpack.c.l.b16 %v417
    %v954 = vunpack.c.h.b16 %v417
    %v955 = vunpack.c.l.b16 %v418
    %v956 = vunpack.c.h.b16 %v418
    %v957 = vunpack.c.l.b16 %v419
    %v958 = vunpack.c.h.b16 %v419
    %v959 = vunpack.c.l.b16 %v420
    %v960 = vunpack.c.h.b16 %v420
    %v961 = vunpack.c.l.b16 %v421
    %v962 = vunpack.c.h.b16 %v421
    %v963 = vunpack.c.l.b16 %v422
    %v964 = vunpack.c.h.b16 %v422
    %v965 = vunpack.c.l.b16 %v423
    %v966 = vunpack.c.h.b16 %v423
    %v967 = vunpack.c.l.b16 %v424
    %v968 = vunpack.c.h.b16 %v424
    %v969 = vunpack.c.l.b16 %v425
    %v970 = vunpack.c.h.b16 %v425
    %v971 = vunpack.c.l.b16 %v426
    %v972 = vunpack.c.h.b16 %v426
    %v973 = vunpack.c.l.b16 %v427
    %v974 = vunpack.c.h.b16 %v427
    %v975 = vunpack.c.l.b16 %v428
    %v976 = vunpack.c.h.b16 %v428
    %v977 = vunpack.c.l.b16 %v429
    %v978 = vunpack.c.h.b16 %v429
    %v979 = vunpack.c.l.b16 %v430
    %v980 = vunpack.c.h.b16 %v430
    %v981 = vunpack.c.l.b16 %v431
    %v982 = vunpack.c.h.b16 %v431
    %v983 = vunpack.c.l.b16 %v432
    %v984 = vunpack.c.h.b16 %v432
    %v985 = vunpack.c.l.b16 %v433
    %v986 = vunpack.c.h.b16 %v433
    %v987 = vunpack.c.l.b16 %v434
    %v988 = vunpack.c.h.b16 %v434
    %v989 = vunpack.c.l.b16 %v435
    %v990 = vunpack.c.h.b16 %v435
    %v991 = vunpack.c.l.b16 %v436
    %v992 = vunpack.c.h.b16 %v436
    %v993 = vunpack.c.l.b16 %v437
    %v994 = vunpack.c.h.b16 %v437
    %v995 = vunpack.c.l.b16 %v438
    %v996 = vunpack.c.h.b16 %v438
    %v997 = vunpack.c.l.b16 %v439
    %v998 = vunpack.c.h.b16 %v439
    %v999 = vunpack.c.l.b16 %v440
    %v1000 = vunpack.c.h.b16 %v440
    %v1001 = vunpack.c.l.b16 %v441
    %v1002 = vunpack.c.h.b16 %v441
    %v1003 = vunpack.c.l.b16 %v442
    %v1004 = vunpack.c.h.b16 %v442
    %v1005 = vunpack.c.l.b16 %v443
    %v1006 = vunpack.c.h.b16 %v443
    %v1007 = vunpack.c.l.b16 %v444
    %v1008 = vunpack.c.h.b16 %v444
    %v1009 = vunpack.c.l.b16 %v445
    %v1010 = vunpack.c.h.b16 %v445
    %v1011 = vunpack.c.l.b16 %v446
    %v1012 = vunpack.c.h.b16 %v446
    %v1013 = vunpack.c.l.b16 %v447
    %v1014 = vunpack.c.h.b16 %v447
    %v1015 = vunpack.c.l.b16 %v448
    %v1016 = vunpack.c.h.b16 %v448
    %v1017 = vunpack.c.l.b16 %v449
    %v1018 = vunpack.c.h.b16 %v449
    %v1019 = vunpack.c.l.b16 %v450
    %v1020 = vunpack.c.h.b16 %v450
    %v1021 = vunpack.c.l.b16 %v451
    %v1022 = vunpack.c.h.b16 %v451
    %v1023 = vunpack.c.l.b16 %v452
    %v1024 = vunpack.c.h.b16 %v452
    %v1025 = vunpack.c.l.b16 %v453
    %v1026 = vunpack.c.h.b16 %v453
    %v1027 = vunpack.c.l.b16 %v454
    %v1028 = vunpack.c.h.b16 %v454
    %v1029 = vunpack.c.l.b16 %v455
    %v1030 = vunpack.c.h.b16 %v455
    %v1031 = vunpack.c.l.b16 %v456
    %v1032 = vunpack.c.h.b16 %v456
    %v1033 = vpack.c.b16 %v655, %v649
    %v1034 = vpack.c.b16 %v656, %v650
    %v1035 = vpack.c.b16 %v657, %v651
    %v1036 = vpack.c.b16 %v658, %v652
    %v1037 = vpack.c.b16 %v659, %v653
    %v1038 = vpack.c.b16 %v660, %v654
    %v1039 = vpack.c.b16 %v667, %v661
    %v1040 = vpack.c.b16 %v668, %v662
    %v1041 = vpack.c.b16 %v669, %v663
    %v1042 = vpack.c.b16 %v670, %v664
    %v1043 = vpack.c.b16 %v671, %v665
    %v1044 = vpack.c.b16 %v672, %v666
    %v1045 = vpack.c.b16 %v679, %v673
    %v1046 = vpack.c.b16 %v680, %v674
    %v1047 = vpack.c.b16 %v681, %v675
    %v1048 = vpack.c.b16 %v682, %v676
    %v1049 = vpack.c.b16 %v683, %v677
    %v1050 = vpack.c.b16 %v684, %v678
    %v1051 = vpack.c.b16 %v691, %v685
    %v1052 = vpack.c.b16 %v692, %v686
    %v1053 = vpack.c.b16 %v693, %v687
    %v1054 = vpack.c.b16 %v694, %v688
    %v1055 = vpack.c.b16 %v695, %v689
    %v1056 = vpack.c.b16 %v696, %v690
    %v1057 = vpack.c.b16 %v703, %v697
    %v1058 = vpack.c.b16 %v704, %v698
    %v1059 = vpack.c.b16 %v705, %v699
    %v1060 = vpack.c.b16 %v706, %v700
    %v1061 = vpack.c.b16 %v707, %v701
    %v1062 = vpack.c.b16 %v708, %v702
    %v1063 = vpack.c.b16 %v715, %v709
    %v1064 = vpack.c.b16 %v716, %v710
    %v1065 = vpack.c.b16 %v717, %v711
    %v1066 = vpack.c.b16 %v718, %v712
    %v1067 = vpack.c.b16 %v719, %v713
    %v1068 = vpack.c.b16 %v720, %v714
    %v1069 = vpack.c.b16 %v727, %v721
    %v1070 = vpack.c.b16 %v728, %v722
    %v1071 = vpack.c.b16 %v729, %v723
    %v1072 = vpack.c.b16 %v730, %v724
    %v1073 = vpack.c.b16 %v731, %v725
    %v1074 = vpack.c.b16 %v732, %v726
    %v1075 = vpack.c.b16 %v739, %v733
    %v1076 = vpack.c.b16 %v740, %v734
    %v1077 = vpack.c.b16 %v741, %v735
    %v1078 = vpack.c.b16 %v742, %v736
    %v1079 = vpack.c.b16 %v743, %v737
    %v1080 = vpack.c.b16 %v744, %v738
    %v1081 = vpack.c.b16 %v751, %v745
    %v1082 = vpack.c.b16 %v752, %v746
    %v1083 = vpack.c.b16 %v753, %v747
    %v1084 = vpack.c.b16 %v754, %v748
    %v1085 = vpack.c.b16 %v755, %v749
    %v1086 = vpack.c.b16 %v756, %v750
    %v1087 = vpack.c.b16 %v763, %v757
    %v1088 = vpack.c.b16 %v764, %v758
    %v1089 = vpack.c.b16 %v765, %v759
    %v1090 = vpack.c.b16 %v766, %v760
    %v1091 = vpack.c.b16 %v767, %v761
    %v1092 = vpack.c.b16 %v768, %v762
    %v1093 = vpack.c.b16 %v775, %v769
    %v1094 = vpack.c.b16 %v776, %v770
    %v1095 = vpack.c.b16 %v777, %v771
    %v1096 = vpack.c.b16 %v778, %v772
    %v1097 = vpack.c.b16 %v779, %v773
    %v1098 = vpack.c.b16 %v780, %v774
    %v1099 = vpack.c.b16 %v787, %v781
    %v1100 = vpack.c.b16 %v788, %v782
    %v1101 = vpack.c.b16 %v789, %v783
    %v1102 = vpack.c.b16 %v790, %v784
    %v1103 = vpack.c.b16 %v791, %v785
    %v1104 = vpack.c.b16 %v792, %v786
    %v1105 = vpack.c.b16 %v799, %v793
    %v1106 = vpack.c.b16 %v800, %v794
    %v1107 = vpack.c.b16 %v801, %v795
    %v1108 = vpack.c.b16 %v802, %v796
    %v1109 = vpack.c.b16 %v803, %v797
    %v1110 = vpack.c.b16 %v804, %v798
    %v1111 = vpack.c.b16 %v811, %v805
    %v1112 = vpack.c.b16 %v812, %v806
    %v1113 = vpack.c.b16 %v813, %v807
    %v1114 = vpack.c.b16 %v814, %v808
    %v1115 = vpack.c.b16 %v815, %v809
    %v1116 = vpack.c.b16 %v816, %v810
    %v1117 = vpack.c.b16 %v823, %v817
    %v1118 = vpack.c.b16 %v824, %v818
    %v1119 = vpack.c.b16 %v825, %v819
    %v1120 = vpack.c.b16 %v826, %v820
    %v1121 = vpack.c.b16 %v827, %v821
    %v1122 = vpack.c.b16 %v828, %v822
    %v1123 = vpack.c.b16 %v835, %v829
    %v1124 = vpack.c.b16 %v836, %v830
    %v1125 = vpack.c.b16 %v837, %v831
    %v1126 = vpack.c.b16 %v838, %v832
    %v1127 = vpack.c.b16 %v839, %v833
    %v1128 = vpack.c.b16 %v840, %v834
    %v1129 = vpack.c.b16 %v847, %v841
    %v1130 = vpack.c.b16 %v848, %v842
    %v1131 = vpack.c.b16 %v849, %v843
    %v1132 = vpack.c.b16 %v850, %v844
    %v1133 = vpack.c.b16 %v851, %v845
    %v1134 = vpack.c.b16 %v852, %v846
    %v1135 = vpack.c.b16 %v859, %v853
    %v1136 = vpack.c.b16 %v860, %v854
    %v1137 = vpack.c.b16 %v861, %v855
    %v1138 = vpack.c.b16 %v862, %v856
    %v1139 = vpack.c.b16 %v863, %v857
    %v1140 = vpack.c.b16 %v864, %v858
    %v1141 = vpack.c.b16 %v871, %v865
    %v1142 = vpack.c.b16 %v872, %v866
    %v1143 = vpack.c.b16 %v873, %v867
    %v1144 = vpack.c.b16 %v874, %v868
    %v1145 = vpack.c.b16 %v875, %v869
    %v1146 = vpack.c.b16 %v876, %v870
    %v1147 = vpack.c.b16 %v883, %v877
    %v1148 = vpack.c.b16 %v884, %v878
    %v1149 = vpack.c.b16 %v885, %v879
    %v1150 = vpack.c.b16 %v886, %v880
    %v1151 = vpack.c.b16 %v887, %v881
    %v1152 = vpack.c.b16 %v888, %v882
    %v1153 = vpack.c.b16 %v895, %v889
    %v1154 = vpack.c.b16 %v896, %v890
    %v1155 = vpack.c.b16 %v897, %v891
    %v1156 = vpack.c.b16 %v898, %v892
    %v1157 = vpack.c.b16 %v899, %v893
    %v1158 = vpack.c.b16 %v900, %v894
    %v1159 = vpack.c.b16 %v907, %v901
    %v1160 = vpack.c.b16 %v908, %v902
    %v1161 = vpack.c.b16 %v909, %v903
    %v1162 = vpack.c.b16 %v910, %v904
    %v1163 = vpack.c.b16 %v911, %v905
    %v1164 = vpack.c.b16 %v912, %v906
    %v1165 = vpack.c.b16 %v919, %v913
    %v1166 = vpack.c.b16 %v920, %v914
    %v1167 = vpack.c.b16 %v921, %v915
    %v1168 = vpack.c.b16 %v922, %v916
    %v1169 = vpack.c.b16 %v923, %v917
    %v1170 = vpack.c.b16 %v924, %v918
    %v1171 = vpack.c.b16 %v931, %v925
    %v1172 = vpack.c.b16 %v932, %v926
    %v1173 = vpack.c.b16 %v933, %v927
    %v1174 = vpack.c.b16 %v934, %v928
    %v1175 = vpack.c.b16 %v935, %v929
    %v1176 = vpack.c.b16 %v936, %v930
    %v1177 = vpack.c.b16 %v943, %v937
    %v1178 = vpack.c.b16 %v944, %v938
    %v1179 = vpack.c.b16 %v945, %v939
    %v1180 = vpack.c.b16 %v946, %v940
    %v1181 = vpack.c.b16 %v947, %v941
    %v1182 = vpack.c.b16 %v948, %v942
    %v1183 = vpack.c.b16 %v955, %v949
    %v1184 = vpack.c.b16 %v956, %v950
    %v1185 = vpack.c.b16 %v957, %v951
    %v1186 = vpack.c.b16 %v958, %v952
    %v1187 = vpack.c.b16 %v959, %v953
    %v1188 = vpack.c.b16 %v960, %v954
    %v1189 = vpack.c.b16 %v967, %v961
    %v1190 = vpack.c.b16 %v968, %v962
    %v1191 = vpack.c.b16 %v969, %v963
    %v1192 = vpack.c.b16 %v970, %v964
    %v1193 = vpack.c.b16 %v971, %v965
    %v1194 = vpack.c.b16 %v972, %v966
    %v1195 = vpack.c.b16 %v979, %v973
    %v1196 = vpack.c.b16 %v980, %v974
    %v1197 = vpack.c.b16 %v981, %v975
    %v1198 = vpack.c.b16 %v982, %v976
    %v1199 = vpack.c.b16 %v983, %v977
    %v1200 = vpack.c.b16 %v984, %v978
    %v1201 = vpack.c.b16 %v991, %v985
    %v1202 = vpack.c.b16 %v992, %v986
    %v1203 = vpack.c.b16 %v993, %v987
    %v1204 = vpack.c.b16 %v994, %v988
    %v1205 = vpack.c.b16 %v995, %v989
    %v1206 = vpack.c.b16 %v996, %v990
    %v1207 = vpack.c.b16 %v1003, %v997
    %v1208 = vpack.c.b16 %v1004, %v998
    %v1209 = vpack.c.b16 %v1005, %v999
    %v1210 = vpack.c.b16 %v1006, %v1000
    %v1211 = vpack.c.b16 %v1007, %v1001
    %v1212 = vpack.c.b16 %v1008, %v1002
    %v1213 = vpack.c.b16 %v1015, %v1009
    %v1214 = vpack.c.b16 %v1016, %v1010
    %v1215 = vpack.c.b16 %v1017, %v1011
    %v1216 = vpack.c.b16 %v1018, %v1012
    %v1217 = vpack.c.b16 %v1019, %v1013
    %v1218 = vpack.c.b16 %v1020, %v1014
    %v1219 = vpack.c.b16 %v1027, %v1021
    %v1220 = vpack.c.b16 %v1028, %v1022
    %v1221 = vpack.c.b16 %v1029, %v1023
    %v1222 = vpack.c.b16 %v1030, %v1024
    %v1223 = vpack.c.b16 %v1031, %v1025
    %v1224 = vpack.c.b16 %v1032, %v1026
    %1417 = vmatprep.subr.bf16.mxu0 %v1076
    %1418 = vmatpush1.bf16.msra.mxu0 %v1075
    %1419 = vmatprep.subr.bf16.mxu0 %v1070
    %1420 = vmatpush1.bf16.msra.mxu0 %v1069
    %1421 = vmatprep.subr.bf16.mxu0 %v1064
    %1422 = vmatpush1.bf16.msra.mxu0 %v1063
    %1423 = vmatprep.subr.bf16.mxu0 %v1058
    %1424 = vmatpush1.bf16.msra.mxu0 %v1057
    %1425 = vmatprep.subr.bf16.mxu0 %v1052
    %1426 = vmatpush1.bf16.msra.mxu0 %v1051
    %1427 = vmatprep.subr.bf16.mxu0 %v1046
    %1428 = vmatpush1.bf16.msra.mxu0 %v1045
    %1429 = vmatprep.subr.bf16.mxu0 %v1040
    %1430 = vmatpush1.bf16.msra.mxu0 %v1039
    %1431 = vmatprep.subr.bf16.mxu0 %v1034
    %1432 = vmatpush1.bf16.msra.mxu0 %v1033
    %1433 = vmatprep.subr.bf16.mxu0 %v1124
    %1434 = vmatpush2.bf16.msra.mxu0 %v1123
    %1435 = vmatprep.subr.bf16.mxu0 %v1118
    %1436 = vmatpush2.bf16.msra.mxu0 %v1117
    %1437 = vmatprep.subr.bf16.mxu0 %v1112
    %1438 = vmatpush2.bf16.msra.mxu0 %v1111
    %1439 = vmatprep.subr.bf16.mxu0 %v1106
    %1440 = vmatpush2.bf16.msra.mxu0 %v1105
    %1441 = vmatprep.subr.bf16.mxu0 %v1100
    %1442 = vmatpush2.bf16.msra.mxu0 %v1099
    %1443 = vmatprep.subr.bf16.mxu0 %v1094
    %1444 = vmatpush2.bf16.msra.mxu0 %v1093
    %1445 = vmatprep.subr.bf16.mxu0 %v1088
    %1446 = vmatpush2.bf16.msra.mxu0 %v1087
    %1447 = vmatprep.subr.bf16.mxu0 %v1082
    %1448 = vmatpush2.bf16.msra.mxu0 %v1081
    %1449 = vmatprep.mubr.bf16.mxu0 %v262
    %1450 = vmatmul.mubr.bf16.gmra.mxu0 %v261
    %v1451 = vpop.f32.mrf.mxu0
    %v1452 = vadd.f32 0.0, %v1451
    %v1453 = vpop.f32.mrf.mxu0
    %v1454 = vadd.f32 0.0, %v1453
    %v1455 = vpop.f32.mrf.mxu0
    %v1456 = vpop.f32.mrf.mxu0
    %1457 = vdwg.mxu0
    %1458 = vmatprep.subr.bf16.mxu0 %v1172
    %1459 = vmatpush1.bf16.msra.mxu0 %v1171
    %1460 = vmatprep.subr.bf16.mxu0 %v1166
    %1461 = vmatpush1.bf16.msra.mxu0 %v1165
    %1462 = vmatprep.subr.bf16.mxu0 %v1160
    %1463 = vmatpush1.bf16.msra.mxu0 %v1159
    %1464 = vmatprep.subr.bf16.mxu0 %v1154
    %1465 = vmatpush1.bf16.msra.mxu0 %v1153
    %1466 = vmatprep.subr.bf16.mxu0 %v1148
    %1467 = vmatpush1.bf16.msra.mxu0 %v1147
    %1468 = vmatprep.subr.bf16.mxu0 %v1142
    %1469 = vmatpush1.bf16.msra.mxu0 %v1141
    %1470 = vmatprep.subr.bf16.mxu0 %v1136
    %1471 = vmatpush1.bf16.msra.mxu0 %v1135
    %1472 = vmatprep.subr.bf16.mxu0 %v1130
    %1473 = vmatpush1.bf16.msra.mxu0 %v1129
    %1474 = vmatprep.subr.bf16.mxu0 %v1220
    %1475 = vmatpush2.bf16.msra.mxu0 %v1219
    %1476 = vmatprep.subr.bf16.mxu0 %v1214
    %1477 = vmatpush2.bf16.msra.mxu0 %v1213
    %1478 = vmatprep.subr.bf16.mxu0 %v1208
    %1479 = vmatpush2.bf16.msra.mxu0 %v1207
    %1480 = vmatprep.subr.bf16.mxu0 %v1202
    %1481 = vmatpush2.bf16.msra.mxu0 %v1201
    %1482 = vmatprep.subr.bf16.mxu0 %v1196
    %1483 = vmatpush2.bf16.msra.mxu0 %v1195
    %1484 = vmatprep.subr.bf16.mxu0 %v1190
    %1485 = vmatpush2.bf16.msra.mxu0 %v1189
    %1486 = vmatprep.subr.bf16.mxu0 %v1184
    %1487 = vmatpush2.bf16.msra.mxu0 %v1183
    %1488 = vmatprep.subr.bf16.mxu0 %v1178
    %1489 = vmatpush2.bf16.msra.mxu0 %v1177
    %1490 = vmatprep.mubr.bf16.mxu0 %v208
    %1491 = vmatmul.mubr.bf16.gmra.mxu0 %v207
    %v1492 = vpop.f32.mrf.mxu0
    %v1493 = vadd.f32 %v1452, %v1492
    %v1494 = vpop.f32.mrf.mxu0
    %v1495 = vadd.f32 %v1454, %v1494
    %v1496 = vpop.f32.mrf.mxu0
    %v1497 = vpop.f32.mrf.mxu0
    %1498 = vdwg.mxu0
    %1499 = vmatprep.subr.bf16.mxu0 %v1078
    %1500 = vmatpush1.bf16.msra.mxu0 %v1077
    %1501 = vmatprep.subr.bf16.mxu0 %v1072
    %1502 = vmatpush1.bf16.msra.mxu0 %v1071
    %1503 = vmatprep.subr.bf16.mxu0 %v1066
    %1504 = vmatpush1.bf16.msra.mxu0 %v1065
    %1505 = vmatprep.subr.bf16.mxu0 %v1060
    %1506 = vmatpush1.bf16.msra.mxu0 %v1059
    %1507 = vmatprep.subr.bf16.mxu0 %v1054
    %1508 = vmatpush1.bf16.msra.mxu0 %v1053
    %1509 = vmatprep.subr.bf16.mxu0 %v1048
    %1510 = vmatpush1.bf16.msra.mxu0 %v1047
    %1511 = vmatprep.subr.bf16.mxu0 %v1042
    %1512 = vmatpush1.bf16.msra.mxu0 %v1041
    %1513 = vmatprep.subr.bf16.mxu0 %v1036
    %1514 = vmatpush1.bf16.msra.mxu0 %v1035
    %1515 = vmatprep.subr.bf16.mxu0 %v1126
    %1516 = vmatpush2.bf16.msra.mxu0 %v1125
    %1517 = vmatprep.subr.bf16.mxu0 %v1120
    %1518 = vmatpush2.bf16.msra.mxu0 %v1119
    %1519 = vmatprep.subr.bf16.mxu0 %v1114
    %1520 = vmatpush2.bf16.msra.mxu0 %v1113
    %1521 = vmatprep.subr.bf16.mxu0 %v1108
    %1522 = vmatpush2.bf16.msra.mxu0 %v1107
    %1523 = vmatprep.subr.bf16.mxu0 %v1102
    %1524 = vmatpush2.bf16.msra.mxu0 %v1101
    %1525 = vmatprep.subr.bf16.mxu0 %v1096
    %1526 = vmatpush2.bf16.msra.mxu0 %v1095
    %1527 = vmatprep.subr.bf16.mxu0 %v1090
    %1528 = vmatpush2.bf16.msra.mxu0 %v1089
    %1529 = vmatprep.subr.bf16.mxu0 %v1084
    %1530 = vmatpush2.bf16.msra.mxu0 %v1083
    %1531 = vmatprep.mubr.bf16.mxu0 %v262
    %1532 = vmatmul.mubr.bf16.gmra.mxu0 %v261
    %v1533 = vpop.f32.mrf.mxu0
    %v1534 = vadd.f32 0.0, %v1533
    %v1535 = vpop.f32.mrf.mxu0
    %v1536 = vadd.f32 0.0, %v1535
    %v1537 = vpop.f32.mrf.mxu0
    %v1538 = vpop.f32.mrf.mxu0
    %1539 = vdwg.mxu0
    %1540 = vmatprep.subr.bf16.mxu0 %v1174
    %1541 = vmatpush1.bf16.msra.mxu0 %v1173
    %1542 = vmatprep.subr.bf16.mxu0 %v1168
    %1543 = vmatpush1.bf16.msra.mxu0 %v1167
    %1544 = vmatprep.subr.bf16.mxu0 %v1162
    %1545 = vmatpush1.bf16.msra.mxu0 %v1161
    %1546 = vmatprep.subr.bf16.mxu0 %v1156
    %1547 = vmatpush1.bf16.msra.mxu0 %v1155
    %1548 = vmatprep.subr.bf16.mxu0 %v1150
    %1549 = vmatpush1.bf16.msra.mxu0 %v1149
    %1550 = vmatprep.subr.bf16.mxu0 %v1144
    %1551 = vmatpush1.bf16.msra.mxu0 %v1143
    %1552 = vmatprep.subr.bf16.mxu0 %v1138
    %1553 = vmatpush1.bf16.msra.mxu0 %v1137
    %1554 = vmatprep.subr.bf16.mxu0 %v1132
    %1555 = vmatpush1.bf16.msra.mxu0 %v1131
    %1556 = vmatprep.subr.bf16.mxu0 %v1222
    %1557 = vmatpush2.bf16.msra.mxu0 %v1221
    %1558 = vmatprep.subr.bf16.mxu0 %v1216
    %1559 = vmatpush2.bf16.msra.mxu0 %v1215
    %1560 = vmatprep.subr.bf16.mxu0 %v1210
    %1561 = vmatpush2.bf16.msra.mxu0 %v1209
    %1562 = vmatprep.subr.bf16.mxu0 %v1204
    %1563 = vmatpush2.bf16.msra.mxu0 %v1203
    %1564 = vmatprep.subr.bf16.mxu0 %v1198
    %1565 = vmatpush2.bf16.msra.mxu0 %v1197
    %1566 = vmatprep.subr.bf16.mxu0 %v1192
    %1567 = vmatpush2.bf16.msra.mxu0 %v1191
    %1568 = vmatprep.subr.bf16.mxu0 %v1186
    %1569 = vmatpush2.bf16.msra.mxu0 %v1185
    %1570 = vmatprep.subr.bf16.mxu0 %v1180
    %1571 = vmatpush2.bf16.msra.mxu0 %v1179
    %1572 = vmatprep.mubr.bf16.mxu0 %v208
    %1573 = vmatmul.mubr.bf16.gmra.mxu0 %v207
    %v1574 = vpop.f32.mrf.mxu0
    %v1575 = vadd.f32 %v1534, %v1574
    %v1576 = vpop.f32.mrf.mxu0
    %v1577 = vadd.f32 %v1536, %v1576
    %v1578 = vpop.f32.mrf.mxu0
    %v1579 = vpop.f32.mrf.mxu0
    %1580 = vdwg.mxu0
    %1581 = vmatprep.subr.bf16.mxu0 %v1080
    %1582 = vmatpush1.bf16.msra.mxu0 %v1079
    %1583 = vmatprep.subr.bf16.mxu0 %v1074
    %1584 = vmatpush1.bf16.msra.mxu0 %v1073
    %1585 = vmatprep.subr.bf16.mxu0 %v1068
    %1586 = vmatpush1.bf16.msra.mxu0 %v1067
    %1587 = vmatprep.subr.bf16.mxu0 %v1062
    %1588 = vmatpush1.bf16.msra.mxu0 %v1061
    %1589 = vmatprep.subr.bf16.mxu0 %v1056
    %1590 = vmatpush1.bf16.msra.mxu0 %v1055
    %1591 = vmatprep.subr.bf16.mxu0 %v1050
    %1592 = vmatpush1.bf16.msra.mxu0 %v1049
    %1593 = vmatprep.subr.bf16.mxu0 %v1044
    %1594 = vmatpush1.bf16.msra.mxu0 %v1043
    %1595 = vmatprep.subr.bf16.mxu0 %v1038
    %1596 = vmatpush1.bf16.msra.mxu0 %v1037
    %1597 = vmatprep.subr.bf16.mxu0 %v1128
    %1598 = vmatpush2.bf16.msra.mxu0 %v1127
    %1599 = vmatprep.subr.bf16.mxu0 %v1122
    %1600 = vmatpush2.bf16.msra.mxu0 %v1121
    %1601 = vmatprep.subr.bf16.mxu0 %v1116
    %1602 = vmatpush2.bf16.msra.mxu0 %v1115
    %1603 = vmatprep.subr.bf16.mxu0 %v1110
    %1604 = vmatpush2.bf16.msra.mxu0 %v1109
    %1605 = vmatprep.subr.bf16.mxu0 %v1104
    %1606 = vmatpush2.bf16.msra.mxu0 %v1103
    %1607 = vmatprep.subr.bf16.mxu0 %v1098
    %1608 = vmatpush2.bf16.msra.mxu0 %v1097
    %1609 = vmatprep.subr.bf16.mxu0 %v1092
    %1610 = vmatpush2.bf16.msra.mxu0 %v1091
    %1611 = vmatprep.subr.bf16.mxu0 %v1086
    %1612 = vmatpush2.bf16.msra.mxu0 %v1085
    %1613 = vmatprep.mubr.bf16.mxu0 %v262
    %1614 = vmatmul.mubr.bf16.gmra.mxu0 %v261
    %v1615 = vpop.f32.mrf.mxu0
    %v1616 = vadd.f32 0.0, %v1615
    %v1617 = vpop.f32.mrf.mxu0
    %v1618 = vadd.f32 0.0, %v1617
    %v1619 = vpop.f32.mrf.mxu0
    %v1620 = vpop.f32.mrf.mxu0
    %1621 = vdwg.mxu0
    %1622 = vmatprep.subr.bf16.mxu0 %v1176
    %1623 = vmatpush1.bf16.msra.mxu0 %v1175
    %1624 = vmatprep.subr.bf16.mxu0 %v1170
    %1625 = vmatpush1.bf16.msra.mxu0 %v1169
    %1626 = vmatprep.subr.bf16.mxu0 %v1164
    %1627 = vmatpush1.bf16.msra.mxu0 %v1163
    %1628 = vmatprep.subr.bf16.mxu0 %v1158
    %1629 = vmatpush1.bf16.msra.mxu0 %v1157
    %1630 = vmatprep.subr.bf16.mxu0 %v1152
    %1631 = vmatpush1.bf16.msra.mxu0 %v1151
    %1632 = vmatprep.subr.bf16.mxu0 %v1146
    %1633 = vmatpush1.bf16.msra.mxu0 %v1145
    %1634 = vmatprep.subr.bf16.mxu0 %v1140
    %1635 = vmatpush1.bf16.msra.mxu0 %v1139
    %1636 = vmatprep.subr.bf16.mxu0 %v1134
    %1637 = vmatpush1.bf16.msra.mxu0 %v1133
    %1638 = vmatprep.subr.bf16.mxu0 %v1224
    %1639 = vmatpush2.bf16.msra.mxu0 %v1223
    %1640 = vmatprep.subr.bf16.mxu0 %v1218
    %1641 = vmatpush2.bf16.msra.mxu0 %v1217
    %1642 = vmatprep.subr.bf16.mxu0 %v1212
    %1643 = vmatpush2.bf16.msra.mxu0 %v1211
    %1644 = vmatprep.subr.bf16.mxu0 %v1206
    %1645 = vmatpush2.bf16.msra.mxu0 %v1205
    %1646 = vmatprep.subr.bf16.mxu0 %v1200
    %1647 = vmatpush2.bf16.msra.mxu0 %v1199
    %1648 = vmatprep.subr.bf16.mxu0 %v1194
    %1649 = vmatpush2.bf16.msra.mxu0 %v1193
    %1650 = vmatprep.subr.bf16.mxu0 %v1188
    %1651 = vmatpush2.bf16.msra.mxu0 %v1187
    %1652 = vmatprep.subr.bf16.mxu0 %v1182
    %1653 = vmatpush2.bf16.msra.mxu0 %v1181
    %1654 = vmatprep.mubr.bf16.mxu0 %v208
    %1655 = vmatmul.mubr.bf16.gmra.mxu0 %v207
    %v1656 = vpop.f32.mrf.mxu0
    %v1657 = vadd.f32 %v1616, %v1656
    %v1658 = vpop.f32.mrf.mxu0
    %v1659 = vadd.f32 %v1618, %v1658
    %v1660 = vpop.f32.mrf.mxu0
    %v1661 = vpop.f32.mrf.mxu0
    %1662 = vdwg.mxu0
    %v1663 = vld [vmem:[#allocation8] sm:$0xff]
    %v1664 = vld [vmem:[#allocation8 + $0x8] sm:$0xff]
    %v1665 = vld [vmem:[#allocation8 + $0x10] sm:$0xff]
    %v1666 = vld [vmem:[#allocation8 + $0x18] sm:$0xff]
    %v1667 = vld [vmem:[#allocation8 + $0x20] sm:$0xff]
    %v1668 = vld [vmem:[#allocation8 + $0x28] sm:$0xff]
    %v1669 = vld [vmem:[#allocation8 + $0x30] sm:$0xff]
    %v1670 = vld [vmem:[#allocation8 + $0x38] sm:$0xff]
    %v1671 = vld [vmem:[#allocation8 + $0x40] sm:$0xff]
    %v1672 = vld [vmem:[#allocation8 + $0x48] sm:$0xff]
    %v1673 = vld [vmem:[#allocation8 + $0x50] sm:$0xff]
    %v1674 = vld [vmem:[#allocation8 + $0x58] sm:$0xff]
    %v1675 = vld [vmem:[#allocation8 + $0x60] sm:$0xff]
    %v1676 = vld [vmem:[#allocation8 + $0x68] sm:$0xff]
    %v1677 = vld [vmem:[#allocation8 + $0x70] sm:$0xff]
    %v1678 = vld [vmem:[#allocation8 + $0x78] sm:$0xff]
    %v1679 = vld [vmem:[#allocation8 + $0x80] sm:$0xff]
    %v1680 = vld [vmem:[#allocation8 + $0x88] sm:$0xff]
    %v1681 = vld [vmem:[#allocation8 + $0x90] sm:$0xff]
    %v1682 = vld [vmem:[#allocation8 + $0x98] sm:$0xff]
    %v1683 = vld [vmem:[#allocation8 + $0xa0] sm:$0xff]
    %v1684 = vld [vmem:[#allocation8 + $0xa8] sm:$0xff]
    %v1685 = vld [vmem:[#allocation8 + $0xb0] sm:$0xff]
    %v1686 = vld [vmem:[#allocation8 + $0xb8] sm:$0xff]
    %v1687 = vld [vmem:[#allocation8 + $0xc0] sm:$0xff]
    %v1688 = vld [vmem:[#allocation8 + $0xc8] sm:$0xff]
    %v1689 = vld [vmem:[#allocation8 + $0xd0] sm:$0xff]
    %v1690 = vld [vmem:[#allocation8 + $0xd8] sm:$0xff]
    %v1691 = vld [vmem:[#allocation8 + $0xe0] sm:$0xff]
    %v1692 = vld [vmem:[#allocation8 + $0xe8] sm:$0xff]
    %v1693 = vld [vmem:[#allocation8 + $0xf0] sm:$0xff]
    %v1694 = vld [vmem:[#allocation8 + $0xf8] sm:$0xff]
    %v1727 = vunpack.c.l.b16 %v1663
    %v1728 = vunpack.c.h.b16 %v1663
    %v1729 = vunpack.c.l.b16 %v1664
    %v1730 = vunpack.c.h.b16 %v1664
    %v1731 = vunpack.c.l.b16 %v1665
    %v1732 = vunpack.c.h.b16 %v1665
    %v1733 = vunpack.c.l.b16 %v1666
    %v1734 = vunpack.c.h.b16 %v1666
    %v1735 = vunpack.c.l.b16 %v1667
    %v1736 = vunpack.c.h.b16 %v1667
    %v1737 = vunpack.c.l.b16 %v1668
    %v1738 = vunpack.c.h.b16 %v1668
    %v1739 = vunpack.c.l.b16 %v1669
    %v1740 = vunpack.c.h.b16 %v1669
    %v1741 = vunpack.c.l.b16 %v1670
    %v1742 = vunpack.c.h.b16 %v1670
    %v1743 = vunpack.c.l.b16 %v1671
    %v1744 = vunpack.c.h.b16 %v1671
    %v1745 = vunpack.c.l.b16 %v1672
    %v1746 = vunpack.c.h.b16 %v1672
    %v1747 = vunpack.c.l.b16 %v1673
    %v1748 = vunpack.c.h.b16 %v1673
    %v1749 = vunpack.c.l.b16 %v1674
    %v1750 = vunpack.c.h.b16 %v1674
    %v1751 = vunpack.c.l.b16 %v1675
    %v1752 = vunpack.c.h.b16 %v1675
    %v1753 = vunpack.c.l.b16 %v1676
    %v1754 = vunpack.c.h.b16 %v1676
    %v1755 = vunpack.c.l.b16 %v1677
    %v1756 = vunpack.c.h.b16 %v1677
    %v1757 = vunpack.c.l.b16 %v1678
    %v1758 = vunpack.c.h.b16 %v1678
    %v1759 = vunpack.c.l.b16 %v1679
    %v1760 = vunpack.c.h.b16 %v1679
    %v1761 = vunpack.c.l.b16 %v1680
    %v1762 = vunpack.c.h.b16 %v1680
    %v1763 = vunpack.c.l.b16 %v1681
    %v1764 = vunpack.c.h.b16 %v1681
    %v1765 = vunpack.c.l.b16 %v1682
    %v1766 = vunpack.c.h.b16 %v1682
    %v1767 = vunpack.c.l.b16 %v1683
    %v1768 = vunpack.c.h.b16 %v1683
    %v1769 = vunpack.c.l.b16 %v1684
    %v1770 = vunpack.c.h.b16 %v1684
    %v1771 = vunpack.c.l.b16 %v1685
    %v1772 = vunpack.c.h.b16 %v1685
    %v1773 = vunpack.c.l.b16 %v1686
    %v1774 = vunpack.c.h.b16 %v1686
    %v1775 = vunpack.c.l.b16 %v1687
    %v1776 = vunpack.c.h.b16 %v1687
    %v1777 = vunpack.c.l.b16 %v1688
    %v1778 = vunpack.c.h.b16 %v1688
    %v1779 = vunpack.c.l.b16 %v1689
    %v1780 = vunpack.c.h.b16 %v1689
    %v1781 = vunpack.c.l.b16 %v1690
    %v1782 = vunpack.c.h.b16 %v1690
    %v1783 = vunpack.c.l.b16 %v1691
    %v1784 = vunpack.c.h.b16 %v1691
    %v1785 = vunpack.c.l.b16 %v1692
    %v1786 = vunpack.c.h.b16 %v1692
    %v1787 = vunpack.c.l.b16 %v1693
    %v1788 = vunpack.c.h.b16 %v1693
    %v1789 = vunpack.c.l.b16 %v1694
    %v1790 = vunpack.c.h.b16 %v1694
    %v1791 = vpack.c.b16 %v1729, %v1727
    %v1792 = vpack.c.b16 %v1730, %v1728
    %v1793 = vpack.c.b16 %v1733, %v1731
    %v1794 = vpack.c.b16 %v1734, %v1732
    %v1795 = vpack.c.b16 %v1737, %v1735
    %v1796 = vpack.c.b16 %v1738, %v1736
    %v1797 = vpack.c.b16 %v1741, %v1739
    %v1798 = vpack.c.b16 %v1742, %v1740
    %v1799 = vpack.c.b16 %v1745, %v1743
    %v1800 = vpack.c.b16 %v1746, %v1744
    %v1801 = vpack.c.b16 %v1749, %v1747
    %v1802 = vpack.c.b16 %v1750, %v1748
    %v1803 = vpack.c.b16 %v1753, %v1751
    %v1804 = vpack.c.b16 %v1754, %v1752
    %v1805 = vpack.c.b16 %v1757, %v1755
    %v1806 = vpack.c.b16 %v1758, %v1756
    %v1807 = vpack.c.b16 %v1761, %v1759
    %v1808 = vpack.c.b16 %v1762, %v1760
    %v1809 = vpack.c.b16 %v1765, %v1763
    %v1810 = vpack.c.b16 %v1766, %v1764
    %v1811 = vpack.c.b16 %v1769, %v1767
    %v1812 = vpack.c.b16 %v1770, %v1768
    %v1813 = vpack.c.b16 %v1773, %v1771
    %v1814 = vpack.c.b16 %v1774, %v1772
    %v1815 = vpack.c.b16 %v1777, %v1775
    %v1816 = vpack.c.b16 %v1778, %v1776
    %v1817 = vpack.c.b16 %v1781, %v1779
    %v1818 = vpack.c.b16 %v1782, %v1780
    %v1819 = vpack.c.b16 %v1785, %v1783
    %v1820 = vpack.c.b16 %v1786, %v1784
    %v1821 = vpack.c.b16 %v1789, %v1787
    %v1822 = vpack.c.b16 %v1790, %v1788
    %1855 = vmatprep.subr.bf16.mxu0 %v1806
    %1856 = vmatpush1.bf16.msra.mxu0 %v1805
    %1857 = vmatprep.subr.bf16.mxu0 %v1804
    %1858 = vmatpush1.bf16.msra.mxu0 %v1803
    %1859 = vmatprep.subr.bf16.mxu0 %v1802
    %1860 = vmatpush1.bf16.msra.mxu0 %v1801
    %1861 = vmatprep.subr.bf16.mxu0 %v1800
    %1862 = vmatpush1.bf16.msra.mxu0 %v1799
    %1863 = vmatprep.subr.bf16.mxu0 %v1798
    %1864 = vmatpush1.bf16.msra.mxu0 %v1797
    %1865 = vmatprep.subr.bf16.mxu0 %v1796
    %1866 = vmatpush1.bf16.msra.mxu0 %v1795
    %1867 = vmatprep.subr.bf16.mxu0 %v1794
    %1868 = vmatpush1.bf16.msra.mxu0 %v1793
    %1869 = vmatprep.subr.bf16.mxu0 %v1792
    %1870 = vmatpush1.bf16.msra.mxu0 %v1791
    %1871 = vmatprep.subr.bf16.mxu0 %v1822
    %1872 = vmatpush2.bf16.msra.mxu0 %v1821
    %1873 = vmatprep.subr.bf16.mxu0 %v1820
    %1874 = vmatpush2.bf16.msra.mxu0 %v1819
    %1875 = vmatprep.subr.bf16.mxu0 %v1818
    %1876 = vmatpush2.bf16.msra.mxu0 %v1817
    %1877 = vmatprep.subr.bf16.mxu0 %v1816
    %1878 = vmatpush2.bf16.msra.mxu0 %v1815
    %1879 = vmatprep.subr.bf16.mxu0 %v1814
    %1880 = vmatpush2.bf16.msra.mxu0 %v1813
    %1881 = vmatprep.subr.bf16.mxu0 %v1812
    %1882 = vmatpush2.bf16.msra.mxu0 %v1811
    %1883 = vmatprep.subr.bf16.mxu0 %v1810
    %1884 = vmatpush2.bf16.msra.mxu0 %v1809
    %1885 = vmatprep.subr.bf16.mxu0 %v1808
    %1886 = vmatpush2.bf16.msra.mxu0 %v1807
    %1887 = vmatprep.mubr.bf16.mxu0 %v208
    %1888 = vmatmul.mubr.bf16.gmra.mxu0 %v207
    %v1889 = vpop.f32.mrf.mxu0
    %v1890 = vadd.f32 0.0, %v1889
    %v1891 = vpop.f32.mrf.mxu0
    %v1892 = vadd.f32 0.0, %v1891
    %v1893 = vpop.f32.mrf.mxu0
    %v1894 = vpop.f32.mrf.mxu0
    %1895 = vdwg.mxu0
    %v1896 = vxor.u32 %v1493, 2147483648
    %v1897 = vxor.u32 %v1495, 2147483648
    %v1898 = vmul.f32 %v1896, 1.442695
    %v1899 = vpow.pop %v1898
    %v1900 = vmul.f32 %v1897, 1.442695
    %v1901 = vpow.pop %v1900
    %v1902 = vadd.f32 %v1899, 1.0
    %v1903 = vadd.f32 %v1901, 1.0
    %v1904 = vrcp.pop %v1902
    %v1905 = vmul.f32 1.0, %v1904
    %v1906 = vrcp.pop %v1903
    %v1907 = vmul.f32 1.0, %v1906
    %v1908 = vxor.u32 %v1575, 2147483648
    %v1909 = vxor.u32 %v1577, 2147483648
    %v1910 = vmul.f32 %v1908, 1.442695
    %v1911 = vpow.pop %v1910
    %v1912 = vmul.f32 %v1909, 1.442695
    %v1913 = vpow.pop %v1912
    %v1914 = vadd.f32 %v1911, 1.0
    %v1915 = vadd.f32 %v1913, 1.0
    %v1916 = vrcp.pop %v1914
    %v1917 = vmul.f32 1.0, %v1916
    %v1918 = vrcp.pop %v1915
    %v1919 = vmul.f32 1.0, %v1918
    %v1920 = vsub.f32 %v1905, 1.0
    %v1921 = vsub.f32 %v1907, 1.0
    %v1922 = vmul.f32 %v1920, %v1890
    %v1923 = vmul.f32 %v1921, %v1892
    %v1924 = vadd.f32 %v1657, %v1922
    %v1925 = vadd.f32 %v1659, %v1923
    %v1926 = vtanh.pop %v1924
    %v1927 = vtanh.pop %v1925
    %v1928 = vsub.f32 1.0, %v1917
    %v1929 = vsub.f32 1.0, %v1919
    %v1930 = vmul.f32 %v1928, %v1926
    %v1931 = vmul.f32 %v1929, %v1927
    %v1932 = vmul.f32 %v1917, %v201
    %v1933 = vmul.f32 %v1919, %v202
    %v1934 = vadd.f32 %v1930, %v1932
    %v1935 = vadd.f32 %v1931, %v1933
    %v1936 = vpack.c.bf16 %v1934, %v1934
    %v1937 = vpack.c.bf16 %v1935, %v1935
    %v1938 = vld [vmem:[#allocation5] sm:$0x1]
    %v1940 = vsel %vm209, %v1938, 0
    %v1943 = vsel %vm213, %v1936, 0
    %v1946 = vsel %vm213, %v1937, 0
    %1948 = vmatprep.subr.bf16.mxu0 0
    %1949 = vmatpush1.bf16.msra.mxu0 0
    %1950 = vmatprep.subr.bf16.mxu0 0
    %1951 = vmatpush1.bf16.msra.mxu0 0
    %1952 = vmatprep.subr.bf16.mxu0 0
    %1953 = vmatpush1.bf16.msra.mxu0 0
    %1954 = vmatprep.subr.bf16.mxu0 0
    %1955 = vmatpush1.bf16.msra.mxu0 0
    %1956 = vmatprep.subr.bf16.mxu0 0
    %1957 = vmatpush1.bf16.msra.mxu0 0
    %1958 = vmatprep.subr.bf16.mxu0 0
    %1959 = vmatpush1.bf16.msra.mxu0 0
    %1960 = vmatprep.subr.bf16.mxu0 0
    %1961 = vmatpush1.bf16.msra.mxu0 0
    %1962 = vmatprep.subr.bf16.mxu0 %v1946
    %1963 = vmatpush1.bf16.msra.mxu0 %v1943
    %1964 = vmatprep.subr.bf16.mxu0 0
    %1965 = vmatpush2.bf16.msra.mxu0 0
    %1966 = vmatprep.subr.bf16.mxu0 0
    %1967 = vmatpush2.bf16.msra.mxu0 0
    %1968 = vmatprep.subr.bf16.mxu0 0
    %1969 = vmatpush2.bf16.msra.mxu0 0
    %1970 = vmatprep.subr.bf16.mxu0 0
    %1971 = vmatpush2.bf16.msra.mxu0 0
    %1972 = vmatprep.subr.bf16.mxu0 0
    %1973 = vmatpush2.bf16.msra.mxu0 0
    %1974 = vmatprep.subr.bf16.mxu0 0
    %1975 = vmatpush2.bf16.msra.mxu0 0
    %1976 = vmatprep.subr.bf16.mxu0 0
    %1977 = vmatpush2.bf16.msra.mxu0 0
    %1978 = vmatprep.subr.bf16.mxu0 0
    %1979 = vmatpush2.bf16.msra.mxu0 0
    %1980 = vmatprep.mubr.bf16.mxu0 0
    %1981 = vmatmul.mubr.bf16.gmra.mxu0 %v1940
    %v1982 = vpop.f32.mrf.mxu0
    %v1983 = vadd.f32 0.0, %v1982
    %v1984 = vpop.f32.mrf.mxu0
    %v1985 = vadd.f32 0.0, %v1984
    %v1986 = vpop.f32.mrf.mxu0
    %v1987 = vpop.f32.mrf.mxu0
    %1988 = vdwg.mxu0
    %v1989 = vpack.c.bf16 %v1983, %v1983
    %v1990 = vpack.c.bf16 %v1985, %v1985
    %v1991 = vld [vmem:[%s4] sm:$0xf]
    %vm1992 = vcmask 15360
    %v1994 = vsel %vm1992, %v1991, 0
    %vm1996 = vcmask 1040384
    %v1998 = vsel %vm1996, %v1989, 0
    %v2001 = vsel %vm1996, %v1990, 0
    %2003 = vmatprep.subr.bf16.mxu0 0
    %2004 = vmatpush1.bf16.msra.mxu0 0
    %2005 = vmatprep.subr.bf16.mxu0 0
    %2006 = vmatpush1.bf16.msra.mxu0 0
    %2007 = vmatprep.subr.bf16.mxu0 0
    %2008 = vmatpush1.bf16.msra.mxu0 0
    %2009 = vmatprep.subr.bf16.mxu0 0
    %2010 = vmatpush1.bf16.msra.mxu0 0
    %2011 = vmatprep.subr.bf16.mxu0 0
    %2012 = vmatpush1.bf16.msra.mxu0 0
    %2013 = vmatprep.subr.bf16.mxu0 0
    %2014 = vmatpush1.bf16.msra.mxu0 0
    %2015 = vmatprep.subr.bf16.mxu0 0
    %2016 = vmatpush1.bf16.msra.mxu0 0
    %2017 = vmatprep.subr.bf16.mxu0 %v2001
    %2018 = vmatpush1.bf16.msra.mxu0 %v1998
    %2019 = vmatprep.subr.bf16.mxu0 0
    %2020 = vmatpush2.bf16.msra.mxu0 0
    %2021 = vmatprep.subr.bf16.mxu0 0
    %2022 = vmatpush2.bf16.msra.mxu0 0
    %2023 = vmatprep.subr.bf16.mxu0 0
    %2024 = vmatpush2.bf16.msra.mxu0 0
    %2025 = vmatprep.subr.bf16.mxu0 0
    %2026 = vmatpush2.bf16.msra.mxu0 0
    %2027 = vmatprep.subr.bf16.mxu0 0
    %2028 = vmatpush2.bf16.msra.mxu0 0
    %2029 = vmatprep.subr.bf16.mxu0 0
    %2030 = vmatpush2.bf16.msra.mxu0 0
    %2031 = vmatprep.subr.bf16.mxu0 0
    %2032 = vmatpush2.bf16.msra.mxu0 0
    %2033 = vmatprep.subr.bf16.mxu0 0
    %2034 = vmatpush2.bf16.msra.mxu0 0
    %2035 = vmatprep.mubr.bf16.mxu0 0
    %2036 = vmatmul.mubr.bf16.gmra.mxu0 %v1994
    %v2037 = vpop.f32.mrf.mxu0
    %v2038 = vadd.f32 0.0, %v2037
    %v2039 = vpop.f32.mrf.mxu0
    %v2040 = vadd.f32 0.0, %v2039
    %v2041 = vpop.f32.mrf.mxu0
    %v2042 = vpop.f32.mrf.mxu0
    %2043 = vdwg.mxu0
    %v2044 = vpack.c.bf16 %v2038, %v2038
    %v2045 = vpack.c.bf16 %v2040, %v2040
    %v2046 = vld [vmem:[#allocation10] sm:$0xff]
    %v2047 = vld [vmem:[#allocation10 + $0x8] sm:$0xff]
    %v2048 = vld [vmem:[#allocation10 + $0x10] sm:$0xff]
    %v2049 = vld [vmem:[#allocation10 + $0x18] sm:$0xff]
    %v2050 = vld [vmem:[#allocation10 + $0x20] sm:$0xff]
    %v2051 = vld [vmem:[#allocation10 + $0x28] sm:$0xff]
    %v2052 = vld [vmem:[#allocation10 + $0x30] sm:$0xff]
    %v2053 = vld [vmem:[#allocation10 + $0x38] sm:$0xff]
    %v2054 = vld [vmem:[#allocation10 + $0x40] sm:$0xff]
    %v2055 = vld [vmem:[#allocation10 + $0x48] sm:$0xff]
    %v2056 = vld [vmem:[#allocation10 + $0x50] sm:$0xff]
    %v2057 = vld [vmem:[#allocation10 + $0x58] sm:$0xff]
    %v2058 = vld [vmem:[#allocation10 + $0x60] sm:$0xff]
    %v2059 = vld [vmem:[#allocation10 + $0x68] sm:$0xff]
    %v2060 = vld [vmem:[#allocation10 + $0x70] sm:$0xff]
    %v2061 = vld [vmem:[#allocation10 + $0x78] sm:$0xff]
    %v2062 = vld [vmem:[#allocation10 + $0x80] sm:$0xff]
    %v2063 = vld [vmem:[#allocation10 + $0x88] sm:$0xff]
    %v2064 = vld [vmem:[#allocation10 + $0x90] sm:$0xff]
    %v2065 = vld [vmem:[#allocation10 + $0x98] sm:$0xff]
    %v2066 = vld [vmem:[#allocation10 + $0xa0] sm:$0xff]
    %v2067 = vld [vmem:[#allocation10 + $0xa8] sm:$0xff]
    %v2068 = vld [vmem:[#allocation10 + $0xb0] sm:$0xff]
    %v2069 = vld [vmem:[#allocation10 + $0xb8] sm:$0xff]
    %v2070 = vld [vmem:[#allocation10 + $0xc0] sm:$0xff]
    %v2071 = vld [vmem:[#allocation10 + $0xc8] sm:$0xff]
    %v2072 = vld [vmem:[#allocation10 + $0xd0] sm:$0xff]
    %v2073 = vld [vmem:[#allocation10 + $0xd8] sm:$0xff]
    %v2074 = vld [vmem:[#allocation10 + $0xe0] sm:$0xff]
    %v2075 = vld [vmem:[#allocation10 + $0xe8] sm:$0xff]
    %v2076 = vld [vmem:[#allocation10 + $0xf0] sm:$0xff]
    %v2077 = vld [vmem:[#allocation10 + $0xf8] sm:$0xff]
    %v2078 = vld [vmem:[#allocation11] sm:$0xff]
    %v2079 = vld [vmem:[#allocation11 + $0x8] sm:$0xff]
    %v2080 = vld [vmem:[#allocation11 + $0x10] sm:$0xff]
    %v2081 = vld [vmem:[#allocation11 + $0x18] sm:$0xff]
    %v2082 = vld [vmem:[#allocation11 + $0x20] sm:$0xff]
    %v2083 = vld [vmem:[#allocation11 + $0x28] sm:$0xff]
    %v2084 = vld [vmem:[#allocation11 + $0x30] sm:$0xff]
    %v2085 = vld [vmem:[#allocation11 + $0x38] sm:$0xff]
    %v2086 = vld [vmem:[#allocation11 + $0x40] sm:$0xff]
    %v2087 = vld [vmem:[#allocation11 + $0x48] sm:$0xff]
    %v2088 = vld [vmem:[#allocation11 + $0x50] sm:$0xff]
    %v2089 = vld [vmem:[#allocation11 + $0x58] sm:$0xff]
    %v2090 = vld [vmem:[#allocation11 + $0x60] sm:$0xff]
    %v2091 = vld [vmem:[#allocation11 + $0x68] sm:$0xff]
    %v2092 = vld [vmem:[#allocation11 + $0x70] sm:$0xff]
    %v2093 = vld [vmem:[#allocation11 + $0x78] sm:$0xff]
    %v2094 = vld [vmem:[#allocation11 + $0x80] sm:$0xff]
    %v2095 = vld [vmem:[#allocation11 + $0x88] sm:$0xff]
    %v2096 = vld [vmem:[#allocation11 + $0x90] sm:$0xff]
    %v2097 = vld [vmem:[#allocation11 + $0x98] sm:$0xff]
    %v2098 = vld [vmem:[#allocation11 + $0xa0] sm:$0xff]
    %v2099 = vld [vmem:[#allocation11 + $0xa8] sm:$0xff]
    %v2100 = vld [vmem:[#allocation11 + $0xb0] sm:$0xff]
    %v2101 = vld [vmem:[#allocation11 + $0xb8] sm:$0xff]
    %v2102 = vld [vmem:[#allocation11 + $0xc0] sm:$0xff]
    %v2103 = vld [vmem:[#allocation11 + $0xc8] sm:$0xff]
    %v2104 = vld [vmem:[#allocation11 + $0xd0] sm:$0xff]
    %v2105 = vld [vmem:[#allocation11 + $0xd8] sm:$0xff]
    %v2106 = vld [vmem:[#allocation11 + $0xe0] sm:$0xff]
    %v2107 = vld [vmem:[#allocation11 + $0xe8] sm:$0xff]
    %v2108 = vld [vmem:[#allocation11 + $0xf0] sm:$0xff]
    %v2109 = vld [vmem:[#allocation11 + $0xf8] sm:$0xff]
    %v2110 = vld [vmem:[%s9] sm:$0x3]
    %v2112 = vlaneseq
    %v2113 = vshrl.u32 %v2112, 7
    %v2114 = vsub.s32 0, %v2113
    %v2115 = vrot.slane %v2110, %v2114
    %v2116 = vlaneseq
    %v2117 = vshrl.u32 %v2116, 7
    %v2118 = vsub.s32 1, %v2117
    %v2119 = vrot.slane %v2110, %v2118
    %v2154 = vunpack.c.l.b16 %v2078
    %v2155 = vunpack.c.h.b16 %v2078
    %v2156 = vunpack.c.l.b16 %v2079
    %v2157 = vunpack.c.h.b16 %v2079
    %v2158 = vunpack.c.l.b16 %v2080
    %v2159 = vunpack.c.h.b16 %v2080
    %v2160 = vunpack.c.l.b16 %v2081
    %v2161 = vunpack.c.h.b16 %v2081
    %v2162 = vunpack.c.l.b16 %v2082
    %v2163 = vunpack.c.h.b16 %v2082
    %v2164 = vunpack.c.l.b16 %v2083
    %v2165 = vunpack.c.h.b16 %v2083
    %v2166 = vunpack.c.l.b16 %v2084
    %v2167 = vunpack.c.h.b16 %v2084
    %v2168 = vunpack.c.l.b16 %v2085
    %v2169 = vunpack.c.h.b16 %v2085
    %v2170 = vunpack.c.l.b16 %v2086
    %v2171 = vunpack.c.h.b16 %v2086
    %v2172 = vunpack.c.l.b16 %v2087
    %v2173 = vunpack.c.h.b16 %v2087
    %v2174 = vunpack.c.l.b16 %v2088
    %v2175 = vunpack.c.h.b16 %v2088
    %v2176 = vunpack.c.l.b16 %v2089
    %v2177 = vunpack.c.h.b16 %v2089
    %v2178 = vunpack.c.l.b16 %v2090
    %v2179 = vunpack.c.h.b16 %v2090
    %v2180 = vunpack.c.l.b16 %v2091
    %v2181 = vunpack.c.h.b16 %v2091
    %v2182 = vunpack.c.l.b16 %v2092
    %v2183 = vunpack.c.h.b16 %v2092
    %v2184 = vunpack.c.l.b16 %v2093
    %v2185 = vunpack.c.h.b16 %v2093
    %v2186 = vunpack.c.l.b16 %v2094
    %v2187 = vunpack.c.h.b16 %v2094
    %v2188 = vunpack.c.l.b16 %v2095
    %v2189 = vunpack.c.h.b16 %v2095
    %v2190 = vunpack.c.l.b16 %v2096
    %v2191 = vunpack.c.h.b16 %v2096
    %v2192 = vunpack.c.l.b16 %v2097
    %v2193 = vunpack.c.h.b16 %v2097
    %v2194 = vunpack.c.l.b16 %v2098
    %v2195 = vunpack.c.h.b16 %v2098
    %v2196 = vunpack.c.l.b16 %v2099
    %v2197 = vunpack.c.h.b16 %v2099
    %v2198 = vunpack.c.l.b16 %v2100
    %v2199 = vunpack.c.h.b16 %v2100
    %v2200 = vunpack.c.l.b16 %v2101
    %v2201 = vunpack.c.h.b16 %v2101
    %v2202 = vunpack.c.l.b16 %v2102
    %v2203 = vunpack.c.h.b16 %v2102
    %v2204 = vunpack.c.l.b16 %v2103
    %v2205 = vunpack.c.h.b16 %v2103
    %v2206 = vunpack.c.l.b16 %v2104
    %v2207 = vunpack.c.h.b16 %v2104
    %v2208 = vunpack.c.l.b16 %v2105
    %v2209 = vunpack.c.h.b16 %v2105
    %v2210 = vunpack.c.l.b16 %v2106
    %v2211 = vunpack.c.h.b16 %v2106
    %v2212 = vunpack.c.l.b16 %v2107
    %v2213 = vunpack.c.h.b16 %v2107
    %v2214 = vunpack.c.l.b16 %v2108
    %v2215 = vunpack.c.h.b16 %v2108
    %v2216 = vunpack.c.l.b16 %v2109
    %v2217 = vunpack.c.h.b16 %v2109
    %v2218 = vpack.c.b16 %v2156, %v2154
    %v2219 = vpack.c.b16 %v2157, %v2155
    %v2220 = vpack.c.b16 %v2160, %v2158
    %v2221 = vpack.c.b16 %v2161, %v2159
    %v2222 = vpack.c.b16 %v2164, %v2162
    %v2223 = vpack.c.b16 %v2165, %v2163
    %v2224 = vpack.c.b16 %v2168, %v2166
    %v2225 = vpack.c.b16 %v2169, %v2167
    %v2226 = vpack.c.b16 %v2172, %v2170
    %v2227 = vpack.c.b16 %v2173, %v2171
    %v2228 = vpack.c.b16 %v2176, %v2174
    %v2229 = vpack.c.b16 %v2177, %v2175
    %v2230 = vpack.c.b16 %v2180, %v2178
    %v2231 = vpack.c.b16 %v2181, %v2179
    %v2232 = vpack.c.b16 %v2184, %v2182
    %v2233 = vpack.c.b16 %v2185, %v2183
    %v2234 = vpack.c.b16 %v2188, %v2186
    %v2235 = vpack.c.b16 %v2189, %v2187
    %v2236 = vpack.c.b16 %v2192, %v2190
    %v2237 = vpack.c.b16 %v2193, %v2191
    %v2238 = vpack.c.b16 %v2196, %v2194
    %v2239 = vpack.c.b16 %v2197, %v2195
    %v2240 = vpack.c.b16 %v2200, %v2198
    %v2241 = vpack.c.b16 %v2201, %v2199
    %v2242 = vpack.c.b16 %v2204, %v2202
    %v2243 = vpack.c.b16 %v2205, %v2203
    %v2244 = vpack.c.b16 %v2208, %v2206
    %v2245 = vpack.c.b16 %v2209, %v2207
    %v2246 = vpack.c.b16 %v2212, %v2210
    %v2247 = vpack.c.b16 %v2213, %v2211
    %v2248 = vpack.c.b16 %v2216, %v2214
    %v2249 = vpack.c.b16 %v2217, %v2215
    %2282 = vmatprep.subr.bf16.mxu0 %v2233
    %2283 = vmatpush1.bf16.msra.mxu0 %v2232
    %2284 = vmatprep.subr.bf16.mxu0 %v2231
    %2285 = vmatpush1.bf16.msra.mxu0 %v2230
    %2286 = vmatprep.subr.bf16.mxu0 %v2229
    %2287 = vmatpush1.bf16.msra.mxu0 %v2228
    %2288 = vmatprep.subr.bf16.mxu0 %v2227
    %2289 = vmatpush1.bf16.msra.mxu0 %v2226
    %2290 = vmatprep.subr.bf16.mxu0 %v2225
    %2291 = vmatpush1.bf16.msra.mxu0 %v2224
    %2292 = vmatprep.subr.bf16.mxu0 %v2223
    %2293 = vmatpush1.bf16.msra.mxu0 %v2222
    %2294 = vmatprep.subr.bf16.mxu0 %v2221
    %2295 = vmatpush1.bf16.msra.mxu0 %v2220
    %2296 = vmatprep.subr.bf16.mxu0 %v2219
    %2297 = vmatpush1.bf16.msra.mxu0 %v2218
    %2298 = vmatprep.subr.bf16.mxu0 %v2249
    %2299 = vmatpush2.bf16.msra.mxu0 %v2248
    %2300 = vmatprep.subr.bf16.mxu0 %v2247
    %2301 = vmatpush2.bf16.msra.mxu0 %v2246
    %2302 = vmatprep.subr.bf16.mxu0 %v2245
    %2303 = vmatpush2.bf16.msra.mxu0 %v2244
    %2304 = vmatprep.subr.bf16.mxu0 %v2243
    %2305 = vmatpush2.bf16.msra.mxu0 %v2242
    %2306 = vmatprep.subr.bf16.mxu0 %v2241
    %2307 = vmatpush2.bf16.msra.mxu0 %v2240
    %2308 = vmatprep.subr.bf16.mxu0 %v2239
    %2309 = vmatpush2.bf16.msra.mxu0 %v2238
    %2310 = vmatprep.subr.bf16.mxu0 %v2237
    %2311 = vmatpush2.bf16.msra.mxu0 %v2236
    %2312 = vmatprep.subr.bf16.mxu0 %v2235
    %2313 = vmatpush2.bf16.msra.mxu0 %v2234
    %2314 = vmatprep.mubr.bf16.mxu0 %v1937
    %2315 = vmatmul.mubr.bf16.gmra.mxu0 %v1936
    %v2316 = vpop.f32.mrf.mxu0
    %v2317 = vadd.f32 %v2115, %v2316
    %v2318 = vpop.f32.mrf.mxu0
    %v2319 = vadd.f32 %v2119, %v2318
    %v2320 = vpop.f32.mrf.mxu0
    %v2321 = vpop.f32.mrf.mxu0
    %2322 = vdwg.mxu0
    %v2355 = vunpack.c.l.b16 %v2046
    %v2356 = vunpack.c.h.b16 %v2046
    %v2357 = vunpack.c.l.b16 %v2047
    %v2358 = vunpack.c.h.b16 %v2047
    %v2359 = vunpack.c.l.b16 %v2048
    %v2360 = vunpack.c.h.b16 %v2048
    %v2361 = vunpack.c.l.b16 %v2049
    %v2362 = vunpack.c.h.b16 %v2049
    %v2363 = vunpack.c.l.b16 %v2050
    %v2364 = vunpack.c.h.b16 %v2050
    %v2365 = vunpack.c.l.b16 %v2051
    %v2366 = vunpack.c.h.b16 %v2051
    %v2367 = vunpack.c.l.b16 %v2052
    %v2368 = vunpack.c.h.b16 %v2052
    %v2369 = vunpack.c.l.b16 %v2053
    %v2370 = vunpack.c.h.b16 %v2053
    %v2371 = vunpack.c.l.b16 %v2054
    %v2372 = vunpack.c.h.b16 %v2054
    %v2373 = vunpack.c.l.b16 %v2055
    %v2374 = vunpack.c.h.b16 %v2055
    %v2375 = vunpack.c.l.b16 %v2056
    %v2376 = vunpack.c.h.b16 %v2056
    %v2377 = vunpack.c.l.b16 %v2057
    %v2378 = vunpack.c.h.b16 %v2057
    %v2379 = vunpack.c.l.b16 %v2058
    %v2380 = vunpack.c.h.b16 %v2058
    %v2381 = vunpack.c.l.b16 %v2059
    %v2382 = vunpack.c.h.b16 %v2059
    %v2383 = vunpack.c.l.b16 %v2060
    %v2384 = vunpack.c.h.b16 %v2060
    %v2385 = vunpack.c.l.b16 %v2061
    %v2386 = vunpack.c.h.b16 %v2061
    %v2387 = vunpack.c.l.b16 %v2062
    %v2388 = vunpack.c.h.b16 %v2062
    %v2389 = vunpack.c.l.b16 %v2063
    %v2390 = vunpack.c.h.b16 %v2063
    %v2391 = vunpack.c.l.b16 %v2064
    %v2392 = vunpack.c.h.b16 %v2064
    %v2393 = vunpack.c.l.b16 %v2065
    %v2394 = vunpack.c.h.b16 %v2065
    %v2395 = vunpack.c.l.b16 %v2066
    %v2396 = vunpack.c.h.b16 %v2066
    %v2397 = vunpack.c.l.b16 %v2067
    %v2398 = vunpack.c.h.b16 %v2067
    %v2399 = vunpack.c.l.b16 %v2068
    %v2400 = vunpack.c.h.b16 %v2068
    %v2401 = vunpack.c.l.b16 %v2069
    %v2402 = vunpack.c.h.b16 %v2069
    %v2403 = vunpack.c.l.b16 %v2070
    %v2404 = vunpack.c.h.b16 %v2070
    %v2405 = vunpack.c.l.b16 %v2071
    %v2406 = vunpack.c.h.b16 %v2071
    %v2407 = vunpack.c.l.b16 %v2072
    %v2408 = vunpack.c.h.b16 %v2072
    %v2409 = vunpack.c.l.b16 %v2073
    %v2410 = vunpack.c.h.b16 %v2073
    %v2411 = vunpack.c.l.b16 %v2074
    %v2412 = vunpack.c.h.b16 %v2074
    %v2413 = vunpack.c.l.b16 %v2075
    %v2414 = vunpack.c.h.b16 %v2075
    %v2415 = vunpack.c.l.b16 %v2076
    %v2416 = vunpack.c.h.b16 %v2076
    %v2417 = vunpack.c.l.b16 %v2077
    %v2418 = vunpack.c.h.b16 %v2077
    %v2419 = vpack.c.b16 %v2357, %v2355
    %v2420 = vpack.c.b16 %v2358, %v2356
    %v2421 = vpack.c.b16 %v2361, %v2359
    %v2422 = vpack.c.b16 %v2362, %v2360
    %v2423 = vpack.c.b16 %v2365, %v2363
    %v2424 = vpack.c.b16 %v2366, %v2364
    %v2425 = vpack.c.b16 %v2369, %v2367
    %v2426 = vpack.c.b16 %v2370, %v2368
    %v2427 = vpack.c.b16 %v2373, %v2371
    %v2428 = vpack.c.b16 %v2374, %v2372
    %v2429 = vpack.c.b16 %v2377, %v2375
    %v2430 = vpack.c.b16 %v2378, %v2376
    %v2431 = vpack.c.b16 %v2381, %v2379
    %v2432 = vpack.c.b16 %v2382, %v2380
    %v2433 = vpack.c.b16 %v2385, %v2383
    %v2434 = vpack.c.b16 %v2386, %v2384
    %v2435 = vpack.c.b16 %v2389, %v2387
    %v2436 = vpack.c.b16 %v2390, %v2388
    %v2437 = vpack.c.b16 %v2393, %v2391
    %v2438 = vpack.c.b16 %v2394, %v2392
    %v2439 = vpack.c.b16 %v2397, %v2395
    %v2440 = vpack.c.b16 %v2398, %v2396
    %v2441 = vpack.c.b16 %v2401, %v2399
    %v2442 = vpack.c.b16 %v2402, %v2400
    %v2443 = vpack.c.b16 %v2405, %v2403
    %v2444 = vpack.c.b16 %v2406, %v2404
    %v2445 = vpack.c.b16 %v2409, %v2407
    %v2446 = vpack.c.b16 %v2410, %v2408
    %v2447 = vpack.c.b16 %v2413, %v2411
    %v2448 = vpack.c.b16 %v2414, %v2412
    %v2449 = vpack.c.b16 %v2417, %v2415
    %v2450 = vpack.c.b16 %v2418, %v2416
    %2483 = vmatprep.subr.bf16.mxu0 %v2434
    %2484 = vmatpush1.bf16.msra.mxu0 %v2433
    %2485 = vmatprep.subr.bf16.mxu0 %v2432
    %2486 = vmatpush1.bf16.msra.mxu0 %v2431
    %2487 = vmatprep.subr.bf16.mxu0 %v2430
    %2488 = vmatpush1.bf16.msra.mxu0 %v2429
    %2489 = vmatprep.subr.bf16.mxu0 %v2428
    %2490 = vmatpush1.bf16.msra.mxu0 %v2427
    %2491 = vmatprep.subr.bf16.mxu0 %v2426
    %2492 = vmatpush1.bf16.msra.mxu0 %v2425
    %2493 = vmatprep.subr.bf16.mxu0 %v2424
    %2494 = vmatpush1.bf16.msra.mxu0 %v2423
    %2495 = vmatprep.subr.bf16.mxu0 %v2422
    %2496 = vmatpush1.bf16.msra.mxu0 %v2421
    %2497 = vmatprep.subr.bf16.mxu0 %v2420
    %2498 = vmatpush1.bf16.msra.mxu0 %v2419
    %2499 = vmatprep.subr.bf16.mxu0 %v2450
    %2500 = vmatpush2.bf16.msra.mxu0 %v2449
    %2501 = vmatprep.subr.bf16.mxu0 %v2448
    %2502 = vmatpush2.bf16.msra.mxu0 %v2447
    %2503 = vmatprep.subr.bf16.mxu0 %v2446
    %2504 = vmatpush2.bf16.msra.mxu0 %v2445
    %2505 = vmatprep.subr.bf16.mxu0 %v2444
    %2506 = vmatpush2.bf16.msra.mxu0 %v2443
    %2507 = vmatprep.subr.bf16.mxu0 %v2442
    %2508 = vmatpush2.bf16.msra.mxu0 %v2441
    %2509 = vmatprep.subr.bf16.mxu0 %v2440
    %2510 = vmatpush2.bf16.msra.mxu0 %v2439
    %2511 = vmatprep.subr.bf16.mxu0 %v2438
    %2512 = vmatpush2.bf16.msra.mxu0 %v2437
    %2513 = vmatprep.subr.bf16.mxu0 %v2436
    %2514 = vmatpush2.bf16.msra.mxu0 %v2435
    %2515 = vmatprep.mubr.bf16.mxu0 %v2045
    %2516 = vmatmul.mubr.bf16.gmra.mxu0 %v2044
    %v2517 = vpop.f32.mrf.mxu0
    %v2518 = vadd.f32 %v2317, %v2517
    %v2519 = vpop.f32.mrf.mxu0
    %v2520 = vadd.f32 %v2319, %v2519
    %v2521 = vpop.f32.mrf.mxu0
    %v2522 = vpop.f32.mrf.mxu0
    %2523 = vdwg.mxu0
    %v2524 = vxor.u32 %v2518, 2147483648
    %v2525 = vxor.u32 %v2520, 2147483648
    %v2526 = vmul.f32 %v2524, 1.442695
    %v2527 = vpow.pop %v2526
    %v2528 = vmul.f32 %v2525, 1.442695
    %v2529 = vpow.pop %v2528
    %v2530 = vadd.f32 %v2527, 1.0
    %v2531 = vadd.f32 %v2529, 1.0
    %v2532 = vrcp.pop %v2530
    %v2533 = vmul.f32 1.0, %v2532
    %v2534 = vrcp.pop %v2531
    %v2535 = vmul.f32 1.0, %v2534
    %v2536 = vpack.c.bf16 %v2533, %v2533
    %v2537 = vpack.c.bf16 %v2535, %v2535
    %v2538 = vld [vmem:[#allocation13] sm:$0xff]
    %v2539 = vld [vmem:[#allocation13 + $0x8] sm:$0xff]
    %v2540 = vld [vmem:[#allocation13 + $0x10] sm:$0xff]
    %v2541 = vld [vmem:[#allocation13 + $0x18] sm:$0xff]
    %v2542 = vld [vmem:[#allocation13 + $0x20] sm:$0xff]
    %v2543 = vld [vmem:[#allocation13 + $0x28] sm:$0xff]
    %v2544 = vld [vmem:[#allocation13 + $0x30] sm:$0xff]
    %v2545 = vld [vmem:[#allocation13 + $0x38] sm:$0xff]
    %v2546 = vld [vmem:[#allocation13 + $0x40] sm:$0xff]
    %v2547 = vld [vmem:[#allocation13 + $0x48] sm:$0xff]
    %v2548 = vld [vmem:[#allocation13 + $0x50] sm:$0xff]
    %v2549 = vld [vmem:[#allocation13 + $0x58] sm:$0xff]
    %v2550 = vld [vmem:[#allocation13 + $0x60] sm:$0xff]
    %v2551 = vld [vmem:[#allocation13 + $0x68] sm:$0xff]
    %v2552 = vld [vmem:[#allocation13 + $0x70] sm:$0xff]
    %v2553 = vld [vmem:[#allocation13 + $0x78] sm:$0xff]
    %v2554 = vld [vmem:[#allocation13 + $0x80] sm:$0xff]
    %v2555 = vld [vmem:[#allocation13 + $0x88] sm:$0xff]
    %v2556 = vld [vmem:[#allocation13 + $0x90] sm:$0xff]
    %v2557 = vld [vmem:[#allocation13 + $0x98] sm:$0xff]
    %v2558 = vld [vmem:[#allocation13 + $0xa0] sm:$0xff]
    %v2559 = vld [vmem:[#allocation13 + $0xa8] sm:$0xff]
    %v2560 = vld [vmem:[#allocation13 + $0xb0] sm:$0xff]
    %v2561 = vld [vmem:[#allocation13 + $0xb8] sm:$0xff]
    %v2562 = vld [vmem:[#allocation13 + $0xc0] sm:$0xff]
    %v2563 = vld [vmem:[#allocation13 + $0xc8] sm:$0xff]
    %v2564 = vld [vmem:[#allocation13 + $0xd0] sm:$0xff]
    %v2565 = vld [vmem:[#allocation13 + $0xd8] sm:$0xff]
    %v2566 = vld [vmem:[#allocation13 + $0xe0] sm:$0xff]
    %v2567 = vld [vmem:[#allocation13 + $0xe8] sm:$0xff]
    %v2568 = vld [vmem:[#allocation13 + $0xf0] sm:$0xff]
    %v2569 = vld [vmem:[#allocation13 + $0xf8] sm:$0xff]
    %v2570 = vld [vmem:[%s11] sm:$0x3]
    %v2572 = vlaneseq
    %v2573 = vshrl.u32 %v2572, 7
    %v2574 = vsub.s32 0, %v2573
    %v2575 = vrot.slane %v2570, %v2574
    %v2576 = vlaneseq
    %v2577 = vshrl.u32 %v2576, 7
    %v2578 = vsub.s32 1, %v2577
    %v2579 = vrot.slane %v2570, %v2578
    %v2614 = vunpack.c.l.b16 %v2538
    %v2615 = vunpack.c.h.b16 %v2538
    %v2616 = vunpack.c.l.b16 %v2539
    %v2617 = vunpack.c.h.b16 %v2539
    %v2618 = vunpack.c.l.b16 %v2540
    %v2619 = vunpack.c.h.b16 %v2540
    %v2620 = vunpack.c.l.b16 %v2541
    %v2621 = vunpack.c.h.b16 %v2541
    %v2622 = vunpack.c.l.b16 %v2542
    %v2623 = vunpack.c.h.b16 %v2542
    %v2624 = vunpack.c.l.b16 %v2543
    %v2625 = vunpack.c.h.b16 %v2543
    %v2626 = vunpack.c.l.b16 %v2544
    %v2627 = vunpack.c.h.b16 %v2544
    %v2628 = vunpack.c.l.b16 %v2545
    %v2629 = vunpack.c.h.b16 %v2545
    %v2630 = vunpack.c.l.b16 %v2546
    %v2631 = vunpack.c.h.b16 %v2546
    %v2632 = vunpack.c.l.b16 %v2547
    %v2633 = vunpack.c.h.b16 %v2547
    %v2634 = vunpack.c.l.b16 %v2548
    %v2635 = vunpack.c.h.b16 %v2548
    %v2636 = vunpack.c.l.b16 %v2549
    %v2637 = vunpack.c.h.b16 %v2549
    %v2638 = vunpack.c.l.b16 %v2550
    %v2639 = vunpack.c.h.b16 %v2550
    %v2640 = vunpack.c.l.b16 %v2551
    %v2641 = vunpack.c.h.b16 %v2551
    %v2642 = vunpack.c.l.b16 %v2552
    %v2643 = vunpack.c.h.b16 %v2552
    %v2644 = vunpack.c.l.b16 %v2553
    %v2645 = vunpack.c.h.b16 %v2553
    %v2646 = vunpack.c.l.b16 %v2554
    %v2647 = vunpack.c.h.b16 %v2554
    %v2648 = vunpack.c.l.b16 %v2555
    %v2649 = vunpack.c.h.b16 %v2555
    %v2650 = vunpack.c.l.b16 %v2556
    %v2651 = vunpack.c.h.b16 %v2556
    %v2652 = vunpack.c.l.b16 %v2557
    %v2653 = vunpack.c.h.b16 %v2557
    %v2654 = vunpack.c.l.b16 %v2558
    %v2655 = vunpack.c.h.b16 %v2558
    %v2656 = vunpack.c.l.b16 %v2559
    %v2657 = vunpack.c.h.b16 %v2559
    %v2658 = vunpack.c.l.b16 %v2560
    %v2659 = vunpack.c.h.b16 %v2560
    %v2660 = vunpack.c.l.b16 %v2561
    %v2661 = vunpack.c.h.b16 %v2561
    %v2662 = vunpack.c.l.b16 %v2562
    %v2663 = vunpack.c.h.b16 %v2562
    %v2664 = vunpack.c.l.b16 %v2563
    %v2665 = vunpack.c.h.b16 %v2563
    %v2666 = vunpack.c.l.b16 %v2564
    %v2667 = vunpack.c.h.b16 %v2564
    %v2668 = vunpack.c.l.b16 %v2565
    %v2669 = vunpack.c.h.b16 %v2565
    %v2670 = vunpack.c.l.b16 %v2566
    %v2671 = vunpack.c.h.b16 %v2566
    %v2672 = vunpack.c.l.b16 %v2567
    %v2673 = vunpack.c.h.b16 %v2567
    %v2674 = vunpack.c.l.b16 %v2568
    %v2675 = vunpack.c.h.b16 %v2568
    %v2676 = vunpack.c.l.b16 %v2569
    %v2677 = vunpack.c.h.b16 %v2569
    %v2678 = vpack.c.b16 %v2616, %v2614
    %v2679 = vpack.c.b16 %v2617, %v2615
    %v2680 = vpack.c.b16 %v2620, %v2618
    %v2681 = vpack.c.b16 %v2621, %v2619
    %v2682 = vpack.c.b16 %v2624, %v2622
    %v2683 = vpack.c.b16 %v2625, %v2623
    %v2684 = vpack.c.b16 %v2628, %v2626
    %v2685 = vpack.c.b16 %v2629, %v2627
    %v2686 = vpack.c.b16 %v2632, %v2630
    %v2687 = vpack.c.b16 %v2633, %v2631
    %v2688 = vpack.c.b16 %v2636, %v2634
    %v2689 = vpack.c.b16 %v2637, %v2635
    %v2690 = vpack.c.b16 %v2640, %v2638
    %v2691 = vpack.c.b16 %v2641, %v2639
    %v2692 = vpack.c.b16 %v2644, %v2642
    %v2693 = vpack.c.b16 %v2645, %v2643
    %v2694 = vpack.c.b16 %v2648, %v2646
    %v2695 = vpack.c.b16 %v2649, %v2647
    %v2696 = vpack.c.b16 %v2652, %v2650
    %v2697 = vpack.c.b16 %v2653, %v2651
    %v2698 = vpack.c.b16 %v2656, %v2654
    %v2699 = vpack.c.b16 %v2657, %v2655
    %v2700 = vpack.c.b16 %v2660, %v2658
    %v2701 = vpack.c.b16 %v2661, %v2659
    %v2702 = vpack.c.b16 %v2664, %v2662
    %v2703 = vpack.c.b16 %v2665, %v2663
    %v2704 = vpack.c.b16 %v2668, %v2666
    %v2705 = vpack.c.b16 %v2669, %v2667
    %v2706 = vpack.c.b16 %v2672, %v2670
    %v2707 = vpack.c.b16 %v2673, %v2671
    %v2708 = vpack.c.b16 %v2676, %v2674
    %v2709 = vpack.c.b16 %v2677, %v2675
    %2742 = vmatprep.subr.bf16.mxu0 %v2693
    %2743 = vmatpush1.bf16.msra.mxu0 %v2692
    %2744 = vmatprep.subr.bf16.mxu0 %v2691
    %2745 = vmatpush1.bf16.msra.mxu0 %v2690
    %2746 = vmatprep.subr.bf16.mxu0 %v2689
    %2747 = vmatpush1.bf16.msra.mxu0 %v2688
    %2748 = vmatprep.subr.bf16.mxu0 %v2687
    %2749 = vmatpush1.bf16.msra.mxu0 %v2686
    %2750 = vmatprep.subr.bf16.mxu0 %v2685
    %2751 = vmatpush1.bf16.msra.mxu0 %v2684
    %2752 = vmatprep.subr.bf16.mxu0 %v2683
    %2753 = vmatpush1.bf16.msra.mxu0 %v2682
    %2754 = vmatprep.subr.bf16.mxu0 %v2681
    %2755 = vmatpush1.bf16.msra.mxu0 %v2680
    %2756 = vmatprep.subr.bf16.mxu0 %v2679
    %2757 = vmatpush1.bf16.msra.mxu0 %v2678
    %2758 = vmatprep.subr.bf16.mxu0 %v2709
    %2759 = vmatpush2.bf16.msra.mxu0 %v2708
    %2760 = vmatprep.subr.bf16.mxu0 %v2707
    %2761 = vmatpush2.bf16.msra.mxu0 %v2706
    %2762 = vmatprep.subr.bf16.mxu0 %v2705
    %2763 = vmatpush2.bf16.msra.mxu0 %v2704
    %2764 = vmatprep.subr.bf16.mxu0 %v2703
    %2765 = vmatpush2.bf16.msra.mxu0 %v2702
    %2766 = vmatprep.subr.bf16.mxu0 %v2701
    %2767 = vmatpush2.bf16.msra.mxu0 %v2700
    %2768 = vmatprep.subr.bf16.mxu0 %v2699
    %2769 = vmatpush2.bf16.msra.mxu0 %v2698
    %2770 = vmatprep.subr.bf16.mxu0 %v2697
    %2771 = vmatpush2.bf16.msra.mxu0 %v2696
    %2772 = vmatprep.subr.bf16.mxu0 %v2695
    %2773 = vmatpush2.bf16.msra.mxu0 %v2694
    %2774 = vmatprep.mubr.bf16.mxu0 %v2537
    %2775 = vmatmul.mubr.bf16.gmra.mxu0 %v2536
    %v2776 = vpop.f32.mrf.mxu0
    %v2777 = vadd.f32 %v2575, %v2776
    %v2778 = vpop.f32.mrf.mxu0
    %v2779 = vadd.f32 %v2579, %v2778
    %v2780 = vpop.f32.mrf.mxu0
    %v2781 = vpop.f32.mrf.mxu0
    %2782 = vdwg.mxu0
    %v2783 = vmul.f32 %v2777, %v1934
    %v2784 = vmul.f32 %v2779, %v1935
    %v2785 = vld [vmem:[%s3] sm:$0x1]
    %v2786 = vpack.c.bf16 %v2783, %v2783
    %v2787 = vpack.c.bf16 %v2784, %v2784
    %v2789 = vsel %vm209, %v2785, 0
    %v2792 = vsel %vm213, %v2786, 0
    %v2795 = vsel %vm213, %v2787, 0
    %2797 = vmatprep.subr.bf16.mxu0 0
    %2798 = vmatpush1.bf16.msra.mxu0 0
    %2799 = vmatprep.subr.bf16.mxu0 0
    %2800 = vmatpush1.bf16.msra.mxu0 0
    %2801 = vmatprep.subr.bf16.mxu0 0
    %2802 = vmatpush1.bf16.msra.mxu0 0
    %2803 = vmatprep.subr.bf16.mxu0 0
    %2804 = vmatpush1.bf16.msra.mxu0 0
    %2805 = vmatprep.subr.bf16.mxu0 0
    %2806 = vmatpush1.bf16.msra.mxu0 0
    %2807 = vmatprep.subr.bf16.mxu0 0
    %2808 = vmatpush1.bf16.msra.mxu0 0
    %2809 = vmatprep.subr.bf16.mxu0 0
    %2810 = vmatpush1.bf16.msra.mxu0 0
    %2811 = vmatprep.subr.bf16.mxu0 %v2795
    %2812 = vmatpush1.bf16.msra.mxu0 %v2792
    %2813 = vmatprep.subr.bf16.mxu0 0
    %2814 = vmatpush2.bf16.msra.mxu0 0
    %2815 = vmatprep.subr.bf16.mxu0 0
    %2816 = vmatpush2.bf16.msra.mxu0 0
    %2817 = vmatprep.subr.bf16.mxu0 0
    %2818 = vmatpush2.bf16.msra.mxu0 0
    %2819 = vmatprep.subr.bf16.mxu0 0
    %2820 = vmatpush2.bf16.msra.mxu0 0
    %2821 = vmatprep.subr.bf16.mxu0 0
    %2822 = vmatpush2.bf16.msra.mxu0 0
    %2823 = vmatprep.subr.bf16.mxu0 0
    %2824 = vmatpush2.bf16.msra.mxu0 0
    %2825 = vmatprep.subr.bf16.mxu0 0
    %2826 = vmatpush2.bf16.msra.mxu0 0
    %2827 = vmatprep.subr.bf16.mxu0 0
    %2828 = vmatpush2.bf16.msra.mxu0 0
    %2829 = vmatprep.mubr.bf16.mxu0 0
    %2830 = vmatmul.mubr.bf16.gmra.mxu0 %v2789
    %v2831 = vpop.f32.mrf.mxu0
    %v2832 = vadd.f32 0.0, %v2831
    %v2833 = vpop.f32.mrf.mxu0
    %v2834 = vadd.f32 0.0, %v2833
    %v2835 = vpop.f32.mrf.mxu0
    %v2836 = vpop.f32.mrf.mxu0
    %2837 = vdwg.mxu0
    %v2838 = vld [vmem:[#allocation14] sm:$0xff]
    %v2839 = vld [vmem:[#allocation14 + $0x8] sm:$0xff]
    %v2840 = vld [vmem:[#allocation14 + $0x10] sm:$0xff]
    %v2841 = vld [vmem:[#allocation14 + $0x18] sm:$0xff]
    %v2842 = vld [vmem:[#allocation14 + $0x20] sm:$0xff]
    %v2843 = vld [vmem:[#allocation14 + $0x28] sm:$0xff]
    %v2844 = vld [vmem:[#allocation14 + $0x30] sm:$0xff]
    %v2845 = vld [vmem:[#allocation14 + $0x38] sm:$0xff]
    %v2846 = vld [vmem:[#allocation14 + $0x40] sm:$0xff]
    %v2847 = vld [vmem:[#allocation14 + $0x48] sm:$0xff]
    %v2848 = vld [vmem:[#allocation14 + $0x50] sm:$0xff]
    %v2849 = vld [vmem:[#allocation14 + $0x58] sm:$0xff]
    %v2850 = vld [vmem:[#allocation14 + $0x60] sm:$0xff]
    %v2851 = vld [vmem:[#allocation14 + $0x68] sm:$0xff]
    %v2852 = vld [vmem:[#allocation14 + $0x70] sm:$0xff]
    %v2853 = vld [vmem:[#allocation14 + $0x78] sm:$0xff]
    %v2854 = vld [vmem:[#allocation14 + $0x80] sm:$0xff]
    %v2855 = vld [vmem:[#allocation14 + $0x88] sm:$0xff]
    %v2856 = vld [vmem:[#allocation14 + $0x90] sm:$0xff]
    %v2857 = vld [vmem:[#allocation14 + $0x98] sm:$0xff]
    %v2858 = vld [vmem:[#allocation14 + $0xa0] sm:$0xff]
    %v2859 = vld [vmem:[#allocation14 + $0xa8] sm:$0xff]
    %v2860 = vld [vmem:[#allocation14 + $0xb0] sm:$0xff]
    %v2861 = vld [vmem:[#allocation14 + $0xb8] sm:$0xff]
    %v2862 = vld [vmem:[#allocation14 + $0xc0] sm:$0xff]
    %v2863 = vld [vmem:[#allocation14 + $0xc8] sm:$0xff]
    %v2864 = vld [vmem:[#allocation14 + $0xd0] sm:$0xff]
    %v2865 = vld [vmem:[#allocation14 + $0xd8] sm:$0xff]
    %v2866 = vld [vmem:[#allocation14 + $0xe0] sm:$0xff]
    %v2867 = vld [vmem:[#allocation14 + $0xe8] sm:$0xff]
    %v2868 = vld [vmem:[#allocation14 + $0xf0] sm:$0xff]
    %v2869 = vld [vmem:[#allocation14 + $0xf8] sm:$0xff]
    %v2870 = vpack.c.bf16 %v2832, %v2832
    %v2871 = vpack.c.bf16 %v2834, %v2834
    %v2872 = vld [vmem:[#allocation16] sm:$0xff]
    %v2873 = vld [vmem:[#allocation16 + $0x8] sm:$0xff]
    %v2874 = vld [vmem:[#allocation16 + $0x10] sm:$0xff]
    %v2875 = vld [vmem:[#allocation16 + $0x18] sm:$0xff]
    %v2876 = vld [vmem:[#allocation16 + $0x20] sm:$0xff]
    %v2877 = vld [vmem:[#allocation16 + $0x28] sm:$0xff]
    %v2878 = vld [vmem:[#allocation16 + $0x30] sm:$0xff]
    %v2879 = vld [vmem:[#allocation16 + $0x38] sm:$0xff]
    %v2880 = vld [vmem:[#allocation16 + $0x40] sm:$0xff]
    %v2881 = vld [vmem:[#allocation16 + $0x48] sm:$0xff]
    %v2882 = vld [vmem:[#allocation16 + $0x50] sm:$0xff]
    %v2883 = vld [vmem:[#allocation16 + $0x58] sm:$0xff]
    %v2884 = vld [vmem:[#allocation16 + $0x60] sm:$0xff]
    %v2885 = vld [vmem:[#allocation16 + $0x68] sm:$0xff]
    %v2886 = vld [vmem:[#allocation16 + $0x70] sm:$0xff]
    %v2887 = vld [vmem:[#allocation16 + $0x78] sm:$0xff]
    %v2888 = vld [vmem:[#allocation16 + $0x80] sm:$0xff]
    %v2889 = vld [vmem:[#allocation16 + $0x88] sm:$0xff]
    %v2890 = vld [vmem:[#allocation16 + $0x90] sm:$0xff]
    %v2891 = vld [vmem:[#allocation16 + $0x98] sm:$0xff]
    %v2892 = vld [vmem:[#allocation16 + $0xa0] sm:$0xff]
    %v2893 = vld [vmem:[#allocation16 + $0xa8] sm:$0xff]
    %v2894 = vld [vmem:[#allocation16 + $0xb0] sm:$0xff]
    %v2895 = vld [vmem:[#allocation16 + $0xb8] sm:$0xff]
    %v2896 = vld [vmem:[#allocation16 + $0xc0] sm:$0xff]
    %v2897 = vld [vmem:[#allocation16 + $0xc8] sm:$0xff]
    %v2898 = vld [vmem:[#allocation16 + $0xd0] sm:$0xff]
    %v2899 = vld [vmem:[#allocation16 + $0xd8] sm:$0xff]
    %v2900 = vld [vmem:[#allocation16 + $0xe0] sm:$0xff]
    %v2901 = vld [vmem:[#allocation16 + $0xe8] sm:$0xff]
    %v2902 = vld [vmem:[#allocation16 + $0xf0] sm:$0xff]
    %v2903 = vld [vmem:[#allocation16 + $0xf8] sm:$0xff]
    %v2936 = vunpack.c.l.b16 %v2872
    %v2937 = vunpack.c.h.b16 %v2872
    %v2938 = vunpack.c.l.b16 %v2873
    %v2939 = vunpack.c.h.b16 %v2873
    %v2940 = vunpack.c.l.b16 %v2874
    %v2941 = vunpack.c.h.b16 %v2874
    %v2942 = vunpack.c.l.b16 %v2875
    %v2943 = vunpack.c.h.b16 %v2875
    %v2944 = vunpack.c.l.b16 %v2876
    %v2945 = vunpack.c.h.b16 %v2876
    %v2946 = vunpack.c.l.b16 %v2877
    %v2947 = vunpack.c.h.b16 %v2877
    %v2948 = vunpack.c.l.b16 %v2878
    %v2949 = vunpack.c.h.b16 %v2878
    %v2950 = vunpack.c.l.b16 %v2879
    %v2951 = vunpack.c.h.b16 %v2879
    %v2952 = vunpack.c.l.b16 %v2880
    %v2953 = vunpack.c.h.b16 %v2880
    %v2954 = vunpack.c.l.b16 %v2881
    %v2955 = vunpack.c.h.b16 %v2881
    %v2956 = vunpack.c.l.b16 %v2882
    %v2957 = vunpack.c.h.b16 %v2882
    %v2958 = vunpack.c.l.b16 %v2883
    %v2959 = vunpack.c.h.b16 %v2883
    %v2960 = vunpack.c.l.b16 %v2884
    %v2961 = vunpack.c.h.b16 %v2884
    %v2962 = vunpack.c.l.b16 %v2885
    %v2963 = vunpack.c.h.b16 %v2885
    %v2964 = vunpack.c.l.b16 %v2886
    %v2965 = vunpack.c.h.b16 %v2886
    %v2966 = vunpack.c.l.b16 %v2887
    %v2967 = vunpack.c.h.b16 %v2887
    %v2968 = vunpack.c.l.b16 %v2888
    %v2969 = vunpack.c.h.b16 %v2888
    %v2970 = vunpack.c.l.b16 %v2889
    %v2971 = vunpack.c.h.b16 %v2889
    %v2972 = vunpack.c.l.b16 %v2890
    %v2973 = vunpack.c.h.b16 %v2890
    %v2974 = vunpack.c.l.b16 %v2891
    %v2975 = vunpack.c.h.b16 %v2891
    %v2976 = vunpack.c.l.b16 %v2892
    %v2977 = vunpack.c.h.b16 %v2892
    %v2978 = vunpack.c.l.b16 %v2893
    %v2979 = vunpack.c.h.b16 %v2893
    %v2980 = vunpack.c.l.b16 %v2894
    %v2981 = vunpack.c.h.b16 %v2894
    %v2982 = vunpack.c.l.b16 %v2895
    %v2983 = vunpack.c.h.b16 %v2895
    %v2984 = vunpack.c.l.b16 %v2896
    %v2985 = vunpack.c.h.b16 %v2896
    %v2986 = vunpack.c.l.b16 %v2897
    %v2987 = vunpack.c.h.b16 %v2897
    %v2988 = vunpack.c.l.b16 %v2898
    %v2989 = vunpack.c.h.b16 %v2898
    %v2990 = vunpack.c.l.b16 %v2899
    %v2991 = vunpack.c.h.b16 %v2899
    %v2992 = vunpack.c.l.b16 %v2900
    %v2993 = vunpack.c.h.b16 %v2900
    %v2994 = vunpack.c.l.b16 %v2901
    %v2995 = vunpack.c.h.b16 %v2901
    %v2996 = vunpack.c.l.b16 %v2902
    %v2997 = vunpack.c.h.b16 %v2902
    %v2998 = vunpack.c.l.b16 %v2903
    %v2999 = vunpack.c.h.b16 %v2903
    %v3000 = vpack.c.b16 %v2938, %v2936
    %v3001 = vpack.c.b16 %v2939, %v2937
    %v3002 = vpack.c.b16 %v2942, %v2940
    %v3003 = vpack.c.b16 %v2943, %v2941
    %v3004 = vpack.c.b16 %v2946, %v2944
    %v3005 = vpack.c.b16 %v2947, %v2945
    %v3006 = vpack.c.b16 %v2950, %v2948
    %v3007 = vpack.c.b16 %v2951, %v2949
    %v3008 = vpack.c.b16 %v2954, %v2952
    %v3009 = vpack.c.b16 %v2955, %v2953
    %v3010 = vpack.c.b16 %v2958, %v2956
    %v3011 = vpack.c.b16 %v2959, %v2957
    %v3012 = vpack.c.b16 %v2962, %v2960
    %v3013 = vpack.c.b16 %v2963, %v2961
    %v3014 = vpack.c.b16 %v2966, %v2964
    %v3015 = vpack.c.b16 %v2967, %v2965
    %v3016 = vpack.c.b16 %v2970, %v2968
    %v3017 = vpack.c.b16 %v2971, %v2969
    %v3018 = vpack.c.b16 %v2974, %v2972
    %v3019 = vpack.c.b16 %v2975, %v2973
    %v3020 = vpack.c.b16 %v2978, %v2976
    %v3021 = vpack.c.b16 %v2979, %v2977
    %v3022 = vpack.c.b16 %v2982, %v2980
    %v3023 = vpack.c.b16 %v2983, %v2981
    %v3024 = vpack.c.b16 %v2986, %v2984
    %v3025 = vpack.c.b16 %v2987, %v2985
    %v3026 = vpack.c.b16 %v2990, %v2988
    %v3027 = vpack.c.b16 %v2991, %v2989
    %v3028 = vpack.c.b16 %v2994, %v2992
    %v3029 = vpack.c.b16 %v2995, %v2993
    %v3030 = vpack.c.b16 %v2998, %v2996
    %v3031 = vpack.c.b16 %v2999, %v2997
    %3064 = vmatprep.subr.bf16.mxu0 %v3015
    %3065 = vmatpush1.bf16.msra.mxu0 %v3014
    %3066 = vmatprep.subr.bf16.mxu0 %v3013
    %3067 = vmatpush1.bf16.msra.mxu0 %v3012
    %3068 = vmatprep.subr.bf16.mxu0 %v3011
    %3069 = vmatpush1.bf16.msra.mxu0 %v3010
    %3070 = vmatprep.subr.bf16.mxu0 %v3009
    %3071 = vmatpush1.bf16.msra.mxu0 %v3008
    %3072 = vmatprep.subr.bf16.mxu0 %v3007
    %3073 = vmatpush1.bf16.msra.mxu0 %v3006
    %3074 = vmatprep.subr.bf16.mxu0 %v3005
    %3075 = vmatpush1.bf16.msra.mxu0 %v3004
    %3076 = vmatprep.subr.bf16.mxu0 %v3003
    %3077 = vmatpush1.bf16.msra.mxu0 %v3002
    %3078 = vmatprep.subr.bf16.mxu0 %v3001
    %3079 = vmatpush1.bf16.msra.mxu0 %v3000
    %3080 = vmatprep.subr.bf16.mxu0 %v3031
    %3081 = vmatpush2.bf16.msra.mxu0 %v3030
    %3082 = vmatprep.subr.bf16.mxu0 %v3029
    %3083 = vmatpush2.bf16.msra.mxu0 %v3028
    %3084 = vmatprep.subr.bf16.mxu0 %v3027
    %3085 = vmatpush2.bf16.msra.mxu0 %v3026
    %3086 = vmatprep.subr.bf16.mxu0 %v3025
    %3087 = vmatpush2.bf16.msra.mxu0 %v3024
    %3088 = vmatprep.subr.bf16.mxu0 %v3023
    %3089 = vmatpush2.bf16.msra.mxu0 %v3022
    %3090 = vmatprep.subr.bf16.mxu0 %v3021
    %3091 = vmatpush2.bf16.msra.mxu0 %v3020
    %3092 = vmatprep.subr.bf16.mxu0 %v3019
    %3093 = vmatpush2.bf16.msra.mxu0 %v3018
    %3094 = vmatprep.subr.bf16.mxu0 %v3017
    %3095 = vmatpush2.bf16.msra.mxu0 %v3016
    %3096 = vmatprep.mubr.bf16.mxu0 %v2871
    %3097 = vmatmul.mubr.bf16.gmra.mxu0 %v2870
    %v3098 = vpop.f32.mrf.mxu0
    %v3099 = vadd.f32 0.0, %v3098
    %v3100 = vpop.f32.mrf.mxu0
    %v3101 = vadd.f32 0.0, %v3100
    %v3102 = vpop.f32.mrf.mxu0
    %v3103 = vpop.f32.mrf.mxu0
    %3104 = vdwg.mxu0
    %v3137 = vunpack.c.l.b16 %v2838
    %v3138 = vunpack.c.h.b16 %v2838
    %v3139 = vunpack.c.l.b16 %v2839
    %v3140 = vunpack.c.h.b16 %v2839
    %v3141 = vunpack.c.l.b16 %v2840
    %v3142 = vunpack.c.h.b16 %v2840
    %v3143 = vunpack.c.l.b16 %v2841
    %v3144 = vunpack.c.h.b16 %v2841
    %v3145 = vunpack.c.l.b16 %v2842
    %v3146 = vunpack.c.h.b16 %v2842
    %v3147 = vunpack.c.l.b16 %v2843
    %v3148 = vunpack.c.h.b16 %v2843
    %v3149 = vunpack.c.l.b16 %v2844
    %v3150 = vunpack.c.h.b16 %v2844
    %v3151 = vunpack.c.l.b16 %v2845
    %v3152 = vunpack.c.h.b16 %v2845
    %v3153 = vunpack.c.l.b16 %v2846
    %v3154 = vunpack.c.h.b16 %v2846
    %v3155 = vunpack.c.l.b16 %v2847
    %v3156 = vunpack.c.h.b16 %v2847
    %v3157 = vunpack.c.l.b16 %v2848
    %v3158 = vunpack.c.h.b16 %v2848
    %v3159 = vunpack.c.l.b16 %v2849
    %v3160 = vunpack.c.h.b16 %v2849
    %v3161 = vunpack.c.l.b16 %v2850
    %v3162 = vunpack.c.h.b16 %v2850
    %v3163 = vunpack.c.l.b16 %v2851
    %v3164 = vunpack.c.h.b16 %v2851
    %v3165 = vunpack.c.l.b16 %v2852
    %v3166 = vunpack.c.h.b16 %v2852
    %v3167 = vunpack.c.l.b16 %v2853
    %v3168 = vunpack.c.h.b16 %v2853
    %v3169 = vunpack.c.l.b16 %v2854
    %v3170 = vunpack.c.h.b16 %v2854
    %v3171 = vunpack.c.l.b16 %v2855
    %v3172 = vunpack.c.h.b16 %v2855
    %v3173 = vunpack.c.l.b16 %v2856
    %v3174 = vunpack.c.h.b16 %v2856
    %v3175 = vunpack.c.l.b16 %v2857
    %v3176 = vunpack.c.h.b16 %v2857
    %v3177 = vunpack.c.l.b16 %v2858
    %v3178 = vunpack.c.h.b16 %v2858
    %v3179 = vunpack.c.l.b16 %v2859
    %v3180 = vunpack.c.h.b16 %v2859
    %v3181 = vunpack.c.l.b16 %v2860
    %v3182 = vunpack.c.h.b16 %v2860
    %v3183 = vunpack.c.l.b16 %v2861
    %v3184 = vunpack.c.h.b16 %v2861
    %v3185 = vunpack.c.l.b16 %v2862
    %v3186 = vunpack.c.h.b16 %v2862
    %v3187 = vunpack.c.l.b16 %v2863
    %v3188 = vunpack.c.h.b16 %v2863
    %v3189 = vunpack.c.l.b16 %v2864
    %v3190 = vunpack.c.h.b16 %v2864
    %v3191 = vunpack.c.l.b16 %v2865
    %v3192 = vunpack.c.h.b16 %v2865
    %v3193 = vunpack.c.l.b16 %v2866
    %v3194 = vunpack.c.h.b16 %v2866
    %v3195 = vunpack.c.l.b16 %v2867
    %v3196 = vunpack.c.h.b16 %v2867
    %v3197 = vunpack.c.l.b16 %v2868
    %v3198 = vunpack.c.h.b16 %v2868
    %v3199 = vunpack.c.l.b16 %v2869
    %v3200 = vunpack.c.h.b16 %v2869
    %v3201 = vpack.c.b16 %v3139, %v3137
    %v3202 = vpack.c.b16 %v3140, %v3138
    %v3203 = vpack.c.b16 %v3143, %v3141
    %v3204 = vpack.c.b16 %v3144, %v3142
    %v3205 = vpack.c.b16 %v3147, %v3145
    %v3206 = vpack.c.b16 %v3148, %v3146
    %v3207 = vpack.c.b16 %v3151, %v3149
    %v3208 = vpack.c.b16 %v3152, %v3150
    %v3209 = vpack.c.b16 %v3155, %v3153
    %v3210 = vpack.c.b16 %v3156, %v3154
    %v3211 = vpack.c.b16 %v3159, %v3157
    %v3212 = vpack.c.b16 %v3160, %v3158
    %v3213 = vpack.c.b16 %v3163, %v3161
    %v3214 = vpack.c.b16 %v3164, %v3162
    %v3215 = vpack.c.b16 %v3167, %v3165
    %v3216 = vpack.c.b16 %v3168, %v3166
    %v3217 = vpack.c.b16 %v3171, %v3169
    %v3218 = vpack.c.b16 %v3172, %v3170
    %v3219 = vpack.c.b16 %v3175, %v3173
    %v3220 = vpack.c.b16 %v3176, %v3174
    %v3221 = vpack.c.b16 %v3179, %v3177
    %v3222 = vpack.c.b16 %v3180, %v3178
    %v3223 = vpack.c.b16 %v3183, %v3181
    %v3224 = vpack.c.b16 %v3184, %v3182
    %v3225 = vpack.c.b16 %v3187, %v3185
    %v3226 = vpack.c.b16 %v3188, %v3186
    %v3227 = vpack.c.b16 %v3191, %v3189
    %v3228 = vpack.c.b16 %v3192, %v3190
    %v3229 = vpack.c.b16 %v3195, %v3193
    %v3230 = vpack.c.b16 %v3196, %v3194
    %v3231 = vpack.c.b16 %v3199, %v3197
    %v3232 = vpack.c.b16 %v3200, %v3198
    %3265 = vmatprep.subr.bf16.mxu0 %v3216
    %3266 = vmatpush1.bf16.msra.mxu0 %v3215
    %3267 = vmatprep.subr.bf16.mxu0 %v3214
    %3268 = vmatpush1.bf16.msra.mxu0 %v3213
    %3269 = vmatprep.subr.bf16.mxu0 %v3212
    %3270 = vmatpush1.bf16.msra.mxu0 %v3211
    %3271 = vmatprep.subr.bf16.mxu0 %v3210
    %3272 = vmatpush1.bf16.msra.mxu0 %v3209
    %3273 = vmatprep.subr.bf16.mxu0 %v3208
    %3274 = vmatpush1.bf16.msra.mxu0 %v3207
    %3275 = vmatprep.subr.bf16.mxu0 %v3206
    %3276 = vmatpush1.bf16.msra.mxu0 %v3205
    %3277 = vmatprep.subr.bf16.mxu0 %v3204
    %3278 = vmatpush1.bf16.msra.mxu0 %v3203
    %3279 = vmatprep.subr.bf16.mxu0 %v3202
    %3280 = vmatpush1.bf16.msra.mxu0 %v3201
    %3281 = vmatprep.subr.bf16.mxu0 %v3232
    %3282 = vmatpush2.bf16.msra.mxu0 %v3231
    %3283 = vmatprep.subr.bf16.mxu0 %v3230
    %3284 = vmatpush2.bf16.msra.mxu0 %v3229
    %3285 = vmatprep.subr.bf16.mxu0 %v3228
    %3286 = vmatpush2.bf16.msra.mxu0 %v3227
    %3287 = vmatprep.subr.bf16.mxu0 %v3226
    %3288 = vmatpush2.bf16.msra.mxu0 %v3225
    %3289 = vmatprep.subr.bf16.mxu0 %v3224
    %3290 = vmatpush2.bf16.msra.mxu0 %v3223
    %3291 = vmatprep.subr.bf16.mxu0 %v3222
    %3292 = vmatpush2.bf16.msra.mxu0 %v3221
    %3293 = vmatprep.subr.bf16.mxu0 %v3220
    %3294 = vmatpush2.bf16.msra.mxu0 %v3219
    %3295 = vmatprep.subr.bf16.mxu0 %v3218
    %3296 = vmatpush2.bf16.msra.mxu0 %v3217
    %3297 = vmatprep.mubr.bf16.mxu0 %v1990
    %3298 = vmatmul.mubr.bf16.gmra.mxu0 %v1989
    %v3299 = vpop.f32.mrf.mxu0
    %v3300 = vadd.f32 %v3099, %v3299
    %v3301 = vpop.f32.mrf.mxu0
    %v3302 = vadd.f32 %v3101, %v3301
    %v3303 = vpop.f32.mrf.mxu0
    %v3304 = vpop.f32.mrf.mxu0
    %3305 = vdwg.mxu0
    %v3306 = vpack.c.bf16 %v3300, %v3300
    %v3307 = vpack.c.bf16 %v3302, %v3302
    %v3308 = vld [vmem:[#allocation17] sm:$0xf]
    %v3309 = vld [vmem:[#allocation17 + $0x4] sm:$0xf]
    %v3310 = vld [vmem:[#allocation17 + $0x8] sm:$0xf]
    %v3311 = vld [vmem:[#allocation17 + $0xc] sm:$0xf]
    %v3312 = vld [vmem:[#allocation17 + $0x10] sm:$0xf]
    %v3313 = vld [vmem:[#allocation17 + $0x14] sm:$0xf]
    %v3314 = vld [vmem:[#allocation17 + $0x18] sm:$0xf]
    %v3315 = vld [vmem:[#allocation17 + $0x1c] sm:$0xf]
    %v3316 = vld [vmem:[#allocation17 + $0x20] sm:$0xf]
    %v3317 = vld [vmem:[#allocation17 + $0x24] sm:$0xf]
    %v3318 = vld [vmem:[#allocation17 + $0x28] sm:$0xf]
    %v3319 = vld [vmem:[#allocation17 + $0x2c] sm:$0xf]
    %v3320 = vld [vmem:[#allocation17 + $0x30] sm:$0xf]
    %v3321 = vld [vmem:[#allocation17 + $0x34] sm:$0xf]
    %v3322 = vld [vmem:[#allocation17 + $0x38] sm:$0xf]
    %v3323 = vld [vmem:[#allocation17 + $0x3c] sm:$0xf]
    %v3324 = vld [vmem:[#allocation17 + $0x40] sm:$0xf]
    %v3325 = vld [vmem:[#allocation17 + $0x44] sm:$0xf]
    %v3326 = vld [vmem:[#allocation17 + $0x48] sm:$0xf]
    %v3327 = vld [vmem:[#allocation17 + $0x4c] sm:$0xf]
    %v3328 = vld [vmem:[#allocation17 + $0x50] sm:$0xf]
    %v3329 = vld [vmem:[#allocation17 + $0x54] sm:$0xf]
    %v3330 = vld [vmem:[#allocation17 + $0x58] sm:$0xf]
    %v3331 = vld [vmem:[#allocation17 + $0x5c] sm:$0xf]
    %v3332 = vld [vmem:[#allocation17 + $0x60] sm:$0xf]
    %v3333 = vld [vmem:[#allocation17 + $0x64] sm:$0xf]
    %v3334 = vld [vmem:[#allocation17 + $0x68] sm:$0xf]
    %v3335 = vld [vmem:[#allocation17 + $0x6c] sm:$0xf]
    %v3336 = vld [vmem:[#allocation17 + $0x70] sm:$0xf]
    %v3337 = vld [vmem:[#allocation17 + $0x74] sm:$0xf]
    %v3338 = vld [vmem:[#allocation17 + $0x78] sm:$0xf]
    %v3339 = vld [vmem:[#allocation17 + $0x7c] sm:$0xf]
    %v3372 = vunpack.c.l.b16 %v3308
    %v3373 = vunpack.c.l.b16 %v3309
    %v3374 = vunpack.c.l.b16 %v3310
    %v3375 = vunpack.c.l.b16 %v3311
    %v3376 = vunpack.c.l.b16 %v3312
    %v3377 = vunpack.c.l.b16 %v3313
    %v3378 = vunpack.c.l.b16 %v3314
    %v3379 = vunpack.c.l.b16 %v3315
    %v3380 = vunpack.c.l.b16 %v3316
    %v3381 = vunpack.c.l.b16 %v3317
    %v3382 = vunpack.c.l.b16 %v3318
    %v3383 = vunpack.c.l.b16 %v3319
    %v3384 = vunpack.c.l.b16 %v3320
    %v3385 = vunpack.c.l.b16 %v3321
    %v3386 = vunpack.c.l.b16 %v3322
    %v3387 = vunpack.c.l.b16 %v3323
    %v3388 = vunpack.c.l.b16 %v3324
    %v3389 = vunpack.c.l.b16 %v3325
    %v3390 = vunpack.c.l.b16 %v3326
    %v3391 = vunpack.c.l.b16 %v3327
    %v3392 = vunpack.c.l.b16 %v3328
    %v3393 = vunpack.c.l.b16 %v3329
    %v3394 = vunpack.c.l.b16 %v3330
    %v3395 = vunpack.c.l.b16 %v3331
    %v3396 = vunpack.c.l.b16 %v3332
    %v3397 = vunpack.c.l.b16 %v3333
    %v3398 = vunpack.c.l.b16 %v3334
    %v3399 = vunpack.c.l.b16 %v3335
    %v3400 = vunpack.c.l.b16 %v3336
    %v3401 = vunpack.c.l.b16 %v3337
    %v3402 = vunpack.c.l.b16 %v3338
    %v3403 = vunpack.c.l.b16 %v3339
    %v3404 = vpack.c.b16 %v3373, %v3372
    %v3405 = vpack.c.b16 %v3375, %v3374
    %v3406 = vpack.c.b16 %v3377, %v3376
    %v3407 = vpack.c.b16 %v3379, %v3378
    %v3408 = vpack.c.b16 %v3381, %v3380
    %v3409 = vpack.c.b16 %v3383, %v3382
    %v3410 = vpack.c.b16 %v3385, %v3384
    %v3411 = vpack.c.b16 %v3387, %v3386
    %v3412 = vpack.c.b16 %v3389, %v3388
    %v3413 = vpack.c.b16 %v3391, %v3390
    %v3414 = vpack.c.b16 %v3393, %v3392
    %v3415 = vpack.c.b16 %v3395, %v3394
    %v3416 = vpack.c.b16 %v3397, %v3396
    %v3417 = vpack.c.b16 %v3399, %v3398
    %v3418 = vpack.c.b16 %v3401, %v3400
    %v3419 = vpack.c.b16 %v3403, %v3402
    %3436 = vmatprep.subr.bf16.mxu0 0
    %3437 = vmatpush1.bf16.msra.mxu0 %v3411
    %3438 = vmatprep.subr.bf16.mxu0 0
    %3439 = vmatpush1.bf16.msra.mxu0 %v3410
    %3440 = vmatprep.subr.bf16.mxu0 0
    %3441 = vmatpush1.bf16.msra.mxu0 %v3409
    %3442 = vmatprep.subr.bf16.mxu0 0
    %3443 = vmatpush1.bf16.msra.mxu0 %v3408
    %3444 = vmatprep.subr.bf16.mxu0 0
    %3445 = vmatpush1.bf16.msra.mxu0 %v3407
    %3446 = vmatprep.subr.bf16.mxu0 0
    %3447 = vmatpush1.bf16.msra.mxu0 %v3406
    %3448 = vmatprep.subr.bf16.mxu0 0
    %3449 = vmatpush1.bf16.msra.mxu0 %v3405
    %3450 = vmatprep.subr.bf16.mxu0 0
    %3451 = vmatpush1.bf16.msra.mxu0 %v3404
    %3452 = vmatprep.subr.bf16.mxu0 0
    %3453 = vmatpush2.bf16.msra.mxu0 %v3419
    %3454 = vmatprep.subr.bf16.mxu0 0
    %3455 = vmatpush2.bf16.msra.mxu0 %v3418
    %3456 = vmatprep.subr.bf16.mxu0 0
    %3457 = vmatpush2.bf16.msra.mxu0 %v3417
    %3458 = vmatprep.subr.bf16.mxu0 0
    %3459 = vmatpush2.bf16.msra.mxu0 %v3416
    %3460 = vmatprep.subr.bf16.mxu0 0
    %3461 = vmatpush2.bf16.msra.mxu0 %v3415
    %3462 = vmatprep.subr.bf16.mxu0 0
    %3463 = vmatpush2.bf16.msra.mxu0 %v3414
    %3464 = vmatprep.subr.bf16.mxu0 0
    %3465 = vmatpush2.bf16.msra.mxu0 %v3413
    %3466 = vmatprep.subr.bf16.mxu0 0
    %3467 = vmatpush2.bf16.msra.mxu0 %v3412
    %3468 = vmatprep.mubr.bf16.mxu0 %v3307
    %3469 = vmatmul.mubr.bf16.gmra.mxu0 %v3306
    %v3470 = vpop.f32.mrf.mxu0
    %v3471 = vadd.f32 0.0, %v3470
    %v3472 = vpop.f32.mrf.mxu0
    %v3473 = vpop.f32.mrf.mxu0
    %v3474 = vpop.f32.mrf.mxu0
    %3475 = vdwg.mxu0
    %v3476 = vpack.c.bf16 %v3471, %v3471
    %v3477 = vld [vmem:[#allocation19] sm:$0xf]
    %v3478 = vld [vmem:[#allocation19 + $0x4] sm:$0xf]
    %v3479 = vld [vmem:[#allocation19 + $0x8] sm:$0xf]
    %v3480 = vld [vmem:[#allocation19 + $0xc] sm:$0xf]
    %v3481 = vld [vmem:[#allocation19 + $0x10] sm:$0xf]
    %v3482 = vld [vmem:[#allocation19 + $0x14] sm:$0xf]
    %v3483 = vld [vmem:[#allocation19 + $0x18] sm:$0xf]
    %v3484 = vld [vmem:[#allocation19 + $0x1c] sm:$0xf]
    %v3485 = vld [vmem:[#allocation19 + $0x20] sm:$0xf]
    %v3486 = vld [vmem:[#allocation19 + $0x24] sm:$0xf]
    %v3487 = vld [vmem:[#allocation19 + $0x28] sm:$0xf]
    %v3488 = vld [vmem:[#allocation19 + $0x2c] sm:$0xf]
    %v3489 = vld [vmem:[#allocation19 + $0x30] sm:$0xf]
    %v3490 = vld [vmem:[#allocation19 + $0x34] sm:$0xf]
    %v3491 = vld [vmem:[#allocation19 + $0x38] sm:$0xf]
    %v3492 = vld [vmem:[#allocation19 + $0x3c] sm:$0xf]
    %v3509 = vunpack.c.l.b16 %v3477
    %v3510 = vunpack.c.l.b16 %v3478
    %v3511 = vunpack.c.l.b16 %v3479
    %v3512 = vunpack.c.l.b16 %v3480
    %v3513 = vunpack.c.l.b16 %v3481
    %v3514 = vunpack.c.l.b16 %v3482
    %v3515 = vunpack.c.l.b16 %v3483
    %v3516 = vunpack.c.l.b16 %v3484
    %v3517 = vunpack.c.l.b16 %v3485
    %v3518 = vunpack.c.l.b16 %v3486
    %v3519 = vunpack.c.l.b16 %v3487
    %v3520 = vunpack.c.l.b16 %v3488
    %v3521 = vunpack.c.l.b16 %v3489
    %v3522 = vunpack.c.l.b16 %v3490
    %v3523 = vunpack.c.l.b16 %v3491
    %v3524 = vunpack.c.l.b16 %v3492
    %v3525 = vpack.c.b16 %v3510, %v3509
    %v3526 = vpack.c.b16 %v3512, %v3511
    %v3527 = vpack.c.b16 %v3514, %v3513
    %v3528 = vpack.c.b16 %v3516, %v3515
    %v3529 = vpack.c.b16 %v3518, %v3517
    %v3530 = vpack.c.b16 %v3520, %v3519
    %v3531 = vpack.c.b16 %v3522, %v3521
    %v3532 = vpack.c.b16 %v3524, %v3523
    %3541 = vmatprep.subr.bf16.mxu0 0
    %3542 = vmatpush1.bf16.msra.mxu0 %v3532
    %3543 = vmatprep.subr.bf16.mxu0 0
    %3544 = vmatpush1.bf16.msra.mxu0 %v3531
    %3545 = vmatprep.subr.bf16.mxu0 0
    %3546 = vmatpush1.bf16.msra.mxu0 %v3530
    %3547 = vmatprep.subr.bf16.mxu0 0
    %3548 = vmatpush1.bf16.msra.mxu0 %v3529
    %3549 = vmatprep.subr.bf16.mxu0 0
    %3550 = vmatpush1.bf16.msra.mxu0 %v3528
    %3551 = vmatprep.subr.bf16.mxu0 0
    %3552 = vmatpush1.bf16.msra.mxu0 %v3527
    %3553 = vmatprep.subr.bf16.mxu0 0
    %3554 = vmatpush1.bf16.msra.mxu0 %v3526
    %3555 = vmatprep.subr.bf16.mxu0 0
    %3556 = vmatpush1.bf16.msra.mxu0 %v3525
    %3557 = vmatprep.subr.bf16.mxu0 0
    %3558 = vmatpush2.bf16.msra.mxu0 0
    %3559 = vmatprep.subr.bf16.mxu0 0
    %3560 = vmatpush2.bf16.msra.mxu0 0
    %3561 = vmatprep.subr.bf16.mxu0 0
    %3562 = vmatpush2.bf16.msra.mxu0 0
    %3563 = vmatprep.subr.bf16.mxu0 0
    %3564 = vmatpush2.bf16.msra.mxu0 0
    %3565 = vmatprep.subr.bf16.mxu0 0
    %3566 = vmatpush2.bf16.msra.mxu0 0
    %3567 = vmatprep.subr.bf16.mxu0 0
    %3568 = vmatpush2.bf16.msra.mxu0 0
    %3569 = vmatprep.subr.bf16.mxu0 0
    %3570 = vmatpush2.bf16.msra.mxu0 0
    %3571 = vmatprep.subr.bf16.mxu0 0
    %3572 = vmatpush2.bf16.msra.mxu0 0
    %3573 = vmatprep.mubr.bf16.mxu0 0
    %3574 = vmatmul.mubr.bf16.gmra.mxu0 %v3476
    %v3575 = vpop.f32.mrf.mxu0
    %v3576 = vadd.f32 0.0, %v3575
    %v3577 = vpop.f32.mrf.mxu0
    %v3578 = vpop.f32.mrf.mxu0
    %v3579 = vpop.f32.mrf.mxu0
    %3580 = vdwg.mxu0
    %3581 = vst [vmem:[#allocation20] sm:$0x3] %v3576
    // Predicated region
    $region110: #{tpu_custom_call.1} parent=1 // pred_check
      _
    $region111: #{tpu_custom_call.1} parent=1 // pred_check_branch
      %3583 = sbr.rel (0) target = $region113
    $region112: #{tpu_custom_call.1} parent=1 // pred_region
      %s3585 = ssub.s32 32, 32
      %3586 = vsyncadd [#allocation4], %s3585
      %s3588 = sshll.u32 [#allocation20], 4
      %s3589 = int_to_ptr.vmem [resolvable:$true] %s3588
      %3591 = dma.vmem_to_hbm [thread:$0]  %s3589, 32, %s16, [#allocation4]
    $region113: #{tpu_custom_call.1} parent=1 // pred_fallthru
      _
    // Predicated region
    $region114: #{tpu_custom_call.1} parent=1 // pred_check
      _
    $region115: #{tpu_custom_call.1} parent=1 // pred_check_branch
      %3593 = sbr.rel (0) target = $region117
    $region116: #{tpu_custom_call.1} parent=1 // pred_region
      %3594 = dma.done [#allocation4], 32
    $region117: #{tpu_custom_call.1} parent=1 // pred_fallthru
      _
    %3595 = vsyncpa [#allocation3], 1
    %3596 = vsyncpa [#allocation6], 1
    %3597 = vsyncpa [#allocation9], 1
    %3598 = vsyncpa [#allocation12], 1
    %3599 = vsyncpa [#allocation15], 1
    %3600 = vsyncpa [#allocation18], 1
    %3601 = vsyncpa [#allocation4], 1

</llo_original>
